<compile_context>
chip_gen: v7x
topology: tpu7x:2x2x1
jax: 0.10.0
libtpu: 0.0.40
codegen_flags: <defaults>
</compile_context>

<pallas_src>
import jax
import jax.numpy as jnp
from jax.experimental import pallas as pl
from jax.experimental.pallas import tpu as pltpu

IN_FEATURES = 8 * 8 * 8       # 512
OUT_FEATURES = 64 * 64        # 4096
TN = 2048                     # output-feature tile (lane-dense, 2 MiB bf16 weight tile)
TM_MAX = 256                  # batch tile cap (multiple of 8, keeps MXU LHS tiles full)


def linear_kernel(x_ref, w_ref, b_ref, o_ref):
    # x_ref: (TM, 512) f32   w_ref: (512, TN) bf16 (pre-transposed, persistent)
    # b_ref: (1, TN)   f32   o_ref: (TM, TN)  f32
    x_bf16 = x_ref[...].astype(jnp.bfloat16)          # tiny tile, cast in VMEM
    acc = jnp.dot(x_bf16, w_ref[...], preferred_element_type=jnp.float32)
    o_ref[...] = acc + b_ref[...]                      # bias add stays f32 (no bf16 VPU path needed)


def prepare_params(weight, bias):
    """One-time parameter prep (do at load/init time, NOT per call).

    weight: (4096, 512) PyTorch (out, in) layout -> (512, 4096) bf16
    bias:   (4096,)                              -> (1, 4096)  f32
    """
    w_t = jnp.asarray(weight, jnp.float32).T.astype(jnp.bfloat16)   # (512, 4096) bf16
    b2d = jnp.asarray(bias, jnp.float32).reshape(1, OUT_FEATURES)
    return w_t, b2d


def linear_fc_forward(x, w_t_bf16, bias2d):
    """x: (N, 8, 8, 8) f32; w_t_bf16: (512, 4096) bf16; bias2d: (1, 4096) f32 -> (N, 4096) f32."""
    n = x.shape[0]
    x_flat = x.reshape(n, IN_FEATURES)          # nn.Flatten (row-major, same as torch)

    # Batch tiling: full batch as a single block when small (block == full dim is always
    # legal); otherwise TM_MAX-row tiles (multiple of 8), cdiv handles any remainder.
    tm = n if n <= TM_MAX else TM_MAX

    # Feature axis OUTER (megacore-sharded on v7x), batch axis INNER (fastest) so the
    # resident weight tile is reused across all batch tiles without re-DMA.
    grid = (OUT_FEATURES // TN, pl.cdiv(n, tm))

    cost = pl.CostEstimate(
        flops=2 * n * IN_FEATURES * OUT_FEATURES,
        transcendentals=0,
        bytes_accessed=(IN_FEATURES * OUT_FEATURES * 2      # bf16 weight
                        + n * IN_FEATURES * 4                # x (f32)
                        + n * OUT_FEATURES * 4               # out (f32)
                        + OUT_FEATURES * 4),                 # bias (f32)
    )

    return pl.pallas_call(
        linear_kernel,
        out_shape=jax.ShapeDtypeStruct((n, OUT_FEATURES), jnp.float32),
        grid_spec=pltpu.PrefetchScalarGridSpec(
            num_scalar_prefetch=0,
            grid=grid,
            in_specs=[
                pl.BlockSpec((tm, IN_FEATURES), lambda j, i: (i, 0)),   # x batch tile
                pl.BlockSpec((IN_FEATURES, TN), lambda j, i: (0, j)),   # weight tile (in, out), constant over inner axis
                pl.BlockSpec((1, TN), lambda j, i: (0, j)),             # bias tile
            ],
            out_specs=pl.BlockSpec((tm, TN), lambda j, i: (i, j)),
        ),
        compiler_params=pltpu.CompilerParams(
            dimension_semantics=("parallel", "parallel"),
            vmem_limit_bytes=32 * 1024 * 1024,   # headroom over v5e's 16 MiB scoped default
        ),
        cost_estimate=cost,
    )(x_flat, w_t_bf16, bias2d)


if __name__ == "__main__":
    key = jax.random.PRNGKey(0)
    kx, kw, kb = jax.random.split(key, 3)

    batch = 2
    # Input matching the module's implied shape: (N, 8, 8, 8)
    x = jax.random.normal(kx, (batch, 8, 8, 8), dtype=jnp.float32)

    # Deterministic parameter init mimicking nn.Linear default (uniform +/- 1/sqrt(fan_in)),
    # stored in PyTorch (out_features, in_features) layout.
    bound = 1.0 / (IN_FEATURES ** 0.5)
    weight = jax.random.uniform(
        kw, (OUT_FEATURES, IN_FEATURES), minval=-bound, maxval=bound, dtype=jnp.float32
    )
    bias = jax.random.uniform(
        kb, (OUT_FEATURES,), minval=-bound, maxval=bound, dtype=jnp.float32
    )

    # One-time parameter prep (transpose + bf16 cast), amortized across all calls.
    w_t_bf16, bias2d = prepare_params(weight, bias)

    out = linear_fc_forward(x, w_t_bf16, bias2d)
    out = jax.block_until_ready(out)

    # Sanity checks.
    assert out.shape == (batch, OUT_FEATURES)

    # Tight check against a reference that uses the same bf16 operands (matches kernel path).
    ref_bf16 = (x.reshape(batch, IN_FEATURES).astype(jnp.bfloat16).astype(jnp.float32)
                @ w_t_bf16.astype(jnp.float32)) + bias
    assert jnp.allclose(out, ref_bf16, atol=2e-3, rtol=2e-3)

    # Looser check against the full-precision f32 reference (bf16 operand quantization).
    ref_f32 = x.reshape(batch, IN_FEATURES) @ weight.T + bias
    assert jnp.allclose(out, ref_f32, atol=2e-2, rtol=2e-2)

    print("KERNEL_OK")
</pallas_src>

<mosaic_0001>
module attributes {stable_mosaic.version = 11 : i64} {
  func.func @linear_kernel(%arg0: i32, %arg1: i32, %arg2: memref<2x512xf32, #tpu.memory_space<vmem>>, %arg3: memref<512x2048xbf16, #tpu.memory_space<vmem>>, %arg4: memref<1x2048xf32, #tpu.memory_space<vmem>>, %arg5: memref<2x2048xf32, #tpu.memory_space<vmem>>) attributes {dimension_semantics = [#tpu.dimension_semantics<parallel>, #tpu.dimension_semantics<parallel>], iteration_bounds = array<i64: 2, 1>, scalar_prefetch = 0 : i64, scratch_operands = 0 : i64, tpu.core_type = #tpu.core_type<tc>, window_params = [{transform_indices = @transform_0, window_bounds = array<i64: 2, 512>}, {transform_indices = @transform_1, window_bounds = array<i64: 512, 2048>}, {transform_indices = @transform_2, window_bounds = array<i64: 1, 2048>}, {transform_indices = @transform_3, window_bounds = array<i64: 2, 2048>}]} {
    %c0 = arith.constant 0 : index
    %c0_0 = arith.constant 0 : index
    %0 = vector.load %arg2[%c0, %c0_0] : memref<2x512xf32, #tpu.memory_space<vmem>>, vector<2x512xf32>
    %1 = arith.truncf %0 : vector<2x512xf32> to vector<2x512xbf16>
    %c0_1 = arith.constant 0 : index
    %c0_2 = arith.constant 0 : index
    %2 = vector.load %arg3[%c0_1, %c0_2] : memref<512x2048xbf16, #tpu.memory_space<vmem>>, vector<512x2048xbf16>
    %cst = arith.constant dense<0.000000e+00> : vector<2x2048xf32>
    %3 = tpu.matmul %1, %2, %cst {dimension_numbers = #tpu.dot_dimension_numbers<[1], [0], [0], [1], [0, 0, 1, 1], [], []>} : vector<2x512xbf16>, vector<512x2048xbf16>, vector<2x2048xf32> -> vector<2x2048xf32>
    %c0_3 = arith.constant 0 : index
    %c0_4 = arith.constant 0 : index
    %4 = vector.load %arg4[%c0_3, %c0_4] : memref<1x2048xf32, #tpu.memory_space<vmem>>, vector<1x2048xf32>
    %5 = vector.broadcast %4 : vector<1x2048xf32> to vector<2x2048xf32>
    %6 = arith.addf %3, %5 : vector<2x2048xf32>
    %c0_5 = arith.constant 0 : index
    %c0_6 = arith.constant 0 : index
    %7 = vector.load %arg5[%c0_5, %c0_6] : memref<2x2048xf32, #tpu.memory_space<vmem>>, vector<2x2048xf32>
    tpu.vector_store %arg5[%c0_5, %c0_6], %6 {strides = array<i32>} : memref<2x2048xf32, #tpu.memory_space<vmem>>, vector<2x2048xf32>,
    return
  }
  func.func @transform_0(%arg0: i32, %arg1: i32) -> (i32, i32) {
    %c0_i32 = arith.constant 0 : i32
    %c0_i32_0 = arith.constant 0 : i32
    return %arg1, %c0_i32 : i32, i32
  }
  func.func @transform_1(%arg0: i32, %arg1: i32) -> (i32, i32) {
    %c0_i32 = arith.constant 0 : i32
    %c0_i32_0 = arith.constant 0 : i32
    return %c0_i32, %arg0 : i32, i32
  }
  func.func @transform_2(%arg0: i32, %arg1: i32) -> (i32, i32) {
    %c0_i32 = arith.constant 0 : i32
    %c0_i32_0 = arith.constant 0 : i32
    return %c0_i32, %arg0 : i32, i32
  }
  func.func @transform_3(%arg0: i32, %arg1: i32) -> (i32, i32) {
    %c0_i32 = arith.constant 0 : i32
    return %arg1, %arg0 : i32, i32
  }
}

</mosaic_0001>

<llo_original>
// kernel: tpu_custom_call.1
$region0: #{tpu_custom_call.1}
  #allocation0 [shape = 'u32[]', space=smem, size = 0x4, offset = 0x4, fixed_abs, tag = 'smem constant byte address 0x4 - core index']
  #allocation1 [shape = 'u32[144,128]{1,0:T(1,128)}', space=vmem, size = 0x12000, scoped, tag = 'internal scratch']
  %s0 = inlined_call_operand.hbm [shape: f32[2,512], index: 0, kind: input, shape index: {}]
  %s1 = inlined_call_operand.hbm [shape: bf16[512,4096], index: 1, kind: input, shape index: {}]
  %s2 = inlined_call_operand.hbm [shape: f32[1,4096], index: 2, kind: input, shape index: {}]
  %s3 = inlined_call_operand.hbm [shape: f32[2,4096], index: 3, kind: output, shape index: {}]
  %s4 = sld [smem:[#allocation0]]
  $region57: #{tpu_custom_call.1} parent=0
    _
  %s6 = ssub.s32 1, %s4
  %s7 = scalar_select 0, %s6, %s4
  $region1: #{tpu_custom_call.1} parent=0
    #allocation2 [shape = 'u8[4096]{0}', space=vmem, size = 0x1000, scoped, tag = 'input window, operand 0, single buffered']
    #allocation3 [shape = 's32[2]{0}', space=sflag, size = 0x8, scoped, tag = 'scoped memory for tpu_custom_call.1']
    #allocation4 [shape = 's32[2]{0}', space=sflag, size = 0x8, scoped, tag = 'scoped memory for tpu_custom_call.1']
    #allocation5 [shape = 'u8[4194304]{0}', space=vmem, size = 0x400000, scoped, tag = 'input window, operand 1']
    #allocation6 [shape = 's32[2]{0}', space=sflag, size = 0x8, scoped, tag = 'scoped memory for tpu_custom_call.1']
    #allocation7 [shape = 'u8[16384]{0}', space=vmem, size = 0x4000, scoped, tag = 'input window, operand 2']
    #allocation8 [shape = 'u8[32768]{0}', space=vmem, size = 0x8000, scoped, tag = 'output window, operand 0']
    %8 = vsyncpa [#allocation3], 0
    %9 = vsyncpa [#allocation6], 0
    %s10 = scalar_lea.sflag [#allocation6], 1
    %11 = vsyncpa %s10, 0
    %12 = vsyncpa [#allocation4], 0
    %s13 = scalar_lea.sflag [#allocation4], 1
    %14 = vsyncpa %s13, 0
    loop: start=0, step=1, limit=4
    $region2: #{tpu_custom_call.1} parent=1 // loop_pre_header
      _
    $region3: #{tpu_custom_call.1} parent=1 // loop_header
      %s16 = sphi 0, %s20
      %p17 = scmp.ge.s32.totalorder %s16, 4
      %s23 = sphi 0, %s35
      %s24 = sphi 0, %s31
      %s25 = sphi 0, %s23
      %s26 = sphi 0, %s24
      %s27 = sphi 0, %s25
      %s28 = sphi 0, %s26
      %s38 = sphi 0, %s40
      %s41 = sphi 0, %s38
      %s42 = sphi 0, %s41
      %s58 = sphi 0, %s42
      %s64 = sphi 0, %s66
      %s67 = sphi 0, %s64
      %s68 = sphi 0, %s67
      %s84 = sphi 0, %s68
      %s90 = sphi 0, %s92
      %s93 = sphi 0, %s90
      %s94 = sphi 0, %s93
      %s110 = sphi 0, %s94
      %s118 = sphi 0, %s120
      %s121 = sphi 0, %s118
      %s122 = sphi 0, %s121
      %s138 = sphi 0, %s122
    $region4: #{tpu_custom_call.1} parent=1 // loop_header_branch
      %19 = sbr.rel (%p17) target = $region8
    $region5: #{tpu_custom_call.1} parent=1 // loop_body
      %s21 = ssub.s32 %s16, 1
      %s22 = ssub.s32 %s16, 2
      %s29 = sadd.s32 1, %s24
      %p30 = scmp.ge.s32.totalorder %s29, 1
      %s31 = scalar_select %p30, 0, %s29
      %s32 = sadd.s32 1, %s23
      %s33 = scalar_select %p30, %s32, %s23
      %p34 = scmp.ge.s32.totalorder %s33, 2
      %s35 = scalar_select %p34, 0, %s33
      %s36 = ssub.s32 %s24, %s31
      %p37 = scmp.eq.s32.totalorder %s36, 0
      %s39 = sadd.s32 %s38, 1
      %s40 = scalar_select %p37, %s38, %s39
      %p43 = pneg %p37
      %p44 = scmp.eq.s32.totalorder %s16, 1
      %p45 = por %p43, %p44
      %p46 = scmp.ne.s32.totalorder %s38, %s41
      %p47 = scmp.eq.s32.totalorder %s16, 0
      %p48 = por %p46, %p47
      %p49 = scmp.ne.s32.totalorder %s38, %s41
      %p50 = scmp.eq.s32.totalorder %s21, 1
      %p51 = por %p49, %p50
      %p52 = scmp.ne.s32.totalorder %s41, %s42
      %p53 = scmp.eq.s32.totalorder %s21, 0
      %p54 = por %p52, %p53
      %p55 = scmp.ne.s32.totalorder %s41, %s42
      %p56 = scmp.eq.s32.totalorder %s22, 1
      %p57 = por %p55, %p56
      %p59 = scmp.ne.s32.totalorder %s42, %s58
      %p60 = scmp.eq.s32.totalorder %s22, 0
      %p61 = por %p59, %p60
      %s62 = ssub.s32 %s23, %s35
      %p63 = scmp.eq.s32.totalorder %s62, 0
      %s65 = sadd.s32 %s64, 1
      %s66 = scalar_select %p63, %s64, %s65
      %p69 = pneg %p63
      %p70 = scmp.eq.s32.totalorder %s16, 1
      %p71 = por %p69, %p70
      %p72 = scmp.ne.s32.totalorder %s64, %s67
      %p73 = scmp.eq.s32.totalorder %s16, 0
      %p74 = por %p72, %p73
      %p75 = scmp.ne.s32.totalorder %s64, %s67
      %p76 = scmp.eq.s32.totalorder %s21, 1
      %p77 = por %p75, %p76
      %p78 = scmp.ne.s32.totalorder %s67, %s68
      %p79 = scmp.eq.s32.totalorder %s21, 0
      %p80 = por %p78, %p79
      %p81 = scmp.ne.s32.totalorder %s67, %s68
      %p82 = scmp.eq.s32.totalorder %s22, 1
      %p83 = por %p81, %p82
      %p85 = scmp.ne.s32.totalorder %s68, %s84
      %p86 = scmp.eq.s32.totalorder %s22, 0
      %p87 = por %p85, %p86
      %s88 = ssub.s32 %s23, %s35
      %p89 = scmp.eq.s32.totalorder %s88, 0
      %s91 = sadd.s32 %s90, 1
      %s92 = scalar_select %p89, %s90, %s91
      %p95 = pneg %p89
      %p96 = scmp.eq.s32.totalorder %s16, 1
      %p97 = por %p95, %p96
      %p98 = scmp.ne.s32.totalorder %s90, %s93
      %p99 = scmp.eq.s32.totalorder %s16, 0
      %p100 = por %p98, %p99
      %p101 = scmp.ne.s32.totalorder %s90, %s93
      %p102 = scmp.eq.s32.totalorder %s21, 1
      %p103 = por %p101, %p102
      %p104 = scmp.ne.s32.totalorder %s93, %s94
      %p105 = scmp.eq.s32.totalorder %s21, 0
      %p106 = por %p104, %p105
      %p107 = scmp.ne.s32.totalorder %s93, %s94
      %p108 = scmp.eq.s32.totalorder %s22, 1
      %p109 = por %p107, %p108
      %p111 = scmp.ne.s32.totalorder %s94, %s110
      %p112 = scmp.eq.s32.totalorder %s22, 0
      %p113 = por %p111, %p112
      %s114 = ssub.s32 %s24, %s31
      %s115 = ssub.s32 %s23, %s35
      %s116 = sor.u32 %s114, %s115
      %p117 = scmp.eq.s32.totalorder %s116, 0
      %s119 = sadd.s32 %s118, 1
      %s120 = scalar_select %p117, %s118, %s119
      %p123 = pneg %p117
      %p124 = scmp.eq.s32.totalorder %s16, 1
      %p125 = por %p123, %p124
      %p126 = scmp.ne.s32.totalorder %s118, %s121
      %p127 = scmp.eq.s32.totalorder %s16, 0
      %p128 = por %p126, %p127
      %p129 = scmp.ne.s32.totalorder %s118, %s121
      %p130 = scmp.eq.s32.totalorder %s21, 1
      %p131 = por %p129, %p130
      %p132 = scmp.ne.s32.totalorder %s121, %s122
      %p133 = scmp.eq.s32.totalorder %s21, 0
      %p134 = por %p132, %p133
      %p135 = scmp.ne.s32.totalorder %s121, %s122
      %p136 = scmp.eq.s32.totalorder %s22, 1
      %p137 = por %p135, %p136
      %p139 = scmp.ne.s32.totalorder %s122, %s138
      %p140 = scmp.eq.s32.totalorder %s22, 0
      %p141 = por %p139, %p140
      %p142 = scmp.le.s32.totalorder 1, %s16
      %p143 = scmp.lt.s32.totalorder %s16, 3
      %p144 = pnand %p142, %p143
      %p145 = pneg %p144
      // Predicated region
      $region9: #{tpu_custom_call.1} parent=5 // pred_check
        _
      $region10: #{tpu_custom_call.1} parent=5 // pred_check_branch
        %147 = sbr.rel (%p144) target = $region12
      $region11: #{tpu_custom_call.1} parent=5 // pred_region
        %s148 = ssub.s32 %s16, 1
        // Predicated region
        $region13: #{tpu_custom_call.1} parent=11 // pred_check
          %p149 = pneg %p54
        $region14: #{tpu_custom_call.1} parent=11 // pred_check_branch
          %151 = sbr.rel (%p149) target = $region16
        $region15: #{tpu_custom_call.1} parent=11 // pred_region
          %s153 = ssub.s32 128, 128
          %154 = vsyncadd [#allocation3], %s153
          %s155 = smul.addr %s26, 4
          %s156 = smul.addr %s155, 32
          %s157 = scalar_lea.hbm %s0, %s156
          %s159 = sshll.u32 [#allocation2], 4
          %s160 = int_to_ptr.vmem [resolvable:$true] %s159
          %162 = dma.hbm_to_vmem [thread:$0]  %s157, 128, %s160, [#allocation3]
        $region16: #{tpu_custom_call.1} parent=11 // pred_fallthru
          _
      $region12: #{tpu_custom_call.1} parent=5 // pred_fallthru
        _
      %p163 = scmp.lt.s32.totalorder %s16, 2
      // Predicated region
      $region17: #{tpu_custom_call.1} parent=5 // pred_check
        %p164 = pneg %p163
      $region18: #{tpu_custom_call.1} parent=5 // pred_check_branch
        %166 = sbr.rel (%p164) target = $region20
      $region19: #{tpu_custom_call.1} parent=5 // pred_region
        // Predicated region
        $region21: #{tpu_custom_call.1} parent=19 // pred_check
          %p167 = pneg %p74
        $region22: #{tpu_custom_call.1} parent=19 // pred_check_branch
          %169 = sbr.rel (%p167) target = $region24
        $region23: #{tpu_custom_call.1} parent=19 // pred_region
          %s170 = sand.u32 %s16, 1
          %s171 = scalar_lea.sflag [#allocation6], %s170
          %s172 = sand.u32 %s64, 1
          %s173 = smul.addr %s172, 4096
          %s174 = scalar_lea.vmem [#allocation5], %s173
          %s175 = smul.u32 16, %s23
          %s177 = ssub.s32 65536, 65536
          %178 = vsyncadd %s171, %s177
          %s179 = smul.addr %s175, 64
          %s180 = scalar_lea.hbm %s1, %s179
          %s181 = sshll.u32 %s174, 4
          %s182 = int_to_ptr.vmem [resolvable:$true] %s181
          %187 = dma.hbm_to_vmem [thread:$0]  %s180, 65536, %s182, %s171, 2048, 1024, 64
        $region24: #{tpu_custom_call.1} parent=19 // pred_fallthru
          _
        // Predicated region
        $region25: #{tpu_custom_call.1} parent=19 // pred_check
          %p188 = pneg %p100
        $region26: #{tpu_custom_call.1} parent=19 // pred_check_branch
          %190 = sbr.rel (%p188) target = $region28
        $region27: #{tpu_custom_call.1} parent=19 // pred_region
          %s191 = sand.u32 %s16, 1
          %s192 = scalar_lea.sflag [#allocation6], %s191
          %s193 = sand.u32 %s90, 1
          %s194 = smul.addr %s193, 16
          %s195 = scalar_lea.vmem [#allocation7], %s194
          %s196 = smul.u32 16, %s23
          %s198 = ssub.s32 256, 256
          %199 = vsyncadd %s192, %s198
          %s200 = smul.addr %s196, 16
          %s201 = scalar_lea.hbm %s2, %s200
          %s203 = sshll.u32 %s195, 4
          %s204 = int_to_ptr.vmem [resolvable:$true] %s203
          %206 = dma.hbm_to_vmem [thread:$0]  %s201, 256, %s204, %s192
        $region28: #{tpu_custom_call.1} parent=19 // pred_fallthru
          _
      $region20: #{tpu_custom_call.1} parent=5 // pred_fallthru
        _
      %p207 = scmp.le.s32.totalorder 1, %s16
      %p208 = scmp.lt.s32.totalorder %s16, 3
      %p209 = pnand %p207, %p208
      %p210 = pneg %p209
      // Predicated region
      $region29: #{tpu_custom_call.1} parent=5 // pred_check
        _
      $region30: #{tpu_custom_call.1} parent=5 // pred_check_branch
        %212 = sbr.rel (%p209) target = $region32
      $region31: #{tpu_custom_call.1} parent=5 // pred_region
        %s213 = ssub.s32 %s16, 1
        // Predicated region
        $region33: #{tpu_custom_call.1} parent=31 // pred_check
          %p214 = pneg %p54
        $region34: #{tpu_custom_call.1} parent=31 // pred_check_branch
          %216 = sbr.rel (%p214) target = $region36
        $region35: #{tpu_custom_call.1} parent=31 // pred_region
          %217 = dma.done [#allocation3], 128
        $region36: #{tpu_custom_call.1} parent=31 // pred_fallthru
          _
        %s218 = sand.u32 %s21, 1
        %s219 = scalar_lea.sflag [#allocation6], %s218
        %s220 = sand.u32 %s67, 1
        %s221 = smul.addr %s220, 4096
        %s222 = scalar_lea.vmem [#allocation5], %s221
        // Predicated region
        $region37: #{tpu_custom_call.1} parent=31 // pred_check
          %p223 = pneg %p80
        $region38: #{tpu_custom_call.1} parent=31 // pred_check_branch
          %225 = sbr.rel (%p223) target = $region40
        $region39: #{tpu_custom_call.1} parent=31 // pred_region
          %226 = dma.done %s219, 65536
        $region40: #{tpu_custom_call.1} parent=31 // pred_fallthru
          _
        %s227 = sand.u32 %s21, 1
        %s228 = scalar_lea.sflag [#allocation6], %s227
        %s229 = sand.u32 %s93, 1
        %s230 = smul.addr %s229, 16
        %s231 = scalar_lea.vmem [#allocation7], %s230
        // Predicated region
        $region41: #{tpu_custom_call.1} parent=31 // pred_check
          %p232 = pneg %p106
        $region42: #{tpu_custom_call.1} parent=31 // pred_check_branch
          %234 = sbr.rel (%p232) target = $region44
        $region43: #{tpu_custom_call.1} parent=31 // pred_region
          %235 = dma.done %s228, 256
        $region44: #{tpu_custom_call.1} parent=31 // pred_fallthru
          _
        %p236 = pneg %p54
        %p237 = pneg %p51
        %s238 = sand.u32 %s21, 1
        %s239 = scalar_lea.sflag [#allocation6], %s238
        %s240 = sand.u32 %s67, 1
        %s241 = smul.addr %s240, 4096
        %s242 = scalar_lea.vmem [#allocation5], %s241
        %p243 = pneg %p80
        %p244 = pneg %p77
        %s245 = sand.u32 %s21, 1
        %s246 = scalar_lea.sflag [#allocation6], %s245
        %s247 = sand.u32 %s93, 1
        %s248 = smul.addr %s247, 16
        %s249 = scalar_lea.vmem [#allocation7], %s248
        %p250 = pneg %p106
        %p251 = pneg %p103
        %p252 = pneg %p134
        %p253 = pneg %p131
        %s254 = sand.u32 %s121, 1
        %s255 = scalar_lea.sflag [#allocation4], %s254
        %s256 = sand.u32 %s121, 1
        %s257 = smul.addr %s256, 32
        %s258 = scalar_lea.vmem [#allocation8], %s257
        %s259 = smul.u32 16, %s25
        %s260 = smul.u32 16, %s25
        %s261 = smul.u32 16, %s25
        %v262 = vld [vmem:[#allocation2] sm:$0xff]
        %v264 = vcombine.high %v262, %v262
        %v266 = vunpack.c.l.s4 1983009808
        %v267 = vunpack.c.0.s8 %v266
        %v268 = vlaneseq
        %v269 = vshrl.u32 %v268, 7
        %v270 = vsub.s32 %v267, %v269
        %v271 = vrot.slane %v262, %v270
        %v273 = vunpack.c.l.s4 1983009808
        %v274 = vunpack.c.0.s8 %v273
        %v275 = vlaneseq
        %v276 = vshrl.u32 %v275, 7
        %v277 = vsub.s32 %v274, %v276
        %v278 = vrot.slane %v264, %v277
        %v279 = vcombine.high %v271, %v271
        %v280 = vcombine.high %v278, %v278
        %v285 = vpack.c.bf16 %v271, %v271
        %v286 = vpack.c.bf16 %v279, %v279
        %v287 = vpack.c.bf16 %v278, %v278
        %v288 = vpack.c.bf16 %v280, %v280
        %v289 = vld [vmem:[%s222] sm:$0xff]
        %v290 = vld [vmem:[%s222 + $0x8] sm:$0xff]
        %v291 = vld [vmem:[%s222 + $0x10] sm:$0xff]
        %v292 = vld [vmem:[%s222 + $0x18] sm:$0xff]
        %v293 = vld [vmem:[%s222 + $0x20] sm:$0xff]
        %v294 = vld [vmem:[%s222 + $0x28] sm:$0xff]
        %v295 = vld [vmem:[%s222 + $0x30] sm:$0xff]
        %v296 = vld [vmem:[%s222 + $0x38] sm:$0xff]
        %v297 = vld [vmem:[%s222 + $0x40] sm:$0xff]
        %v298 = vld [vmem:[%s222 + $0x48] sm:$0xff]
        %v299 = vld [vmem:[%s222 + $0x50] sm:$0xff]
        %v300 = vld [vmem:[%s222 + $0x58] sm:$0xff]
        %v301 = vld [vmem:[%s222 + $0x60] sm:$0xff]
        %v302 = vld [vmem:[%s222 + $0x68] sm:$0xff]
        %v303 = vld [vmem:[%s222 + $0x70] sm:$0xff]
        %v304 = vld [vmem:[%s222 + $0x78] sm:$0xff]
        %v305 = vld [vmem:[%s222 + $0x80] sm:$0xff]
        %v306 = vld [vmem:[%s222 + $0x88] sm:$0xff]
        %v307 = vld [vmem:[%s222 + $0x90] sm:$0xff]
        %v308 = vld [vmem:[%s222 + $0x98] sm:$0xff]
        %v309 = vld [vmem:[%s222 + $0xa0] sm:$0xff]
        %v310 = vld [vmem:[%s222 + $0xa8] sm:$0xff]
        %v311 = vld [vmem:[%s222 + $0xb0] sm:$0xff]
        %v312 = vld [vmem:[%s222 + $0xb8] sm:$0xff]
        %v313 = vld [vmem:[%s222 + $0xc0] sm:$0xff]
        %v314 = vld [vmem:[%s222 + $0xc8] sm:$0xff]
        %v315 = vld [vmem:[%s222 + $0xd0] sm:$0xff]
        %v316 = vld [vmem:[%s222 + $0xd8] sm:$0xff]
        %v317 = vld [vmem:[%s222 + $0xe0] sm:$0xff]
        %v318 = vld [vmem:[%s222 + $0xe8] sm:$0xff]
        %v319 = vld [vmem:[%s222 + $0xf0] sm:$0xff]
        %v320 = vld [vmem:[%s222 + $0xf8] sm:$0xff]
        %v321 = vld [vmem:[%s222 + $0x100] sm:$0xff]
        %v322 = vld [vmem:[%s222 + $0x108] sm:$0xff]
        %v323 = vld [vmem:[%s222 + $0x110] sm:$0xff]
        %v324 = vld [vmem:[%s222 + $0x118] sm:$0xff]
        %v325 = vld [vmem:[%s222 + $0x120] sm:$0xff]
        %v326 = vld [vmem:[%s222 + $0x128] sm:$0xff]
        %v327 = vld [vmem:[%s222 + $0x130] sm:$0xff]
        %v328 = vld [vmem:[%s222 + $0x138] sm:$0xff]
        %v329 = vld [vmem:[%s222 + $0x140] sm:$0xff]
        %v330 = vld [vmem:[%s222 + $0x148] sm:$0xff]
        %v331 = vld [vmem:[%s222 + $0x150] sm:$0xff]
        %v332 = vld [vmem:[%s222 + $0x158] sm:$0xff]
        %v333 = vld [vmem:[%s222 + $0x160] sm:$0xff]
        %v334 = vld [vmem:[%s222 + $0x168] sm:$0xff]
        %v335 = vld [vmem:[%s222 + $0x170] sm:$0xff]
        %v336 = vld [vmem:[%s222 + $0x178] sm:$0xff]
        %v337 = vld [vmem:[%s222 + $0x180] sm:$0xff]
        %v338 = vld [vmem:[%s222 + $0x188] sm:$0xff]
        %v339 = vld [vmem:[%s222 + $0x190] sm:$0xff]
        %v340 = vld [vmem:[%s222 + $0x198] sm:$0xff]
        %v341 = vld [vmem:[%s222 + $0x1a0] sm:$0xff]
        %v342 = vld [vmem:[%s222 + $0x1a8] sm:$0xff]
        %v343 = vld [vmem:[%s222 + $0x1b0] sm:$0xff]
        %v344 = vld [vmem:[%s222 + $0x1b8] sm:$0xff]
        %v345 = vld [vmem:[%s222 + $0x1c0] sm:$0xff]
        %v346 = vld [vmem:[%s222 + $0x1c8] sm:$0xff]
        %v347 = vld [vmem:[%s222 + $0x1d0] sm:$0xff]
        %v348 = vld [vmem:[%s222 + $0x1d8] sm:$0xff]
        %v349 = vld [vmem:[%s222 + $0x1e0] sm:$0xff]
        %v350 = vld [vmem:[%s222 + $0x1e8] sm:$0xff]
        %v351 = vld [vmem:[%s222 + $0x1f0] sm:$0xff]
        %v352 = vld [vmem:[%s222 + $0x1f8] sm:$0xff]
        %v353 = vld [vmem:[%s222 + $0x200] sm:$0xff]
        %v354 = vld [vmem:[%s222 + $0x208] sm:$0xff]
        %v355 = vld [vmem:[%s222 + $0x210] sm:$0xff]
        %v356 = vld [vmem:[%s222 + $0x218] sm:$0xff]
        %v357 = vld [vmem:[%s222 + $0x220] sm:$0xff]
        %v358 = vld [vmem:[%s222 + $0x228] sm:$0xff]
        %v359 = vld [vmem:[%s222 + $0x230] sm:$0xff]
        %v360 = vld [vmem:[%s222 + $0x238] sm:$0xff]
        %v361 = vld [vmem:[%s222 + $0x240] sm:$0xff]
        %v362 = vld [vmem:[%s222 + $0x248] sm:$0xff]
        %v363 = vld [vmem:[%s222 + $0x250] sm:$0xff]
        %v364 = vld [vmem:[%s222 + $0x258] sm:$0xff]
        %v365 = vld [vmem:[%s222 + $0x260] sm:$0xff]
        %v366 = vld [vmem:[%s222 + $0x268] sm:$0xff]
        %v367 = vld [vmem:[%s222 + $0x270] sm:$0xff]
        %v368 = vld [vmem:[%s222 + $0x278] sm:$0xff]
        %v369 = vld [vmem:[%s222 + $0x280] sm:$0xff]
        %v370 = vld [vmem:[%s222 + $0x288] sm:$0xff]
        %v371 = vld [vmem:[%s222 + $0x290] sm:$0xff]
        %v372 = vld [vmem:[%s222 + $0x298] sm:$0xff]
        %v373 = vld [vmem:[%s222 + $0x2a0] sm:$0xff]
        %v374 = vld [vmem:[%s222 + $0x2a8] sm:$0xff]
        %v375 = vld [vmem:[%s222 + $0x2b0] sm:$0xff]
        %v376 = vld [vmem:[%s222 + $0x2b8] sm:$0xff]
        %v377 = vld [vmem:[%s222 + $0x2c0] sm:$0xff]
        %v378 = vld [vmem:[%s222 + $0x2c8] sm:$0xff]
        %v379 = vld [vmem:[%s222 + $0x2d0] sm:$0xff]
        %v380 = vld [vmem:[%s222 + $0x2d8] sm:$0xff]
        %v381 = vld [vmem:[%s222 + $0x2e0] sm:$0xff]
        %v382 = vld [vmem:[%s222 + $0x2e8] sm:$0xff]
        %v383 = vld [vmem:[%s222 + $0x2f0] sm:$0xff]
        %v384 = vld [vmem:[%s222 + $0x2f8] sm:$0xff]
        %v385 = vld [vmem:[%s222 + $0x300] sm:$0xff]
        %v386 = vld [vmem:[%s222 + $0x308] sm:$0xff]
        %v387 = vld [vmem:[%s222 + $0x310] sm:$0xff]
        %v388 = vld [vmem:[%s222 + $0x318] sm:$0xff]
        %v389 = vld [vmem:[%s222 + $0x320] sm:$0xff]
        %v390 = vld [vmem:[%s222 + $0x328] sm:$0xff]
        %v391 = vld [vmem:[%s222 + $0x330] sm:$0xff]
        %v392 = vld [vmem:[%s222 + $0x338] sm:$0xff]
        %v393 = vld [vmem:[%s222 + $0x340] sm:$0xff]
        %v394 = vld [vmem:[%s222 + $0x348] sm:$0xff]
        %v395 = vld [vmem:[%s222 + $0x350] sm:$0xff]
        %v396 = vld [vmem:[%s222 + $0x358] sm:$0xff]
        %v397 = vld [vmem:[%s222 + $0x360] sm:$0xff]
        %v398 = vld [vmem:[%s222 + $0x368] sm:$0xff]
        %v399 = vld [vmem:[%s222 + $0x370] sm:$0xff]
        %v400 = vld [vmem:[%s222 + $0x378] sm:$0xff]
        %v401 = vld [vmem:[%s222 + $0x380] sm:$0xff]
        %v402 = vld [vmem:[%s222 + $0x388] sm:$0xff]
        %v403 = vld [vmem:[%s222 + $0x390] sm:$0xff]
        %v404 = vld [vmem:[%s222 + $0x398] sm:$0xff]
        %v405 = vld [vmem:[%s222 + $0x3a0] sm:$0xff]
        %v406 = vld [vmem:[%s222 + $0x3a8] sm:$0xff]
        %v407 = vld [vmem:[%s222 + $0x3b0] sm:$0xff]
        %v408 = vld [vmem:[%s222 + $0x3b8] sm:$0xff]
        %v409 = vld [vmem:[%s222 + $0x3c0] sm:$0xff]
        %v410 = vld [vmem:[%s222 + $0x3c8] sm:$0xff]
        %v411 = vld [vmem:[%s222 + $0x3d0] sm:$0xff]
        %v412 = vld [vmem:[%s222 + $0x3d8] sm:$0xff]
        %v413 = vld [vmem:[%s222 + $0x3e0] sm:$0xff]
        %v414 = vld [vmem:[%s222 + $0x3e8] sm:$0xff]
        %v415 = vld [vmem:[%s222 + $0x3f0] sm:$0xff]
        %v416 = vld [vmem:[%s222 + $0x3f8] sm:$0xff]
        %v417 = vld [vmem:[%s222 + $0x400] sm:$0xff]
        %v418 = vld [vmem:[%s222 + $0x408] sm:$0xff]
        %v419 = vld [vmem:[%s222 + $0x410] sm:$0xff]
        %v420 = vld [vmem:[%s222 + $0x418] sm:$0xff]
        %v421 = vld [vmem:[%s222 + $0x420] sm:$0xff]
        %v422 = vld [vmem:[%s222 + $0x428] sm:$0xff]
        %v423 = vld [vmem:[%s222 + $0x430] sm:$0xff]
        %v424 = vld [vmem:[%s222 + $0x438] sm:$0xff]
        %v425 = vld [vmem:[%s222 + $0x440] sm:$0xff]
        %v426 = vld [vmem:[%s222 + $0x448] sm:$0xff]
        %v427 = vld [vmem:[%s222 + $0x450] sm:$0xff]
        %v428 = vld [vmem:[%s222 + $0x458] sm:$0xff]
        %v429 = vld [vmem:[%s222 + $0x460] sm:$0xff]
        %v430 = vld [vmem:[%s222 + $0x468] sm:$0xff]
        %v431 = vld [vmem:[%s222 + $0x470] sm:$0xff]
        %v432 = vld [vmem:[%s222 + $0x478] sm:$0xff]
        %v433 = vld [vmem:[%s222 + $0x480] sm:$0xff]
        %v434 = vld [vmem:[%s222 + $0x488] sm:$0xff]
        %v435 = vld [vmem:[%s222 + $0x490] sm:$0xff]
        %v436 = vld [vmem:[%s222 + $0x498] sm:$0xff]
        %v437 = vld [vmem:[%s222 + $0x4a0] sm:$0xff]
        %v438 = vld [vmem:[%s222 + $0x4a8] sm:$0xff]
        %v439 = vld [vmem:[%s222 + $0x4b0] sm:$0xff]
        %v440 = vld [vmem:[%s222 + $0x4b8] sm:$0xff]
        %v441 = vld [vmem:[%s222 + $0x4c0] sm:$0xff]
        %v442 = vld [vmem:[%s222 + $0x4c8] sm:$0xff]
        %v443 = vld [vmem:[%s222 + $0x4d0] sm:$0xff]
        %v444 = vld [vmem:[%s222 + $0x4d8] sm:$0xff]
        %v445 = vld [vmem:[%s222 + $0x4e0] sm:$0xff]
        %v446 = vld [vmem:[%s222 + $0x4e8] sm:$0xff]
        %v447 = vld [vmem:[%s222 + $0x4f0] sm:$0xff]
        %v448 = vld [vmem:[%s222 + $0x4f8] sm:$0xff]
        %v449 = vld [vmem:[%s222 + $0x500] sm:$0xff]
        %v450 = vld [vmem:[%s222 + $0x508] sm:$0xff]
        %v451 = vld [vmem:[%s222 + $0x510] sm:$0xff]
        %v452 = vld [vmem:[%s222 + $0x518] sm:$0xff]
        %v453 = vld [vmem:[%s222 + $0x520] sm:$0xff]
        %v454 = vld [vmem:[%s222 + $0x528] sm:$0xff]
        %v455 = vld [vmem:[%s222 + $0x530] sm:$0xff]
        %v456 = vld [vmem:[%s222 + $0x538] sm:$0xff]
        %v457 = vld [vmem:[%s222 + $0x540] sm:$0xff]
        %v458 = vld [vmem:[%s222 + $0x548] sm:$0xff]
        %v459 = vld [vmem:[%s222 + $0x550] sm:$0xff]
        %v460 = vld [vmem:[%s222 + $0x558] sm:$0xff]
        %v461 = vld [vmem:[%s222 + $0x560] sm:$0xff]
        %v462 = vld [vmem:[%s222 + $0x568] sm:$0xff]
        %v463 = vld [vmem:[%s222 + $0x570] sm:$0xff]
        %v464 = vld [vmem:[%s222 + $0x578] sm:$0xff]
        %v465 = vld [vmem:[%s222 + $0x580] sm:$0xff]
        %v466 = vld [vmem:[%s222 + $0x588] sm:$0xff]
        %v467 = vld [vmem:[%s222 + $0x590] sm:$0xff]
        %v468 = vld [vmem:[%s222 + $0x598] sm:$0xff]
        %v469 = vld [vmem:[%s222 + $0x5a0] sm:$0xff]
        %v470 = vld [vmem:[%s222 + $0x5a8] sm:$0xff]
        %v471 = vld [vmem:[%s222 + $0x5b0] sm:$0xff]
        %v472 = vld [vmem:[%s222 + $0x5b8] sm:$0xff]
        %v473 = vld [vmem:[%s222 + $0x5c0] sm:$0xff]
        %v474 = vld [vmem:[%s222 + $0x5c8] sm:$0xff]
        %v475 = vld [vmem:[%s222 + $0x5d0] sm:$0xff]
        %v476 = vld [vmem:[%s222 + $0x5d8] sm:$0xff]
        %v477 = vld [vmem:[%s222 + $0x5e0] sm:$0xff]
        %v478 = vld [vmem:[%s222 + $0x5e8] sm:$0xff]
        %v479 = vld [vmem:[%s222 + $0x5f0] sm:$0xff]
        %v480 = vld [vmem:[%s222 + $0x5f8] sm:$0xff]
        %v481 = vld [vmem:[%s222 + $0x600] sm:$0xff]
        %v482 = vld [vmem:[%s222 + $0x608] sm:$0xff]
        %v483 = vld [vmem:[%s222 + $0x610] sm:$0xff]
        %v484 = vld [vmem:[%s222 + $0x618] sm:$0xff]
        %v485 = vld [vmem:[%s222 + $0x620] sm:$0xff]
        %v486 = vld [vmem:[%s222 + $0x628] sm:$0xff]
        %v487 = vld [vmem:[%s222 + $0x630] sm:$0xff]
        %v488 = vld [vmem:[%s222 + $0x638] sm:$0xff]
        %v489 = vld [vmem:[%s222 + $0x640] sm:$0xff]
        %v490 = vld [vmem:[%s222 + $0x648] sm:$0xff]
        %v491 = vld [vmem:[%s222 + $0x650] sm:$0xff]
        %v492 = vld [vmem:[%s222 + $0x658] sm:$0xff]
        %v493 = vld [vmem:[%s222 + $0x660] sm:$0xff]
        %v494 = vld [vmem:[%s222 + $0x668] sm:$0xff]
        %v495 = vld [vmem:[%s222 + $0x670] sm:$0xff]
        %v496 = vld [vmem:[%s222 + $0x678] sm:$0xff]
        %v497 = vld [vmem:[%s222 + $0x680] sm:$0xff]
        %v498 = vld [vmem:[%s222 + $0x688] sm:$0xff]
        %v499 = vld [vmem:[%s222 + $0x690] sm:$0xff]
        %v500 = vld [vmem:[%s222 + $0x698] sm:$0xff]
        %v501 = vld [vmem:[%s222 + $0x6a0] sm:$0xff]
        %v502 = vld [vmem:[%s222 + $0x6a8] sm:$0xff]
        %v503 = vld [vmem:[%s222 + $0x6b0] sm:$0xff]
        %v504 = vld [vmem:[%s222 + $0x6b8] sm:$0xff]
        %v505 = vld [vmem:[%s222 + $0x6c0] sm:$0xff]
        %v506 = vld [vmem:[%s222 + $0x6c8] sm:$0xff]
        %v507 = vld [vmem:[%s222 + $0x6d0] sm:$0xff]
        %v508 = vld [vmem:[%s222 + $0x6d8] sm:$0xff]
        %v509 = vld [vmem:[%s222 + $0x6e0] sm:$0xff]
        %v510 = vld [vmem:[%s222 + $0x6e8] sm:$0xff]
        %v511 = vld [vmem:[%s222 + $0x6f0] sm:$0xff]
        %v512 = vld [vmem:[%s222 + $0x6f8] sm:$0xff]
        %v513 = vld [vmem:[%s222 + $0x700] sm:$0xff]
        %v514 = vld [vmem:[%s222 + $0x708] sm:$0xff]
        %v515 = vld [vmem:[%s222 + $0x710] sm:$0xff]
        %v516 = vld [vmem:[%s222 + $0x718] sm:$0xff]
        %v517 = vld [vmem:[%s222 + $0x720] sm:$0xff]
        %v518 = vld [vmem:[%s222 + $0x728] sm:$0xff]
        %v519 = vld [vmem:[%s222 + $0x730] sm:$0xff]
        %v520 = vld [vmem:[%s222 + $0x738] sm:$0xff]
        %v521 = vld [vmem:[%s222 + $0x740] sm:$0xff]
        %v522 = vld [vmem:[%s222 + $0x748] sm:$0xff]
        %v523 = vld [vmem:[%s222 + $0x750] sm:$0xff]
        %v524 = vld [vmem:[%s222 + $0x758] sm:$0xff]
        %v525 = vld [vmem:[%s222 + $0x760] sm:$0xff]
        %v526 = vld [vmem:[%s222 + $0x768] sm:$0xff]
        %v527 = vld [vmem:[%s222 + $0x770] sm:$0xff]
        %v528 = vld [vmem:[%s222 + $0x778] sm:$0xff]
        %v529 = vld [vmem:[%s222 + $0x780] sm:$0xff]
        %v530 = vld [vmem:[%s222 + $0x788] sm:$0xff]
        %v531 = vld [vmem:[%s222 + $0x790] sm:$0xff]
        %v532 = vld [vmem:[%s222 + $0x798] sm:$0xff]
        %v533 = vld [vmem:[%s222 + $0x7a0] sm:$0xff]
        %v534 = vld [vmem:[%s222 + $0x7a8] sm:$0xff]
        %v535 = vld [vmem:[%s222 + $0x7b0] sm:$0xff]
        %v536 = vld [vmem:[%s222 + $0x7b8] sm:$0xff]
        %v537 = vld [vmem:[%s222 + $0x7c0] sm:$0xff]
        %v538 = vld [vmem:[%s222 + $0x7c8] sm:$0xff]
        %v539 = vld [vmem:[%s222 + $0x7d0] sm:$0xff]
        %v540 = vld [vmem:[%s222 + $0x7d8] sm:$0xff]
        %v541 = vld [vmem:[%s222 + $0x7e0] sm:$0xff]
        %v542 = vld [vmem:[%s222 + $0x7e8] sm:$0xff]
        %v543 = vld [vmem:[%s222 + $0x7f0] sm:$0xff]
        %v544 = vld [vmem:[%s222 + $0x7f8] sm:$0xff]
        %v545 = vld [vmem:[%s222 + $0x800] sm:$0xff]
        %v546 = vld [vmem:[%s222 + $0x808] sm:$0xff]
        %v547 = vld [vmem:[%s222 + $0x810] sm:$0xff]
        %v548 = vld [vmem:[%s222 + $0x818] sm:$0xff]
        %v549 = vld [vmem:[%s222 + $0x820] sm:$0xff]
        %v550 = vld [vmem:[%s222 + $0x828] sm:$0xff]
        %v551 = vld [vmem:[%s222 + $0x830] sm:$0xff]
        %v552 = vld [vmem:[%s222 + $0x838] sm:$0xff]
        %v553 = vld [vmem:[%s222 + $0x840] sm:$0xff]
        %v554 = vld [vmem:[%s222 + $0x848] sm:$0xff]
        %v555 = vld [vmem:[%s222 + $0x850] sm:$0xff]
        %v556 = vld [vmem:[%s222 + $0x858] sm:$0xff]
        %v557 = vld [vmem:[%s222 + $0x860] sm:$0xff]
        %v558 = vld [vmem:[%s222 + $0x868] sm:$0xff]
        %v559 = vld [vmem:[%s222 + $0x870] sm:$0xff]
        %v560 = vld [vmem:[%s222 + $0x878] sm:$0xff]
        %v561 = vld [vmem:[%s222 + $0x880] sm:$0xff]
        %v562 = vld [vmem:[%s222 + $0x888] sm:$0xff]
        %v563 = vld [vmem:[%s222 + $0x890] sm:$0xff]
        %v564 = vld [vmem:[%s222 + $0x898] sm:$0xff]
        %v565 = vld [vmem:[%s222 + $0x8a0] sm:$0xff]
        %v566 = vld [vmem:[%s222 + $0x8a8] sm:$0xff]
        %v567 = vld [vmem:[%s222 + $0x8b0] sm:$0xff]
        %v568 = vld [vmem:[%s222 + $0x8b8] sm:$0xff]
        %v569 = vld [vmem:[%s222 + $0x8c0] sm:$0xff]
        %v570 = vld [vmem:[%s222 + $0x8c8] sm:$0xff]
        %v571 = vld [vmem:[%s222 + $0x8d0] sm:$0xff]
        %v572 = vld [vmem:[%s222 + $0x8d8] sm:$0xff]
        %v573 = vld [vmem:[%s222 + $0x8e0] sm:$0xff]
        %v574 = vld [vmem:[%s222 + $0x8e8] sm:$0xff]
        %v575 = vld [vmem:[%s222 + $0x8f0] sm:$0xff]
        %v576 = vld [vmem:[%s222 + $0x8f8] sm:$0xff]
        %v577 = vld [vmem:[%s222 + $0x900] sm:$0xff]
        %v578 = vld [vmem:[%s222 + $0x908] sm:$0xff]
        %v579 = vld [vmem:[%s222 + $0x910] sm:$0xff]
        %v580 = vld [vmem:[%s222 + $0x918] sm:$0xff]
        %v581 = vld [vmem:[%s222 + $0x920] sm:$0xff]
        %v582 = vld [vmem:[%s222 + $0x928] sm:$0xff]
        %v583 = vld [vmem:[%s222 + $0x930] sm:$0xff]
        %v584 = vld [vmem:[%s222 + $0x938] sm:$0xff]
        %v585 = vld [vmem:[%s222 + $0x940] sm:$0xff]
        %v586 = vld [vmem:[%s222 + $0x948] sm:$0xff]
        %v587 = vld [vmem:[%s222 + $0x950] sm:$0xff]
        %v588 = vld [vmem:[%s222 + $0x958] sm:$0xff]
        %v589 = vld [vmem:[%s222 + $0x960] sm:$0xff]
        %v590 = vld [vmem:[%s222 + $0x968] sm:$0xff]
        %v591 = vld [vmem:[%s222 + $0x970] sm:$0xff]
        %v592 = vld [vmem:[%s222 + $0x978] sm:$0xff]
        %v593 = vld [vmem:[%s222 + $0x980] sm:$0xff]
        %v594 = vld [vmem:[%s222 + $0x988] sm:$0xff]
        %v595 = vld [vmem:[%s222 + $0x990] sm:$0xff]
        %v596 = vld [vmem:[%s222 + $0x998] sm:$0xff]
        %v597 = vld [vmem:[%s222 + $0x9a0] sm:$0xff]
        %v598 = vld [vmem:[%s222 + $0x9a8] sm:$0xff]
        %v599 = vld [vmem:[%s222 + $0x9b0] sm:$0xff]
        %v600 = vld [vmem:[%s222 + $0x9b8] sm:$0xff]
        %v601 = vld [vmem:[%s222 + $0x9c0] sm:$0xff]
        %v602 = vld [vmem:[%s222 + $0x9c8] sm:$0xff]
        %v603 = vld [vmem:[%s222 + $0x9d0] sm:$0xff]
        %v604 = vld [vmem:[%s222 + $0x9d8] sm:$0xff]
        %v605 = vld [vmem:[%s222 + $0x9e0] sm:$0xff]
        %v606 = vld [vmem:[%s222 + $0x9e8] sm:$0xff]
        %v607 = vld [vmem:[%s222 + $0x9f0] sm:$0xff]
        %v608 = vld [vmem:[%s222 + $0x9f8] sm:$0xff]
        %v609 = vld [vmem:[%s222 + $0xa00] sm:$0xff]
        %v610 = vld [vmem:[%s222 + $0xa08] sm:$0xff]
        %v611 = vld [vmem:[%s222 + $0xa10] sm:$0xff]
        %v612 = vld [vmem:[%s222 + $0xa18] sm:$0xff]
        %v613 = vld [vmem:[%s222 + $0xa20] sm:$0xff]
        %v614 = vld [vmem:[%s222 + $0xa28] sm:$0xff]
        %v615 = vld [vmem:[%s222 + $0xa30] sm:$0xff]
        %v616 = vld [vmem:[%s222 + $0xa38] sm:$0xff]
        %v617 = vld [vmem:[%s222 + $0xa40] sm:$0xff]
        %v618 = vld [vmem:[%s222 + $0xa48] sm:$0xff]
        %v619 = vld [vmem:[%s222 + $0xa50] sm:$0xff]
        %v620 = vld [vmem:[%s222 + $0xa58] sm:$0xff]
        %v621 = vld [vmem:[%s222 + $0xa60] sm:$0xff]
        %v622 = vld [vmem:[%s222 + $0xa68] sm:$0xff]
        %v623 = vld [vmem:[%s222 + $0xa70] sm:$0xff]
        %v624 = vld [vmem:[%s222 + $0xa78] sm:$0xff]
        %v625 = vld [vmem:[%s222 + $0xa80] sm:$0xff]
        %v626 = vld [vmem:[%s222 + $0xa88] sm:$0xff]
        %v627 = vld [vmem:[%s222 + $0xa90] sm:$0xff]
        %v628 = vld [vmem:[%s222 + $0xa98] sm:$0xff]
        %v629 = vld [vmem:[%s222 + $0xaa0] sm:$0xff]
        %v630 = vld [vmem:[%s222 + $0xaa8] sm:$0xff]
        %v631 = vld [vmem:[%s222 + $0xab0] sm:$0xff]
        %v632 = vld [vmem:[%s222 + $0xab8] sm:$0xff]
        %v633 = vld [vmem:[%s222 + $0xac0] sm:$0xff]
        %v634 = vld [vmem:[%s222 + $0xac8] sm:$0xff]
        %v635 = vld [vmem:[%s222 + $0xad0] sm:$0xff]
        %v636 = vld [vmem:[%s222 + $0xad8] sm:$0xff]
        %v637 = vld [vmem:[%s222 + $0xae0] sm:$0xff]
        %v638 = vld [vmem:[%s222 + $0xae8] sm:$0xff]
        %v639 = vld [vmem:[%s222 + $0xaf0] sm:$0xff]
        %v640 = vld [vmem:[%s222 + $0xaf8] sm:$0xff]
        %v641 = vld [vmem:[%s222 + $0xb00] sm:$0xff]
        %v642 = vld [vmem:[%s222 + $0xb08] sm:$0xff]
        %v643 = vld [vmem:[%s222 + $0xb10] sm:$0xff]
        %v644 = vld [vmem:[%s222 + $0xb18] sm:$0xff]
        %v645 = vld [vmem:[%s222 + $0xb20] sm:$0xff]
        %v646 = vld [vmem:[%s222 + $0xb28] sm:$0xff]
        %v647 = vld [vmem:[%s222 + $0xb30] sm:$0xff]
        %v648 = vld [vmem:[%s222 + $0xb38] sm:$0xff]
        %v649 = vld [vmem:[%s222 + $0xb40] sm:$0xff]
        %v650 = vld [vmem:[%s222 + $0xb48] sm:$0xff]
        %v651 = vld [vmem:[%s222 + $0xb50] sm:$0xff]
        %v652 = vld [vmem:[%s222 + $0xb58] sm:$0xff]
        %v653 = vld [vmem:[%s222 + $0xb60] sm:$0xff]
        %v654 = vld [vmem:[%s222 + $0xb68] sm:$0xff]
        %v655 = vld [vmem:[%s222 + $0xb70] sm:$0xff]
        %v656 = vld [vmem:[%s222 + $0xb78] sm:$0xff]
        %v657 = vld [vmem:[%s222 + $0xb80] sm:$0xff]
        %v658 = vld [vmem:[%s222 + $0xb88] sm:$0xff]
        %v659 = vld [vmem:[%s222 + $0xb90] sm:$0xff]
        %v660 = vld [vmem:[%s222 + $0xb98] sm:$0xff]
        %v661 = vld [vmem:[%s222 + $0xba0] sm:$0xff]
        %v662 = vld [vmem:[%s222 + $0xba8] sm:$0xff]
        %v663 = vld [vmem:[%s222 + $0xbb0] sm:$0xff]
        %v664 = vld [vmem:[%s222 + $0xbb8] sm:$0xff]
        %v665 = vld [vmem:[%s222 + $0xbc0] sm:$0xff]
        %v666 = vld [vmem:[%s222 + $0xbc8] sm:$0xff]
        %v667 = vld [vmem:[%s222 + $0xbd0] sm:$0xff]
        %v668 = vld [vmem:[%s222 + $0xbd8] sm:$0xff]
        %v669 = vld [vmem:[%s222 + $0xbe0] sm:$0xff]
        %v670 = vld [vmem:[%s222 + $0xbe8] sm:$0xff]
        %v671 = vld [vmem:[%s222 + $0xbf0] sm:$0xff]
        %v672 = vld [vmem:[%s222 + $0xbf8] sm:$0xff]
        %v673 = vld [vmem:[%s222 + $0xc00] sm:$0xff]
        %v674 = vld [vmem:[%s222 + $0xc08] sm:$0xff]
        %v675 = vld [vmem:[%s222 + $0xc10] sm:$0xff]
        %v676 = vld [vmem:[%s222 + $0xc18] sm:$0xff]
        %v677 = vld [vmem:[%s222 + $0xc20] sm:$0xff]
        %v678 = vld [vmem:[%s222 + $0xc28] sm:$0xff]
        %v679 = vld [vmem:[%s222 + $0xc30] sm:$0xff]
        %v680 = vld [vmem:[%s222 + $0xc38] sm:$0xff]
        %v681 = vld [vmem:[%s222 + $0xc40] sm:$0xff]
        %v682 = vld [vmem:[%s222 + $0xc48] sm:$0xff]
        %v683 = vld [vmem:[%s222 + $0xc50] sm:$0xff]
        %v684 = vld [vmem:[%s222 + $0xc58] sm:$0xff]
        %v685 = vld [vmem:[%s222 + $0xc60] sm:$0xff]
        %v686 = vld [vmem:[%s222 + $0xc68] sm:$0xff]
        %v687 = vld [vmem:[%s222 + $0xc70] sm:$0xff]
        %v688 = vld [vmem:[%s222 + $0xc78] sm:$0xff]
        %v689 = vld [vmem:[%s222 + $0xc80] sm:$0xff]
        %v690 = vld [vmem:[%s222 + $0xc88] sm:$0xff]
        %v691 = vld [vmem:[%s222 + $0xc90] sm:$0xff]
        %v692 = vld [vmem:[%s222 + $0xc98] sm:$0xff]
        %v693 = vld [vmem:[%s222 + $0xca0] sm:$0xff]
        %v694 = vld [vmem:[%s222 + $0xca8] sm:$0xff]
        %v695 = vld [vmem:[%s222 + $0xcb0] sm:$0xff]
        %v696 = vld [vmem:[%s222 + $0xcb8] sm:$0xff]
        %v697 = vld [vmem:[%s222 + $0xcc0] sm:$0xff]
        %v698 = vld [vmem:[%s222 + $0xcc8] sm:$0xff]
        %v699 = vld [vmem:[%s222 + $0xcd0] sm:$0xff]
        %v700 = vld [vmem:[%s222 + $0xcd8] sm:$0xff]
        %v701 = vld [vmem:[%s222 + $0xce0] sm:$0xff]
        %v702 = vld [vmem:[%s222 + $0xce8] sm:$0xff]
        %v703 = vld [vmem:[%s222 + $0xcf0] sm:$0xff]
        %v704 = vld [vmem:[%s222 + $0xcf8] sm:$0xff]
        %v705 = vld [vmem:[%s222 + $0xd00] sm:$0xff]
        %v706 = vld [vmem:[%s222 + $0xd08] sm:$0xff]
        %v707 = vld [vmem:[%s222 + $0xd10] sm:$0xff]
        %v708 = vld [vmem:[%s222 + $0xd18] sm:$0xff]
        %v709 = vld [vmem:[%s222 + $0xd20] sm:$0xff]
        %v710 = vld [vmem:[%s222 + $0xd28] sm:$0xff]
        %v711 = vld [vmem:[%s222 + $0xd30] sm:$0xff]
        %v712 = vld [vmem:[%s222 + $0xd38] sm:$0xff]
        %v713 = vld [vmem:[%s222 + $0xd40] sm:$0xff]
        %v714 = vld [vmem:[%s222 + $0xd48] sm:$0xff]
        %v715 = vld [vmem:[%s222 + $0xd50] sm:$0xff]
        %v716 = vld [vmem:[%s222 + $0xd58] sm:$0xff]
        %v717 = vld [vmem:[%s222 + $0xd60] sm:$0xff]
        %v718 = vld [vmem:[%s222 + $0xd68] sm:$0xff]
        %v719 = vld [vmem:[%s222 + $0xd70] sm:$0xff]
        %v720 = vld [vmem:[%s222 + $0xd78] sm:$0xff]
        %v721 = vld [vmem:[%s222 + $0xd80] sm:$0xff]
        %v722 = vld [vmem:[%s222 + $0xd88] sm:$0xff]
        %v723 = vld [vmem:[%s222 + $0xd90] sm:$0xff]
        %v724 = vld [vmem:[%s222 + $0xd98] sm:$0xff]
        %v725 = vld [vmem:[%s222 + $0xda0] sm:$0xff]
        %v726 = vld [vmem:[%s222 + $0xda8] sm:$0xff]
        %v727 = vld [vmem:[%s222 + $0xdb0] sm:$0xff]
        %v728 = vld [vmem:[%s222 + $0xdb8] sm:$0xff]
        %v729 = vld [vmem:[%s222 + $0xdc0] sm:$0xff]
        %v730 = vld [vmem:[%s222 + $0xdc8] sm:$0xff]
        %v731 = vld [vmem:[%s222 + $0xdd0] sm:$0xff]
        %v732 = vld [vmem:[%s222 + $0xdd8] sm:$0xff]
        %v733 = vld [vmem:[%s222 + $0xde0] sm:$0xff]
        %v734 = vld [vmem:[%s222 + $0xde8] sm:$0xff]
        %v735 = vld [vmem:[%s222 + $0xdf0] sm:$0xff]
        %v736 = vld [vmem:[%s222 + $0xdf8] sm:$0xff]
        %v737 = vld [vmem:[%s222 + $0xe00] sm:$0xff]
        %v738 = vld [vmem:[%s222 + $0xe08] sm:$0xff]
        %v739 = vld [vmem:[%s222 + $0xe10] sm:$0xff]
        %v740 = vld [vmem:[%s222 + $0xe18] sm:$0xff]
        %v741 = vld [vmem:[%s222 + $0xe20] sm:$0xff]
        %v742 = vld [vmem:[%s222 + $0xe28] sm:$0xff]
        %v743 = vld [vmem:[%s222 + $0xe30] sm:$0xff]
        %v744 = vld [vmem:[%s222 + $0xe38] sm:$0xff]
        %v745 = vld [vmem:[%s222 + $0xe40] sm:$0xff]
        %v746 = vld [vmem:[%s222 + $0xe48] sm:$0xff]
        %v747 = vld [vmem:[%s222 + $0xe50] sm:$0xff]
        %v748 = vld [vmem:[%s222 + $0xe58] sm:$0xff]
        %v749 = vld [vmem:[%s222 + $0xe60] sm:$0xff]
        %v750 = vld [vmem:[%s222 + $0xe68] sm:$0xff]
        %v751 = vld [vmem:[%s222 + $0xe70] sm:$0xff]
        %v752 = vld [vmem:[%s222 + $0xe78] sm:$0xff]
        %v753 = vld [vmem:[%s222 + $0xe80] sm:$0xff]
        %v754 = vld [vmem:[%s222 + $0xe88] sm:$0xff]
        %v755 = vld [vmem:[%s222 + $0xe90] sm:$0xff]
        %v756 = vld [vmem:[%s222 + $0xe98] sm:$0xff]
        %v757 = vld [vmem:[%s222 + $0xea0] sm:$0xff]
        %v758 = vld [vmem:[%s222 + $0xea8] sm:$0xff]
        %v759 = vld [vmem:[%s222 + $0xeb0] sm:$0xff]
        %v760 = vld [vmem:[%s222 + $0xeb8] sm:$0xff]
        %v761 = vld [vmem:[%s222 + $0xec0] sm:$0xff]
        %v762 = vld [vmem:[%s222 + $0xec8] sm:$0xff]
        %v763 = vld [vmem:[%s222 + $0xed0] sm:$0xff]
        %v764 = vld [vmem:[%s222 + $0xed8] sm:$0xff]
        %v765 = vld [vmem:[%s222 + $0xee0] sm:$0xff]
        %v766 = vld [vmem:[%s222 + $0xee8] sm:$0xff]
        %v767 = vld [vmem:[%s222 + $0xef0] sm:$0xff]
        %v768 = vld [vmem:[%s222 + $0xef8] sm:$0xff]
        %v769 = vld [vmem:[%s222 + $0xf00] sm:$0xff]
        %v770 = vld [vmem:[%s222 + $0xf08] sm:$0xff]
        %v771 = vld [vmem:[%s222 + $0xf10] sm:$0xff]
        %v772 = vld [vmem:[%s222 + $0xf18] sm:$0xff]
        %v773 = vld [vmem:[%s222 + $0xf20] sm:$0xff]
        %v774 = vld [vmem:[%s222 + $0xf28] sm:$0xff]
        %v775 = vld [vmem:[%s222 + $0xf30] sm:$0xff]
        %v776 = vld [vmem:[%s222 + $0xf38] sm:$0xff]
        %v777 = vld [vmem:[%s222 + $0xf40] sm:$0xff]
        %v778 = vld [vmem:[%s222 + $0xf48] sm:$0xff]
        %v779 = vld [vmem:[%s222 + $0xf50] sm:$0xff]
        %v780 = vld [vmem:[%s222 + $0xf58] sm:$0xff]
        %v781 = vld [vmem:[%s222 + $0xf60] sm:$0xff]
        %v782 = vld [vmem:[%s222 + $0xf68] sm:$0xff]
        %v783 = vld [vmem:[%s222 + $0xf70] sm:$0xff]
        %v784 = vld [vmem:[%s222 + $0xf78] sm:$0xff]
        %v785 = vld [vmem:[%s222 + $0xf80] sm:$0xff]
        %v786 = vld [vmem:[%s222 + $0xf88] sm:$0xff]
        %v787 = vld [vmem:[%s222 + $0xf90] sm:$0xff]
        %v788 = vld [vmem:[%s222 + $0xf98] sm:$0xff]
        %v789 = vld [vmem:[%s222 + $0xfa0] sm:$0xff]
        %v790 = vld [vmem:[%s222 + $0xfa8] sm:$0xff]
        %v791 = vld [vmem:[%s222 + $0xfb0] sm:$0xff]
        %v792 = vld [vmem:[%s222 + $0xfb8] sm:$0xff]
        %v793 = vld [vmem:[%s222 + $0xfc0] sm:$0xff]
        %v794 = vld [vmem:[%s222 + $0xfc8] sm:$0xff]
        %v795 = vld [vmem:[%s222 + $0xfd0] sm:$0xff]
        %v796 = vld [vmem:[%s222 + $0xfd8] sm:$0xff]
        %v797 = vld [vmem:[%s222 + $0xfe0] sm:$0xff]
        %v798 = vld [vmem:[%s222 + $0xfe8] sm:$0xff]
        %v799 = vld [vmem:[%s222 + $0xff0] sm:$0xff]
        %v800 = vld [vmem:[%s222 + $0xff8] sm:$0xff]
        %v801 = vld [vmem:[%s231] sm:$0xff]
        %v802 = vld [vmem:[%s231 + $0x8] sm:$0xff]
        %v805 = vlaneseq
        %v806 = vshrl.u32 %v805, 7
        %v807 = vsub.s32 0, %v806
        %v808 = vrot.slane %v801, %v807
        %v809 = vlaneseq
        %v810 = vshrl.u32 %v809, 7
        %v811 = vsub.s32 1, %v810
        %v812 = vrot.slane %v801, %v811
        %v813 = vlaneseq
        %v814 = vshrl.u32 %v813, 7
        %v815 = vsub.s32 2, %v814
        %v816 = vrot.slane %v801, %v815
        %v817 = vlaneseq
        %v818 = vshrl.u32 %v817, 7
        %v819 = vsub.s32 3, %v818
        %v820 = vrot.slane %v801, %v819
        %v821 = vlaneseq
        %v822 = vshrl.u32 %v821, 7
        %v823 = vsub.s32 4, %v822
        %v824 = vrot.slane %v801, %v823
        %v825 = vlaneseq
        %v826 = vshrl.u32 %v825, 7
        %v827 = vsub.s32 5, %v826
        %v828 = vrot.slane %v801, %v827
        %v829 = vlaneseq
        %v830 = vshrl.u32 %v829, 7
        %v831 = vsub.s32 6, %v830
        %v832 = vrot.slane %v801, %v831
        %v833 = vlaneseq
        %v834 = vshrl.u32 %v833, 7
        %v835 = vsub.s32 7, %v834
        %v836 = vrot.slane %v801, %v835
        %v837 = vlaneseq
        %v838 = vshrl.u32 %v837, 7
        %v839 = vsub.s32 0, %v838
        %v840 = vrot.slane %v802, %v839
        %v841 = vlaneseq
        %v842 = vshrl.u32 %v841, 7
        %v843 = vsub.s32 1, %v842
        %v844 = vrot.slane %v802, %v843
        %v845 = vlaneseq
        %v846 = vshrl.u32 %v845, 7
        %v847 = vsub.s32 2, %v846
        %v848 = vrot.slane %v802, %v847
        %v849 = vlaneseq
        %v850 = vshrl.u32 %v849, 7
        %v851 = vsub.s32 3, %v850
        %v852 = vrot.slane %v802, %v851
        %v853 = vlaneseq
        %v854 = vshrl.u32 %v853, 7
        %v855 = vsub.s32 4, %v854
        %v856 = vrot.slane %v802, %v855
        %v857 = vlaneseq
        %v858 = vshrl.u32 %v857, 7
        %v859 = vsub.s32 5, %v858
        %v860 = vrot.slane %v802, %v859
        %v861 = vlaneseq
        %v862 = vshrl.u32 %v861, 7
        %v863 = vsub.s32 6, %v862
        %v864 = vrot.slane %v802, %v863
        %v865 = vlaneseq
        %v866 = vshrl.u32 %v865, 7
        %v867 = vsub.s32 7, %v866
        %v868 = vrot.slane %v802, %v867
        %v1397 = vunpack.c.l.b16 %v289
        %v1398 = vunpack.c.h.b16 %v289
        %v1399 = vunpack.c.l.b16 %v290
        %v1400 = vunpack.c.h.b16 %v290
        %v1401 = vunpack.c.l.b16 %v291
        %v1402 = vunpack.c.h.b16 %v291
        %v1403 = vunpack.c.l.b16 %v292
        %v1404 = vunpack.c.h.b16 %v292
        %v1405 = vunpack.c.l.b16 %v293
        %v1406 = vunpack.c.h.b16 %v293
        %v1407 = vunpack.c.l.b16 %v294
        %v1408 = vunpack.c.h.b16 %v294
        %v1409 = vunpack.c.l.b16 %v295
        %v1410 = vunpack.c.h.b16 %v295
        %v1411 = vunpack.c.l.b16 %v296
        %v1412 = vunpack.c.h.b16 %v296
        %v1413 = vunpack.c.l.b16 %v297
        %v1414 = vunpack.c.h.b16 %v297
        %v1415 = vunpack.c.l.b16 %v298
        %v1416 = vunpack.c.h.b16 %v298
        %v1417 = vunpack.c.l.b16 %v299
        %v1418 = vunpack.c.h.b16 %v299
        %v1419 = vunpack.c.l.b16 %v300
        %v1420 = vunpack.c.h.b16 %v300
        %v1421 = vunpack.c.l.b16 %v301
        %v1422 = vunpack.c.h.b16 %v301
        %v1423 = vunpack.c.l.b16 %v302
        %v1424 = vunpack.c.h.b16 %v302
        %v1425 = vunpack.c.l.b16 %v303
        %v1426 = vunpack.c.h.b16 %v303
        %v1427 = vunpack.c.l.b16 %v304
        %v1428 = vunpack.c.h.b16 %v304
        %v1429 = vunpack.c.l.b16 %v305
        %v1430 = vunpack.c.h.b16 %v305
        %v1431 = vunpack.c.l.b16 %v306
        %v1432 = vunpack.c.h.b16 %v306
        %v1433 = vunpack.c.l.b16 %v307
        %v1434 = vunpack.c.h.b16 %v307
        %v1435 = vunpack.c.l.b16 %v308
        %v1436 = vunpack.c.h.b16 %v308
        %v1437 = vunpack.c.l.b16 %v309
        %v1438 = vunpack.c.h.b16 %v309
        %v1439 = vunpack.c.l.b16 %v310
        %v1440 = vunpack.c.h.b16 %v310
        %v1441 = vunpack.c.l.b16 %v311
        %v1442 = vunpack.c.h.b16 %v311
        %v1443 = vunpack.c.l.b16 %v312
        %v1444 = vunpack.c.h.b16 %v312
        %v1445 = vunpack.c.l.b16 %v313
        %v1446 = vunpack.c.h.b16 %v313
        %v1447 = vunpack.c.l.b16 %v314
        %v1448 = vunpack.c.h.b16 %v314
        %v1449 = vunpack.c.l.b16 %v315
        %v1450 = vunpack.c.h.b16 %v315
        %v1451 = vunpack.c.l.b16 %v316
        %v1452 = vunpack.c.h.b16 %v316
        %v1453 = vunpack.c.l.b16 %v317
        %v1454 = vunpack.c.h.b16 %v317
        %v1455 = vunpack.c.l.b16 %v318
        %v1456 = vunpack.c.h.b16 %v318
        %v1457 = vunpack.c.l.b16 %v319
        %v1458 = vunpack.c.h.b16 %v319
        %v1459 = vunpack.c.l.b16 %v320
        %v1460 = vunpack.c.h.b16 %v320
        %v1461 = vunpack.c.l.b16 %v321
        %v1462 = vunpack.c.h.b16 %v321
        %v1463 = vunpack.c.l.b16 %v322
        %v1464 = vunpack.c.h.b16 %v322
        %v1465 = vunpack.c.l.b16 %v323
        %v1466 = vunpack.c.h.b16 %v323
        %v1467 = vunpack.c.l.b16 %v324
        %v1468 = vunpack.c.h.b16 %v324
        %v1469 = vunpack.c.l.b16 %v325
        %v1470 = vunpack.c.h.b16 %v325
        %v1471 = vunpack.c.l.b16 %v326
        %v1472 = vunpack.c.h.b16 %v326
        %v1473 = vunpack.c.l.b16 %v327
        %v1474 = vunpack.c.h.b16 %v327
        %v1475 = vunpack.c.l.b16 %v328
        %v1476 = vunpack.c.h.b16 %v328
        %v1477 = vunpack.c.l.b16 %v329
        %v1478 = vunpack.c.h.b16 %v329
        %v1479 = vunpack.c.l.b16 %v330
        %v1480 = vunpack.c.h.b16 %v330
        %v1481 = vunpack.c.l.b16 %v331
        %v1482 = vunpack.c.h.b16 %v331
        %v1483 = vunpack.c.l.b16 %v332
        %v1484 = vunpack.c.h.b16 %v332
        %v1485 = vunpack.c.l.b16 %v333
        %v1486 = vunpack.c.h.b16 %v333
        %v1487 = vunpack.c.l.b16 %v334
        %v1488 = vunpack.c.h.b16 %v334
        %v1489 = vunpack.c.l.b16 %v335
        %v1490 = vunpack.c.h.b16 %v335
        %v1491 = vunpack.c.l.b16 %v336
        %v1492 = vunpack.c.h.b16 %v336
        %v1493 = vunpack.c.l.b16 %v337
        %v1494 = vunpack.c.h.b16 %v337
        %v1495 = vunpack.c.l.b16 %v338
        %v1496 = vunpack.c.h.b16 %v338
        %v1497 = vunpack.c.l.b16 %v339
        %v1498 = vunpack.c.h.b16 %v339
        %v1499 = vunpack.c.l.b16 %v340
        %v1500 = vunpack.c.h.b16 %v340
        %v1501 = vunpack.c.l.b16 %v341
        %v1502 = vunpack.c.h.b16 %v341
        %v1503 = vunpack.c.l.b16 %v342
        %v1504 = vunpack.c.h.b16 %v342
        %v1505 = vunpack.c.l.b16 %v343
        %v1506 = vunpack.c.h.b16 %v343
        %v1507 = vunpack.c.l.b16 %v344
        %v1508 = vunpack.c.h.b16 %v344
        %v1509 = vunpack.c.l.b16 %v345
        %v1510 = vunpack.c.h.b16 %v345
        %v1511 = vunpack.c.l.b16 %v346
        %v1512 = vunpack.c.h.b16 %v346
        %v1513 = vunpack.c.l.b16 %v347
        %v1514 = vunpack.c.h.b16 %v347
        %v1515 = vunpack.c.l.b16 %v348
        %v1516 = vunpack.c.h.b16 %v348
        %v1517 = vunpack.c.l.b16 %v349
        %v1518 = vunpack.c.h.b16 %v349
        %v1519 = vunpack.c.l.b16 %v350
        %v1520 = vunpack.c.h.b16 %v350
        %v1521 = vunpack.c.l.b16 %v351
        %v1522 = vunpack.c.h.b16 %v351
        %v1523 = vunpack.c.l.b16 %v352
        %v1524 = vunpack.c.h.b16 %v352
        %v1525 = vunpack.c.l.b16 %v353
        %v1526 = vunpack.c.h.b16 %v353
        %v1527 = vunpack.c.l.b16 %v354
        %v1528 = vunpack.c.h.b16 %v354
        %v1529 = vunpack.c.l.b16 %v355
        %v1530 = vunpack.c.h.b16 %v355
        %v1531 = vunpack.c.l.b16 %v356
        %v1532 = vunpack.c.h.b16 %v356
        %v1533 = vunpack.c.l.b16 %v357
        %v1534 = vunpack.c.h.b16 %v357
        %v1535 = vunpack.c.l.b16 %v358
        %v1536 = vunpack.c.h.b16 %v358
        %v1537 = vunpack.c.l.b16 %v359
        %v1538 = vunpack.c.h.b16 %v359
        %v1539 = vunpack.c.l.b16 %v360
        %v1540 = vunpack.c.h.b16 %v360
        %v1541 = vunpack.c.l.b16 %v361
        %v1542 = vunpack.c.h.b16 %v361
        %v1543 = vunpack.c.l.b16 %v362
        %v1544 = vunpack.c.h.b16 %v362
        %v1545 = vunpack.c.l.b16 %v363
        %v1546 = vunpack.c.h.b16 %v363
        %v1547 = vunpack.c.l.b16 %v364
        %v1548 = vunpack.c.h.b16 %v364
        %v1549 = vunpack.c.l.b16 %v365
        %v1550 = vunpack.c.h.b16 %v365
        %v1551 = vunpack.c.l.b16 %v366
        %v1552 = vunpack.c.h.b16 %v366
        %v1553 = vunpack.c.l.b16 %v367
        %v1554 = vunpack.c.h.b16 %v367
        %v1555 = vunpack.c.l.b16 %v368
        %v1556 = vunpack.c.h.b16 %v368
        %v1557 = vunpack.c.l.b16 %v369
        %v1558 = vunpack.c.h.b16 %v369
        %v1559 = vunpack.c.l.b16 %v370
        %v1560 = vunpack.c.h.b16 %v370
        %v1561 = vunpack.c.l.b16 %v371
        %v1562 = vunpack.c.h.b16 %v371
        %v1563 = vunpack.c.l.b16 %v372
        %v1564 = vunpack.c.h.b16 %v372
        %v1565 = vunpack.c.l.b16 %v373
        %v1566 = vunpack.c.h.b16 %v373
        %v1567 = vunpack.c.l.b16 %v374
        %v1568 = vunpack.c.h.b16 %v374
        %v1569 = vunpack.c.l.b16 %v375
        %v1570 = vunpack.c.h.b16 %v375
        %v1571 = vunpack.c.l.b16 %v376
        %v1572 = vunpack.c.h.b16 %v376
        %v1573 = vunpack.c.l.b16 %v377
        %v1574 = vunpack.c.h.b16 %v377
        %v1575 = vunpack.c.l.b16 %v378
        %v1576 = vunpack.c.h.b16 %v378
        %v1577 = vunpack.c.l.b16 %v379
        %v1578 = vunpack.c.h.b16 %v379
        %v1579 = vunpack.c.l.b16 %v380
        %v1580 = vunpack.c.h.b16 %v380
        %v1581 = vunpack.c.l.b16 %v381
        %v1582 = vunpack.c.h.b16 %v381
        %v1583 = vunpack.c.l.b16 %v382
        %v1584 = vunpack.c.h.b16 %v382
        %v1585 = vunpack.c.l.b16 %v383
        %v1586 = vunpack.c.h.b16 %v383
        %v1587 = vunpack.c.l.b16 %v384
        %v1588 = vunpack.c.h.b16 %v384
        %v1589 = vunpack.c.l.b16 %v385
        %v1590 = vunpack.c.h.b16 %v385
        %v1591 = vunpack.c.l.b16 %v386
        %v1592 = vunpack.c.h.b16 %v386
        %v1593 = vunpack.c.l.b16 %v387
        %v1594 = vunpack.c.h.b16 %v387
        %v1595 = vunpack.c.l.b16 %v388
        %v1596 = vunpack.c.h.b16 %v388
        %v1597 = vunpack.c.l.b16 %v389
        %v1598 = vunpack.c.h.b16 %v389
        %v1599 = vunpack.c.l.b16 %v390
        %v1600 = vunpack.c.h.b16 %v390
        %v1601 = vunpack.c.l.b16 %v391
        %v1602 = vunpack.c.h.b16 %v391
        %v1603 = vunpack.c.l.b16 %v392
        %v1604 = vunpack.c.h.b16 %v392
        %v1605 = vunpack.c.l.b16 %v393
        %v1606 = vunpack.c.h.b16 %v393
        %v1607 = vunpack.c.l.b16 %v394
        %v1608 = vunpack.c.h.b16 %v394
        %v1609 = vunpack.c.l.b16 %v395
        %v1610 = vunpack.c.h.b16 %v395
        %v1611 = vunpack.c.l.b16 %v396
        %v1612 = vunpack.c.h.b16 %v396
        %v1613 = vunpack.c.l.b16 %v397
        %v1614 = vunpack.c.h.b16 %v397
        %v1615 = vunpack.c.l.b16 %v398
        %v1616 = vunpack.c.h.b16 %v398
        %v1617 = vunpack.c.l.b16 %v399
        %v1618 = vunpack.c.h.b16 %v399
        %v1619 = vunpack.c.l.b16 %v400
        %v1620 = vunpack.c.h.b16 %v400
        %v1621 = vunpack.c.l.b16 %v401
        %v1622 = vunpack.c.h.b16 %v401
        %v1623 = vunpack.c.l.b16 %v402
        %v1624 = vunpack.c.h.b16 %v402
        %v1625 = vunpack.c.l.b16 %v403
        %v1626 = vunpack.c.h.b16 %v403
        %v1627 = vunpack.c.l.b16 %v404
        %v1628 = vunpack.c.h.b16 %v404
        %v1629 = vunpack.c.l.b16 %v405
        %v1630 = vunpack.c.h.b16 %v405
        %v1631 = vunpack.c.l.b16 %v406
        %v1632 = vunpack.c.h.b16 %v406
        %v1633 = vunpack.c.l.b16 %v407
        %v1634 = vunpack.c.h.b16 %v407
        %v1635 = vunpack.c.l.b16 %v408
        %v1636 = vunpack.c.h.b16 %v408
        %v1637 = vunpack.c.l.b16 %v409
        %v1638 = vunpack.c.h.b16 %v409
        %v1639 = vunpack.c.l.b16 %v410
        %v1640 = vunpack.c.h.b16 %v410
        %v1641 = vunpack.c.l.b16 %v411
        %v1642 = vunpack.c.h.b16 %v411
        %v1643 = vunpack.c.l.b16 %v412
        %v1644 = vunpack.c.h.b16 %v412
        %v1645 = vunpack.c.l.b16 %v413
        %v1646 = vunpack.c.h.b16 %v413
        %v1647 = vunpack.c.l.b16 %v414
        %v1648 = vunpack.c.h.b16 %v414
        %v1649 = vunpack.c.l.b16 %v415
        %v1650 = vunpack.c.h.b16 %v415
        %v1651 = vunpack.c.l.b16 %v416
        %v1652 = vunpack.c.h.b16 %v416
        %v1653 = vunpack.c.l.b16 %v417
        %v1654 = vunpack.c.h.b16 %v417
        %v1655 = vunpack.c.l.b16 %v418
        %v1656 = vunpack.c.h.b16 %v418
        %v1657 = vunpack.c.l.b16 %v419
        %v1658 = vunpack.c.h.b16 %v419
        %v1659 = vunpack.c.l.b16 %v420
        %v1660 = vunpack.c.h.b16 %v420
        %v1661 = vunpack.c.l.b16 %v421
        %v1662 = vunpack.c.h.b16 %v421
        %v1663 = vunpack.c.l.b16 %v422
        %v1664 = vunpack.c.h.b16 %v422
        %v1665 = vunpack.c.l.b16 %v423
        %v1666 = vunpack.c.h.b16 %v423
        %v1667 = vunpack.c.l.b16 %v424
        %v1668 = vunpack.c.h.b16 %v424
        %v1669 = vunpack.c.l.b16 %v425
        %v1670 = vunpack.c.h.b16 %v425
        %v1671 = vunpack.c.l.b16 %v426
        %v1672 = vunpack.c.h.b16 %v426
        %v1673 = vunpack.c.l.b16 %v427
        %v1674 = vunpack.c.h.b16 %v427
        %v1675 = vunpack.c.l.b16 %v428
        %v1676 = vunpack.c.h.b16 %v428
        %v1677 = vunpack.c.l.b16 %v429
        %v1678 = vunpack.c.h.b16 %v429
        %v1679 = vunpack.c.l.b16 %v430
        %v1680 = vunpack.c.h.b16 %v430
        %v1681 = vunpack.c.l.b16 %v431
        %v1682 = vunpack.c.h.b16 %v431
        %v1683 = vunpack.c.l.b16 %v432
        %v1684 = vunpack.c.h.b16 %v432
        %v1685 = vunpack.c.l.b16 %v433
        %v1686 = vunpack.c.h.b16 %v433
        %v1687 = vunpack.c.l.b16 %v434
        %v1688 = vunpack.c.h.b16 %v434
        %v1689 = vunpack.c.l.b16 %v435
        %v1690 = vunpack.c.h.b16 %v435
        %v1691 = vunpack.c.l.b16 %v436
        %v1692 = vunpack.c.h.b16 %v436
        %v1693 = vunpack.c.l.b16 %v437
        %v1694 = vunpack.c.h.b16 %v437
        %v1695 = vunpack.c.l.b16 %v438
        %v1696 = vunpack.c.h.b16 %v438
        %v1697 = vunpack.c.l.b16 %v439
        %v1698 = vunpack.c.h.b16 %v439
        %v1699 = vunpack.c.l.b16 %v440
        %v1700 = vunpack.c.h.b16 %v440
        %v1701 = vunpack.c.l.b16 %v441
        %v1702 = vunpack.c.h.b16 %v441
        %v1703 = vunpack.c.l.b16 %v442
        %v1704 = vunpack.c.h.b16 %v442
        %v1705 = vunpack.c.l.b16 %v443
        %v1706 = vunpack.c.h.b16 %v443
        %v1707 = vunpack.c.l.b16 %v444
        %v1708 = vunpack.c.h.b16 %v444
        %v1709 = vunpack.c.l.b16 %v445
        %v1710 = vunpack.c.h.b16 %v445
        %v1711 = vunpack.c.l.b16 %v446
        %v1712 = vunpack.c.h.b16 %v446
        %v1713 = vunpack.c.l.b16 %v447
        %v1714 = vunpack.c.h.b16 %v447
        %v1715 = vunpack.c.l.b16 %v448
        %v1716 = vunpack.c.h.b16 %v448
        %v1717 = vunpack.c.l.b16 %v449
        %v1718 = vunpack.c.h.b16 %v449
        %v1719 = vunpack.c.l.b16 %v450
        %v1720 = vunpack.c.h.b16 %v450
        %v1721 = vunpack.c.l.b16 %v451
        %v1722 = vunpack.c.h.b16 %v451
        %v1723 = vunpack.c.l.b16 %v452
        %v1724 = vunpack.c.h.b16 %v452
        %v1725 = vunpack.c.l.b16 %v453
        %v1726 = vunpack.c.h.b16 %v453
        %v1727 = vunpack.c.l.b16 %v454
        %v1728 = vunpack.c.h.b16 %v454
        %v1729 = vunpack.c.l.b16 %v455
        %v1730 = vunpack.c.h.b16 %v455
        %v1731 = vunpack.c.l.b16 %v456
        %v1732 = vunpack.c.h.b16 %v456
        %v1733 = vunpack.c.l.b16 %v457
        %v1734 = vunpack.c.h.b16 %v457
        %v1735 = vunpack.c.l.b16 %v458
        %v1736 = vunpack.c.h.b16 %v458
        %v1737 = vunpack.c.l.b16 %v459
        %v1738 = vunpack.c.h.b16 %v459
        %v1739 = vunpack.c.l.b16 %v460
        %v1740 = vunpack.c.h.b16 %v460
        %v1741 = vunpack.c.l.b16 %v461
        %v1742 = vunpack.c.h.b16 %v461
        %v1743 = vunpack.c.l.b16 %v462
        %v1744 = vunpack.c.h.b16 %v462
        %v1745 = vunpack.c.l.b16 %v463
        %v1746 = vunpack.c.h.b16 %v463
        %v1747 = vunpack.c.l.b16 %v464
        %v1748 = vunpack.c.h.b16 %v464
        %v1749 = vunpack.c.l.b16 %v465
        %v1750 = vunpack.c.h.b16 %v465
        %v1751 = vunpack.c.l.b16 %v466
        %v1752 = vunpack.c.h.b16 %v466
        %v1753 = vunpack.c.l.b16 %v467
        %v1754 = vunpack.c.h.b16 %v467
        %v1755 = vunpack.c.l.b16 %v468
        %v1756 = vunpack.c.h.b16 %v468
        %v1757 = vunpack.c.l.b16 %v469
        %v1758 = vunpack.c.h.b16 %v469
        %v1759 = vunpack.c.l.b16 %v470
        %v1760 = vunpack.c.h.b16 %v470
        %v1761 = vunpack.c.l.b16 %v471
        %v1762 = vunpack.c.h.b16 %v471
        %v1763 = vunpack.c.l.b16 %v472
        %v1764 = vunpack.c.h.b16 %v472
        %v1765 = vunpack.c.l.b16 %v473
        %v1766 = vunpack.c.h.b16 %v473
        %v1767 = vunpack.c.l.b16 %v474
        %v1768 = vunpack.c.h.b16 %v474
        %v1769 = vunpack.c.l.b16 %v475
        %v1770 = vunpack.c.h.b16 %v475
        %v1771 = vunpack.c.l.b16 %v476
        %v1772 = vunpack.c.h.b16 %v476
        %v1773 = vunpack.c.l.b16 %v477
        %v1774 = vunpack.c.h.b16 %v477
        %v1775 = vunpack.c.l.b16 %v478
        %v1776 = vunpack.c.h.b16 %v478
        %v1777 = vunpack.c.l.b16 %v479
        %v1778 = vunpack.c.h.b16 %v479
        %v1779 = vunpack.c.l.b16 %v480
        %v1780 = vunpack.c.h.b16 %v480
        %v1781 = vunpack.c.l.b16 %v481
        %v1782 = vunpack.c.h.b16 %v481
        %v1783 = vunpack.c.l.b16 %v482
        %v1784 = vunpack.c.h.b16 %v482
        %v1785 = vunpack.c.l.b16 %v483
        %v1786 = vunpack.c.h.b16 %v483
        %v1787 = vunpack.c.l.b16 %v484
        %v1788 = vunpack.c.h.b16 %v484
        %v1789 = vunpack.c.l.b16 %v485
        %v1790 = vunpack.c.h.b16 %v485
        %v1791 = vunpack.c.l.b16 %v486
        %v1792 = vunpack.c.h.b16 %v486
        %v1793 = vunpack.c.l.b16 %v487
        %v1794 = vunpack.c.h.b16 %v487
        %v1795 = vunpack.c.l.b16 %v488
        %v1796 = vunpack.c.h.b16 %v488
        %v1797 = vunpack.c.l.b16 %v489
        %v1798 = vunpack.c.h.b16 %v489
        %v1799 = vunpack.c.l.b16 %v490
        %v1800 = vunpack.c.h.b16 %v490
        %v1801 = vunpack.c.l.b16 %v491
        %v1802 = vunpack.c.h.b16 %v491
        %v1803 = vunpack.c.l.b16 %v492
        %v1804 = vunpack.c.h.b16 %v492
        %v1805 = vunpack.c.l.b16 %v493
        %v1806 = vunpack.c.h.b16 %v493
        %v1807 = vunpack.c.l.b16 %v494
        %v1808 = vunpack.c.h.b16 %v494
        %v1809 = vunpack.c.l.b16 %v495
        %v1810 = vunpack.c.h.b16 %v495
        %v1811 = vunpack.c.l.b16 %v496
        %v1812 = vunpack.c.h.b16 %v496
        %v1813 = vunpack.c.l.b16 %v497
        %v1814 = vunpack.c.h.b16 %v497
        %v1815 = vunpack.c.l.b16 %v498
        %v1816 = vunpack.c.h.b16 %v498
        %v1817 = vunpack.c.l.b16 %v499
        %v1818 = vunpack.c.h.b16 %v499
        %v1819 = vunpack.c.l.b16 %v500
        %v1820 = vunpack.c.h.b16 %v500
        %v1821 = vunpack.c.l.b16 %v501
        %v1822 = vunpack.c.h.b16 %v501
        %v1823 = vunpack.c.l.b16 %v502
        %v1824 = vunpack.c.h.b16 %v502
        %v1825 = vunpack.c.l.b16 %v503
        %v1826 = vunpack.c.h.b16 %v503
        %v1827 = vunpack.c.l.b16 %v504
        %v1828 = vunpack.c.h.b16 %v504
        %v1829 = vunpack.c.l.b16 %v505
        %v1830 = vunpack.c.h.b16 %v505
        %v1831 = vunpack.c.l.b16 %v506
        %v1832 = vunpack.c.h.b16 %v506
        %v1833 = vunpack.c.l.b16 %v507
        %v1834 = vunpack.c.h.b16 %v507
        %v1835 = vunpack.c.l.b16 %v508
        %v1836 = vunpack.c.h.b16 %v508
        %v1837 = vunpack.c.l.b16 %v509
        %v1838 = vunpack.c.h.b16 %v509
        %v1839 = vunpack.c.l.b16 %v510
        %v1840 = vunpack.c.h.b16 %v510
        %v1841 = vunpack.c.l.b16 %v511
        %v1842 = vunpack.c.h.b16 %v511
        %v1843 = vunpack.c.l.b16 %v512
        %v1844 = vunpack.c.h.b16 %v512
        %v1845 = vunpack.c.l.b16 %v513
        %v1846 = vunpack.c.h.b16 %v513
        %v1847 = vunpack.c.l.b16 %v514
        %v1848 = vunpack.c.h.b16 %v514
        %v1849 = vunpack.c.l.b16 %v515
        %v1850 = vunpack.c.h.b16 %v515
        %v1851 = vunpack.c.l.b16 %v516
        %v1852 = vunpack.c.h.b16 %v516
        %v1853 = vunpack.c.l.b16 %v517
        %v1854 = vunpack.c.h.b16 %v517
        %v1855 = vunpack.c.l.b16 %v518
        %v1856 = vunpack.c.h.b16 %v518
        %v1857 = vunpack.c.l.b16 %v519
        %v1858 = vunpack.c.h.b16 %v519
        %v1859 = vunpack.c.l.b16 %v520
        %v1860 = vunpack.c.h.b16 %v520
        %v1861 = vunpack.c.l.b16 %v521
        %v1862 = vunpack.c.h.b16 %v521
        %v1863 = vunpack.c.l.b16 %v522
        %v1864 = vunpack.c.h.b16 %v522
        %v1865 = vunpack.c.l.b16 %v523
        %v1866 = vunpack.c.h.b16 %v523
        %v1867 = vunpack.c.l.b16 %v524
        %v1868 = vunpack.c.h.b16 %v524
        %v1869 = vunpack.c.l.b16 %v525
        %v1870 = vunpack.c.h.b16 %v525
        %v1871 = vunpack.c.l.b16 %v526
        %v1872 = vunpack.c.h.b16 %v526
        %v1873 = vunpack.c.l.b16 %v527
        %v1874 = vunpack.c.h.b16 %v527
        %v1875 = vunpack.c.l.b16 %v528
        %v1876 = vunpack.c.h.b16 %v528
        %v1877 = vunpack.c.l.b16 %v529
        %v1878 = vunpack.c.h.b16 %v529
        %v1879 = vunpack.c.l.b16 %v530
        %v1880 = vunpack.c.h.b16 %v530
        %v1881 = vunpack.c.l.b16 %v531
        %v1882 = vunpack.c.h.b16 %v531
        %v1883 = vunpack.c.l.b16 %v532
        %v1884 = vunpack.c.h.b16 %v532
        %v1885 = vunpack.c.l.b16 %v533
        %v1886 = vunpack.c.h.b16 %v533
        %v1887 = vunpack.c.l.b16 %v534
        %v1888 = vunpack.c.h.b16 %v534
        %v1889 = vunpack.c.l.b16 %v535
        %v1890 = vunpack.c.h.b16 %v535
        %v1891 = vunpack.c.l.b16 %v536
        %v1892 = vunpack.c.h.b16 %v536
        %v1893 = vunpack.c.l.b16 %v537
        %v1894 = vunpack.c.h.b16 %v537
        %v1895 = vunpack.c.l.b16 %v538
        %v1896 = vunpack.c.h.b16 %v538
        %v1897 = vunpack.c.l.b16 %v539
        %v1898 = vunpack.c.h.b16 %v539
        %v1899 = vunpack.c.l.b16 %v540
        %v1900 = vunpack.c.h.b16 %v540
        %v1901 = vunpack.c.l.b16 %v541
        %v1902 = vunpack.c.h.b16 %v541
        %v1903 = vunpack.c.l.b16 %v542
        %v1904 = vunpack.c.h.b16 %v542
        %v1905 = vunpack.c.l.b16 %v543
        %v1906 = vunpack.c.h.b16 %v543
        %v1907 = vunpack.c.l.b16 %v544
        %v1908 = vunpack.c.h.b16 %v544
        %v1909 = vunpack.c.l.b16 %v545
        %v1910 = vunpack.c.h.b16 %v545
        %v1911 = vunpack.c.l.b16 %v546
        %v1912 = vunpack.c.h.b16 %v546
        %v1913 = vunpack.c.l.b16 %v547
        %v1914 = vunpack.c.h.b16 %v547
        %v1915 = vunpack.c.l.b16 %v548
        %v1916 = vunpack.c.h.b16 %v548
        %v1917 = vunpack.c.l.b16 %v549
        %v1918 = vunpack.c.h.b16 %v549
        %v1919 = vunpack.c.l.b16 %v550
        %v1920 = vunpack.c.h.b16 %v550
        %v1921 = vunpack.c.l.b16 %v551
        %v1922 = vunpack.c.h.b16 %v551
        %v1923 = vunpack.c.l.b16 %v552
        %v1924 = vunpack.c.h.b16 %v552
        %v1925 = vunpack.c.l.b16 %v553
        %v1926 = vunpack.c.h.b16 %v553
        %v1927 = vunpack.c.l.b16 %v554
        %v1928 = vunpack.c.h.b16 %v554
        %v1929 = vunpack.c.l.b16 %v555
        %v1930 = vunpack.c.h.b16 %v555
        %v1931 = vunpack.c.l.b16 %v556
        %v1932 = vunpack.c.h.b16 %v556
        %v1933 = vunpack.c.l.b16 %v557
        %v1934 = vunpack.c.h.b16 %v557
        %v1935 = vunpack.c.l.b16 %v558
        %v1936 = vunpack.c.h.b16 %v558
        %v1937 = vunpack.c.l.b16 %v559
        %v1938 = vunpack.c.h.b16 %v559
        %v1939 = vunpack.c.l.b16 %v560
        %v1940 = vunpack.c.h.b16 %v560
        %v1941 = vunpack.c.l.b16 %v561
        %v1942 = vunpack.c.h.b16 %v561
        %v1943 = vunpack.c.l.b16 %v562
        %v1944 = vunpack.c.h.b16 %v562
        %v1945 = vunpack.c.l.b16 %v563
        %v1946 = vunpack.c.h.b16 %v563
        %v1947 = vunpack.c.l.b16 %v564
        %v1948 = vunpack.c.h.b16 %v564
        %v1949 = vunpack.c.l.b16 %v565
        %v1950 = vunpack.c.h.b16 %v565
        %v1951 = vunpack.c.l.b16 %v566
        %v1952 = vunpack.c.h.b16 %v566
        %v1953 = vunpack.c.l.b16 %v567
        %v1954 = vunpack.c.h.b16 %v567
        %v1955 = vunpack.c.l.b16 %v568
        %v1956 = vunpack.c.h.b16 %v568
        %v1957 = vunpack.c.l.b16 %v569
        %v1958 = vunpack.c.h.b16 %v569
        %v1959 = vunpack.c.l.b16 %v570
        %v1960 = vunpack.c.h.b16 %v570
        %v1961 = vunpack.c.l.b16 %v571
        %v1962 = vunpack.c.h.b16 %v571
        %v1963 = vunpack.c.l.b16 %v572
        %v1964 = vunpack.c.h.b16 %v572
        %v1965 = vunpack.c.l.b16 %v573
        %v1966 = vunpack.c.h.b16 %v573
        %v1967 = vunpack.c.l.b16 %v574
        %v1968 = vunpack.c.h.b16 %v574
        %v1969 = vunpack.c.l.b16 %v575
        %v1970 = vunpack.c.h.b16 %v575
        %v1971 = vunpack.c.l.b16 %v576
        %v1972 = vunpack.c.h.b16 %v576
        %v1973 = vunpack.c.l.b16 %v577
        %v1974 = vunpack.c.h.b16 %v577
        %v1975 = vunpack.c.l.b16 %v578
        %v1976 = vunpack.c.h.b16 %v578
        %v1977 = vunpack.c.l.b16 %v579
        %v1978 = vunpack.c.h.b16 %v579
        %v1979 = vunpack.c.l.b16 %v580
        %v1980 = vunpack.c.h.b16 %v580
        %v1981 = vunpack.c.l.b16 %v581
        %v1982 = vunpack.c.h.b16 %v581
        %v1983 = vunpack.c.l.b16 %v582
        %v1984 = vunpack.c.h.b16 %v582
        %v1985 = vunpack.c.l.b16 %v583
        %v1986 = vunpack.c.h.b16 %v583
        %v1987 = vunpack.c.l.b16 %v584
        %v1988 = vunpack.c.h.b16 %v584
        %v1989 = vunpack.c.l.b16 %v585
        %v1990 = vunpack.c.h.b16 %v585
        %v1991 = vunpack.c.l.b16 %v586
        %v1992 = vunpack.c.h.b16 %v586
        %v1993 = vunpack.c.l.b16 %v587
        %v1994 = vunpack.c.h.b16 %v587
        %v1995 = vunpack.c.l.b16 %v588
        %v1996 = vunpack.c.h.b16 %v588
        %v1997 = vunpack.c.l.b16 %v589
        %v1998 = vunpack.c.h.b16 %v589
        %v1999 = vunpack.c.l.b16 %v590
        %v2000 = vunpack.c.h.b16 %v590
        %v2001 = vunpack.c.l.b16 %v591
        %v2002 = vunpack.c.h.b16 %v591
        %v2003 = vunpack.c.l.b16 %v592
        %v2004 = vunpack.c.h.b16 %v592
        %v2005 = vunpack.c.l.b16 %v593
        %v2006 = vunpack.c.h.b16 %v593
        %v2007 = vunpack.c.l.b16 %v594
        %v2008 = vunpack.c.h.b16 %v594
        %v2009 = vunpack.c.l.b16 %v595
        %v2010 = vunpack.c.h.b16 %v595
        %v2011 = vunpack.c.l.b16 %v596
        %v2012 = vunpack.c.h.b16 %v596
        %v2013 = vunpack.c.l.b16 %v597
        %v2014 = vunpack.c.h.b16 %v597
        %v2015 = vunpack.c.l.b16 %v598
        %v2016 = vunpack.c.h.b16 %v598
        %v2017 = vunpack.c.l.b16 %v599
        %v2018 = vunpack.c.h.b16 %v599
        %v2019 = vunpack.c.l.b16 %v600
        %v2020 = vunpack.c.h.b16 %v600
        %v2021 = vunpack.c.l.b16 %v601
        %v2022 = vunpack.c.h.b16 %v601
        %v2023 = vunpack.c.l.b16 %v602
        %v2024 = vunpack.c.h.b16 %v602
        %v2025 = vunpack.c.l.b16 %v603
        %v2026 = vunpack.c.h.b16 %v603
        %v2027 = vunpack.c.l.b16 %v604
        %v2028 = vunpack.c.h.b16 %v604
        %v2029 = vunpack.c.l.b16 %v605
        %v2030 = vunpack.c.h.b16 %v605
        %v2031 = vunpack.c.l.b16 %v606
        %v2032 = vunpack.c.h.b16 %v606
        %v2033 = vunpack.c.l.b16 %v607
        %v2034 = vunpack.c.h.b16 %v607
        %v2035 = vunpack.c.l.b16 %v608
        %v2036 = vunpack.c.h.b16 %v608
        %v2037 = vunpack.c.l.b16 %v609
        %v2038 = vunpack.c.h.b16 %v609
        %v2039 = vunpack.c.l.b16 %v610
        %v2040 = vunpack.c.h.b16 %v610
        %v2041 = vunpack.c.l.b16 %v611
        %v2042 = vunpack.c.h.b16 %v611
        %v2043 = vunpack.c.l.b16 %v612
        %v2044 = vunpack.c.h.b16 %v612
        %v2045 = vunpack.c.l.b16 %v613
        %v2046 = vunpack.c.h.b16 %v613
        %v2047 = vunpack.c.l.b16 %v614
        %v2048 = vunpack.c.h.b16 %v614
        %v2049 = vunpack.c.l.b16 %v615
        %v2050 = vunpack.c.h.b16 %v615
        %v2051 = vunpack.c.l.b16 %v616
        %v2052 = vunpack.c.h.b16 %v616
        %v2053 = vunpack.c.l.b16 %v617
        %v2054 = vunpack.c.h.b16 %v617
        %v2055 = vunpack.c.l.b16 %v618
        %v2056 = vunpack.c.h.b16 %v618
        %v2057 = vunpack.c.l.b16 %v619
        %v2058 = vunpack.c.h.b16 %v619
        %v2059 = vunpack.c.l.b16 %v620
        %v2060 = vunpack.c.h.b16 %v620
        %v2061 = vunpack.c.l.b16 %v621
        %v2062 = vunpack.c.h.b16 %v621
        %v2063 = vunpack.c.l.b16 %v622
        %v2064 = vunpack.c.h.b16 %v622
        %v2065 = vunpack.c.l.b16 %v623
        %v2066 = vunpack.c.h.b16 %v623
        %v2067 = vunpack.c.l.b16 %v624
        %v2068 = vunpack.c.h.b16 %v624
        %v2069 = vunpack.c.l.b16 %v625
        %v2070 = vunpack.c.h.b16 %v625
        %v2071 = vunpack.c.l.b16 %v626
        %v2072 = vunpack.c.h.b16 %v626
        %v2073 = vunpack.c.l.b16 %v627
        %v2074 = vunpack.c.h.b16 %v627
        %v2075 = vunpack.c.l.b16 %v628
        %v2076 = vunpack.c.h.b16 %v628
        %v2077 = vunpack.c.l.b16 %v629
        %v2078 = vunpack.c.h.b16 %v629
        %v2079 = vunpack.c.l.b16 %v630
        %v2080 = vunpack.c.h.b16 %v630
        %v2081 = vunpack.c.l.b16 %v631
        %v2082 = vunpack.c.h.b16 %v631
        %v2083 = vunpack.c.l.b16 %v632
        %v2084 = vunpack.c.h.b16 %v632
        %v2085 = vunpack.c.l.b16 %v633
        %v2086 = vunpack.c.h.b16 %v633
        %v2087 = vunpack.c.l.b16 %v634
        %v2088 = vunpack.c.h.b16 %v634
        %v2089 = vunpack.c.l.b16 %v635
        %v2090 = vunpack.c.h.b16 %v635
        %v2091 = vunpack.c.l.b16 %v636
        %v2092 = vunpack.c.h.b16 %v636
        %v2093 = vunpack.c.l.b16 %v637
        %v2094 = vunpack.c.h.b16 %v637
        %v2095 = vunpack.c.l.b16 %v638
        %v2096 = vunpack.c.h.b16 %v638
        %v2097 = vunpack.c.l.b16 %v639
        %v2098 = vunpack.c.h.b16 %v639
        %v2099 = vunpack.c.l.b16 %v640
        %v2100 = vunpack.c.h.b16 %v640
        %v2101 = vunpack.c.l.b16 %v641
        %v2102 = vunpack.c.h.b16 %v641
        %v2103 = vunpack.c.l.b16 %v642
        %v2104 = vunpack.c.h.b16 %v642
        %v2105 = vunpack.c.l.b16 %v643
        %v2106 = vunpack.c.h.b16 %v643
        %v2107 = vunpack.c.l.b16 %v644
        %v2108 = vunpack.c.h.b16 %v644
        %v2109 = vunpack.c.l.b16 %v645
        %v2110 = vunpack.c.h.b16 %v645
        %v2111 = vunpack.c.l.b16 %v646
        %v2112 = vunpack.c.h.b16 %v646
        %v2113 = vunpack.c.l.b16 %v647
        %v2114 = vunpack.c.h.b16 %v647
        %v2115 = vunpack.c.l.b16 %v648
        %v2116 = vunpack.c.h.b16 %v648
        %v2117 = vunpack.c.l.b16 %v649
        %v2118 = vunpack.c.h.b16 %v649
        %v2119 = vunpack.c.l.b16 %v650
        %v2120 = vunpack.c.h.b16 %v650
        %v2121 = vunpack.c.l.b16 %v651
        %v2122 = vunpack.c.h.b16 %v651
        %v2123 = vunpack.c.l.b16 %v652
        %v2124 = vunpack.c.h.b16 %v652
        %v2125 = vunpack.c.l.b16 %v653
        %v2126 = vunpack.c.h.b16 %v653
        %v2127 = vunpack.c.l.b16 %v654
        %v2128 = vunpack.c.h.b16 %v654
        %v2129 = vunpack.c.l.b16 %v655
        %v2130 = vunpack.c.h.b16 %v655
        %v2131 = vunpack.c.l.b16 %v656
        %v2132 = vunpack.c.h.b16 %v656
        %v2133 = vunpack.c.l.b16 %v657
        %v2134 = vunpack.c.h.b16 %v657
        %v2135 = vunpack.c.l.b16 %v658
        %v2136 = vunpack.c.h.b16 %v658
        %v2137 = vunpack.c.l.b16 %v659
        %v2138 = vunpack.c.h.b16 %v659
        %v2139 = vunpack.c.l.b16 %v660
        %v2140 = vunpack.c.h.b16 %v660
        %v2141 = vunpack.c.l.b16 %v661
        %v2142 = vunpack.c.h.b16 %v661
        %v2143 = vunpack.c.l.b16 %v662
        %v2144 = vunpack.c.h.b16 %v662
        %v2145 = vunpack.c.l.b16 %v663
        %v2146 = vunpack.c.h.b16 %v663
        %v2147 = vunpack.c.l.b16 %v664
        %v2148 = vunpack.c.h.b16 %v664
        %v2149 = vunpack.c.l.b16 %v665
        %v2150 = vunpack.c.h.b16 %v665
        %v2151 = vunpack.c.l.b16 %v666
        %v2152 = vunpack.c.h.b16 %v666
        %v2153 = vunpack.c.l.b16 %v667
        %v2154 = vunpack.c.h.b16 %v667
        %v2155 = vunpack.c.l.b16 %v668
        %v2156 = vunpack.c.h.b16 %v668
        %v2157 = vunpack.c.l.b16 %v669
        %v2158 = vunpack.c.h.b16 %v669
        %v2159 = vunpack.c.l.b16 %v670
        %v2160 = vunpack.c.h.b16 %v670
        %v2161 = vunpack.c.l.b16 %v671
        %v2162 = vunpack.c.h.b16 %v671
        %v2163 = vunpack.c.l.b16 %v672
        %v2164 = vunpack.c.h.b16 %v672
        %v2165 = vunpack.c.l.b16 %v673
        %v2166 = vunpack.c.h.b16 %v673
        %v2167 = vunpack.c.l.b16 %v674
        %v2168 = vunpack.c.h.b16 %v674
        %v2169 = vunpack.c.l.b16 %v675
        %v2170 = vunpack.c.h.b16 %v675
        %v2171 = vunpack.c.l.b16 %v676
        %v2172 = vunpack.c.h.b16 %v676
        %v2173 = vunpack.c.l.b16 %v677
        %v2174 = vunpack.c.h.b16 %v677
        %v2175 = vunpack.c.l.b16 %v678
        %v2176 = vunpack.c.h.b16 %v678
        %v2177 = vunpack.c.l.b16 %v679
        %v2178 = vunpack.c.h.b16 %v679
        %v2179 = vunpack.c.l.b16 %v680
        %v2180 = vunpack.c.h.b16 %v680
        %v2181 = vunpack.c.l.b16 %v681
        %v2182 = vunpack.c.h.b16 %v681
        %v2183 = vunpack.c.l.b16 %v682
        %v2184 = vunpack.c.h.b16 %v682
        %v2185 = vunpack.c.l.b16 %v683
        %v2186 = vunpack.c.h.b16 %v683
        %v2187 = vunpack.c.l.b16 %v684
        %v2188 = vunpack.c.h.b16 %v684
        %v2189 = vunpack.c.l.b16 %v685
        %v2190 = vunpack.c.h.b16 %v685
        %v2191 = vunpack.c.l.b16 %v686
        %v2192 = vunpack.c.h.b16 %v686
        %v2193 = vunpack.c.l.b16 %v687
        %v2194 = vunpack.c.h.b16 %v687
        %v2195 = vunpack.c.l.b16 %v688
        %v2196 = vunpack.c.h.b16 %v688
        %v2197 = vunpack.c.l.b16 %v689
        %v2198 = vunpack.c.h.b16 %v689
        %v2199 = vunpack.c.l.b16 %v690
        %v2200 = vunpack.c.h.b16 %v690
        %v2201 = vunpack.c.l.b16 %v691
        %v2202 = vunpack.c.h.b16 %v691
        %v2203 = vunpack.c.l.b16 %v692
        %v2204 = vunpack.c.h.b16 %v692
        %v2205 = vunpack.c.l.b16 %v693
        %v2206 = vunpack.c.h.b16 %v693
        %v2207 = vunpack.c.l.b16 %v694
        %v2208 = vunpack.c.h.b16 %v694
        %v2209 = vunpack.c.l.b16 %v695
        %v2210 = vunpack.c.h.b16 %v695
        %v2211 = vunpack.c.l.b16 %v696
        %v2212 = vunpack.c.h.b16 %v696
        %v2213 = vunpack.c.l.b16 %v697
        %v2214 = vunpack.c.h.b16 %v697
        %v2215 = vunpack.c.l.b16 %v698
        %v2216 = vunpack.c.h.b16 %v698
        %v2217 = vunpack.c.l.b16 %v699
        %v2218 = vunpack.c.h.b16 %v699
        %v2219 = vunpack.c.l.b16 %v700
        %v2220 = vunpack.c.h.b16 %v700
        %v2221 = vunpack.c.l.b16 %v701
        %v2222 = vunpack.c.h.b16 %v701
        %v2223 = vunpack.c.l.b16 %v702
        %v2224 = vunpack.c.h.b16 %v702
        %v2225 = vunpack.c.l.b16 %v703
        %v2226 = vunpack.c.h.b16 %v703
        %v2227 = vunpack.c.l.b16 %v704
        %v2228 = vunpack.c.h.b16 %v704
        %v2229 = vunpack.c.l.b16 %v705
        %v2230 = vunpack.c.h.b16 %v705
        %v2231 = vunpack.c.l.b16 %v706
        %v2232 = vunpack.c.h.b16 %v706
        %v2233 = vunpack.c.l.b16 %v707
        %v2234 = vunpack.c.h.b16 %v707
        %v2235 = vunpack.c.l.b16 %v708
        %v2236 = vunpack.c.h.b16 %v708
        %v2237 = vunpack.c.l.b16 %v709
        %v2238 = vunpack.c.h.b16 %v709
        %v2239 = vunpack.c.l.b16 %v710
        %v2240 = vunpack.c.h.b16 %v710
        %v2241 = vunpack.c.l.b16 %v711
        %v2242 = vunpack.c.h.b16 %v711
        %v2243 = vunpack.c.l.b16 %v712
        %v2244 = vunpack.c.h.b16 %v712
        %v2245 = vunpack.c.l.b16 %v713
        %v2246 = vunpack.c.h.b16 %v713
        %v2247 = vunpack.c.l.b16 %v714
        %v2248 = vunpack.c.h.b16 %v714
        %v2249 = vunpack.c.l.b16 %v715
        %v2250 = vunpack.c.h.b16 %v715
        %v2251 = vunpack.c.l.b16 %v716
        %v2252 = vunpack.c.h.b16 %v716
        %v2253 = vunpack.c.l.b16 %v717
        %v2254 = vunpack.c.h.b16 %v717
        %v2255 = vunpack.c.l.b16 %v718
        %v2256 = vunpack.c.h.b16 %v718
        %v2257 = vunpack.c.l.b16 %v719
        %v2258 = vunpack.c.h.b16 %v719
        %v2259 = vunpack.c.l.b16 %v720
        %v2260 = vunpack.c.h.b16 %v720
        %v2261 = vunpack.c.l.b16 %v721
        %v2262 = vunpack.c.h.b16 %v721
        %v2263 = vunpack.c.l.b16 %v722
        %v2264 = vunpack.c.h.b16 %v722
        %v2265 = vunpack.c.l.b16 %v723
        %v2266 = vunpack.c.h.b16 %v723
        %v2267 = vunpack.c.l.b16 %v724
        %v2268 = vunpack.c.h.b16 %v724
        %v2269 = vunpack.c.l.b16 %v725
        %v2270 = vunpack.c.h.b16 %v725
        %v2271 = vunpack.c.l.b16 %v726
        %v2272 = vunpack.c.h.b16 %v726
        %v2273 = vunpack.c.l.b16 %v727
        %v2274 = vunpack.c.h.b16 %v727
        %v2275 = vunpack.c.l.b16 %v728
        %v2276 = vunpack.c.h.b16 %v728
        %v2277 = vunpack.c.l.b16 %v729
        %v2278 = vunpack.c.h.b16 %v729
        %v2279 = vunpack.c.l.b16 %v730
        %v2280 = vunpack.c.h.b16 %v730
        %v2281 = vunpack.c.l.b16 %v731
        %v2282 = vunpack.c.h.b16 %v731
        %v2283 = vunpack.c.l.b16 %v732
        %v2284 = vunpack.c.h.b16 %v732
        %v2285 = vunpack.c.l.b16 %v733
        %v2286 = vunpack.c.h.b16 %v733
        %v2287 = vunpack.c.l.b16 %v734
        %v2288 = vunpack.c.h.b16 %v734
        %v2289 = vunpack.c.l.b16 %v735
        %v2290 = vunpack.c.h.b16 %v735
        %v2291 = vunpack.c.l.b16 %v736
        %v2292 = vunpack.c.h.b16 %v736
        %v2293 = vunpack.c.l.b16 %v737
        %v2294 = vunpack.c.h.b16 %v737
        %v2295 = vunpack.c.l.b16 %v738
        %v2296 = vunpack.c.h.b16 %v738
        %v2297 = vunpack.c.l.b16 %v739
        %v2298 = vunpack.c.h.b16 %v739
        %v2299 = vunpack.c.l.b16 %v740
        %v2300 = vunpack.c.h.b16 %v740
        %v2301 = vunpack.c.l.b16 %v741
        %v2302 = vunpack.c.h.b16 %v741
        %v2303 = vunpack.c.l.b16 %v742
        %v2304 = vunpack.c.h.b16 %v742
        %v2305 = vunpack.c.l.b16 %v743
        %v2306 = vunpack.c.h.b16 %v743
        %v2307 = vunpack.c.l.b16 %v744
        %v2308 = vunpack.c.h.b16 %v744
        %v2309 = vunpack.c.l.b16 %v745
        %v2310 = vunpack.c.h.b16 %v745
        %v2311 = vunpack.c.l.b16 %v746
        %v2312 = vunpack.c.h.b16 %v746
        %v2313 = vunpack.c.l.b16 %v747
        %v2314 = vunpack.c.h.b16 %v747
        %v2315 = vunpack.c.l.b16 %v748
        %v2316 = vunpack.c.h.b16 %v748
        %v2317 = vunpack.c.l.b16 %v749
        %v2318 = vunpack.c.h.b16 %v749
        %v2319 = vunpack.c.l.b16 %v750
        %v2320 = vunpack.c.h.b16 %v750
        %v2321 = vunpack.c.l.b16 %v751
        %v2322 = vunpack.c.h.b16 %v751
        %v2323 = vunpack.c.l.b16 %v752
        %v2324 = vunpack.c.h.b16 %v752
        %v2325 = vunpack.c.l.b16 %v753
        %v2326 = vunpack.c.h.b16 %v753
        %v2327 = vunpack.c.l.b16 %v754
        %v2328 = vunpack.c.h.b16 %v754
        %v2329 = vunpack.c.l.b16 %v755
        %v2330 = vunpack.c.h.b16 %v755
        %v2331 = vunpack.c.l.b16 %v756
        %v2332 = vunpack.c.h.b16 %v756
        %v2333 = vunpack.c.l.b16 %v757
        %v2334 = vunpack.c.h.b16 %v757
        %v2335 = vunpack.c.l.b16 %v758
        %v2336 = vunpack.c.h.b16 %v758
        %v2337 = vunpack.c.l.b16 %v759
        %v2338 = vunpack.c.h.b16 %v759
        %v2339 = vunpack.c.l.b16 %v760
        %v2340 = vunpack.c.h.b16 %v760
        %v2341 = vunpack.c.l.b16 %v761
        %v2342 = vunpack.c.h.b16 %v761
        %v2343 = vunpack.c.l.b16 %v762
        %v2344 = vunpack.c.h.b16 %v762
        %v2345 = vunpack.c.l.b16 %v763
        %v2346 = vunpack.c.h.b16 %v763
        %v2347 = vunpack.c.l.b16 %v764
        %v2348 = vunpack.c.h.b16 %v764
        %v2349 = vunpack.c.l.b16 %v765
        %v2350 = vunpack.c.h.b16 %v765
        %v2351 = vunpack.c.l.b16 %v766
        %v2352 = vunpack.c.h.b16 %v766
        %v2353 = vunpack.c.l.b16 %v767
        %v2354 = vunpack.c.h.b16 %v767
        %v2355 = vunpack.c.l.b16 %v768
        %v2356 = vunpack.c.h.b16 %v768
        %v2357 = vunpack.c.l.b16 %v769
        %v2358 = vunpack.c.h.b16 %v769
        %v2359 = vunpack.c.l.b16 %v770
        %v2360 = vunpack.c.h.b16 %v770
        %v2361 = vunpack.c.l.b16 %v771
        %v2362 = vunpack.c.h.b16 %v771
        %v2363 = vunpack.c.l.b16 %v772
        %v2364 = vunpack.c.h.b16 %v772
        %v2365 = vunpack.c.l.b16 %v773
        %v2366 = vunpack.c.h.b16 %v773
        %v2367 = vunpack.c.l.b16 %v774
        %v2368 = vunpack.c.h.b16 %v774
        %v2369 = vunpack.c.l.b16 %v775
        %v2370 = vunpack.c.h.b16 %v775
        %v2371 = vunpack.c.l.b16 %v776
        %v2372 = vunpack.c.h.b16 %v776
        %v2373 = vunpack.c.l.b16 %v777
        %v2374 = vunpack.c.h.b16 %v777
        %v2375 = vunpack.c.l.b16 %v778
        %v2376 = vunpack.c.h.b16 %v778
        %v2377 = vunpack.c.l.b16 %v779
        %v2378 = vunpack.c.h.b16 %v779
        %v2379 = vunpack.c.l.b16 %v780
        %v2380 = vunpack.c.h.b16 %v780
        %v2381 = vunpack.c.l.b16 %v781
        %v2382 = vunpack.c.h.b16 %v781
        %v2383 = vunpack.c.l.b16 %v782
        %v2384 = vunpack.c.h.b16 %v782
        %v2385 = vunpack.c.l.b16 %v783
        %v2386 = vunpack.c.h.b16 %v783
        %v2387 = vunpack.c.l.b16 %v784
        %v2388 = vunpack.c.h.b16 %v784
        %v2389 = vunpack.c.l.b16 %v785
        %v2390 = vunpack.c.h.b16 %v785
        %v2391 = vunpack.c.l.b16 %v786
        %v2392 = vunpack.c.h.b16 %v786
        %v2393 = vunpack.c.l.b16 %v787
        %v2394 = vunpack.c.h.b16 %v787
        %v2395 = vunpack.c.l.b16 %v788
        %v2396 = vunpack.c.h.b16 %v788
        %v2397 = vunpack.c.l.b16 %v789
        %v2398 = vunpack.c.h.b16 %v789
        %v2399 = vunpack.c.l.b16 %v790
        %v2400 = vunpack.c.h.b16 %v790
        %v2401 = vunpack.c.l.b16 %v791
        %v2402 = vunpack.c.h.b16 %v791
        %v2403 = vunpack.c.l.b16 %v792
        %v2404 = vunpack.c.h.b16 %v792
        %v2405 = vunpack.c.l.b16 %v793
        %v2406 = vunpack.c.h.b16 %v793
        %v2407 = vunpack.c.l.b16 %v794
        %v2408 = vunpack.c.h.b16 %v794
        %v2409 = vunpack.c.l.b16 %v795
        %v2410 = vunpack.c.h.b16 %v795
        %v2411 = vunpack.c.l.b16 %v796
        %v2412 = vunpack.c.h.b16 %v796
        %v2413 = vunpack.c.l.b16 %v797
        %v2414 = vunpack.c.h.b16 %v797
        %v2415 = vunpack.c.l.b16 %v798
        %v2416 = vunpack.c.h.b16 %v798
        %v2417 = vunpack.c.l.b16 %v799
        %v2418 = vunpack.c.h.b16 %v799
        %v2419 = vunpack.c.l.b16 %v800
        %v2420 = vunpack.c.h.b16 %v800
        %v2421 = vpack.c.b16 %v1413, %v1397
        %v2422 = vpack.c.b16 %v1414, %v1398
        %v2423 = vpack.c.b16 %v1415, %v1399
        %v2424 = vpack.c.b16 %v1416, %v1400
        %v2425 = vpack.c.b16 %v1417, %v1401
        %v2426 = vpack.c.b16 %v1418, %v1402
        %v2427 = vpack.c.b16 %v1419, %v1403
        %v2428 = vpack.c.b16 %v1420, %v1404
        %v2429 = vpack.c.b16 %v1421, %v1405
        %v2430 = vpack.c.b16 %v1422, %v1406
        %v2431 = vpack.c.b16 %v1423, %v1407
        %v2432 = vpack.c.b16 %v1424, %v1408
        %v2433 = vpack.c.b16 %v1425, %v1409
        %v2434 = vpack.c.b16 %v1426, %v1410
        %v2435 = vpack.c.b16 %v1427, %v1411
        %v2436 = vpack.c.b16 %v1428, %v1412
        %v2437 = vpack.c.b16 %v1445, %v1429
        %v2438 = vpack.c.b16 %v1446, %v1430
        %v2439 = vpack.c.b16 %v1447, %v1431
        %v2440 = vpack.c.b16 %v1448, %v1432
        %v2441 = vpack.c.b16 %v1449, %v1433
        %v2442 = vpack.c.b16 %v1450, %v1434
        %v2443 = vpack.c.b16 %v1451, %v1435
        %v2444 = vpack.c.b16 %v1452, %v1436
        %v2445 = vpack.c.b16 %v1453, %v1437
        %v2446 = vpack.c.b16 %v1454, %v1438
        %v2447 = vpack.c.b16 %v1455, %v1439
        %v2448 = vpack.c.b16 %v1456, %v1440
        %v2449 = vpack.c.b16 %v1457, %v1441
        %v2450 = vpack.c.b16 %v1458, %v1442
        %v2451 = vpack.c.b16 %v1459, %v1443
        %v2452 = vpack.c.b16 %v1460, %v1444
        %v2453 = vpack.c.b16 %v1477, %v1461
        %v2454 = vpack.c.b16 %v1478, %v1462
        %v2455 = vpack.c.b16 %v1479, %v1463
        %v2456 = vpack.c.b16 %v1480, %v1464
        %v2457 = vpack.c.b16 %v1481, %v1465
        %v2458 = vpack.c.b16 %v1482, %v1466
        %v2459 = vpack.c.b16 %v1483, %v1467
        %v2460 = vpack.c.b16 %v1484, %v1468
        %v2461 = vpack.c.b16 %v1485, %v1469
        %v2462 = vpack.c.b16 %v1486, %v1470
        %v2463 = vpack.c.b16 %v1487, %v1471
        %v2464 = vpack.c.b16 %v1488, %v1472
        %v2465 = vpack.c.b16 %v1489, %v1473
        %v2466 = vpack.c.b16 %v1490, %v1474
        %v2467 = vpack.c.b16 %v1491, %v1475
        %v2468 = vpack.c.b16 %v1492, %v1476
        %v2469 = vpack.c.b16 %v1509, %v1493
        %v2470 = vpack.c.b16 %v1510, %v1494
        %v2471 = vpack.c.b16 %v1511, %v1495
        %v2472 = vpack.c.b16 %v1512, %v1496
        %v2473 = vpack.c.b16 %v1513, %v1497
        %v2474 = vpack.c.b16 %v1514, %v1498
        %v2475 = vpack.c.b16 %v1515, %v1499
        %v2476 = vpack.c.b16 %v1516, %v1500
        %v2477 = vpack.c.b16 %v1517, %v1501
        %v2478 = vpack.c.b16 %v1518, %v1502
        %v2479 = vpack.c.b16 %v1519, %v1503
        %v2480 = vpack.c.b16 %v1520, %v1504
        %v2481 = vpack.c.b16 %v1521, %v1505
        %v2482 = vpack.c.b16 %v1522, %v1506
        %v2483 = vpack.c.b16 %v1523, %v1507
        %v2484 = vpack.c.b16 %v1524, %v1508
        %v2485 = vpack.c.b16 %v1541, %v1525
        %v2486 = vpack.c.b16 %v1542, %v1526
        %v2487 = vpack.c.b16 %v1543, %v1527
        %v2488 = vpack.c.b16 %v1544, %v1528
        %v2489 = vpack.c.b16 %v1545, %v1529
        %v2490 = vpack.c.b16 %v1546, %v1530
        %v2491 = vpack.c.b16 %v1547, %v1531
        %v2492 = vpack.c.b16 %v1548, %v1532
        %v2493 = vpack.c.b16 %v1549, %v1533
        %v2494 = vpack.c.b16 %v1550, %v1534
        %v2495 = vpack.c.b16 %v1551, %v1535
        %v2496 = vpack.c.b16 %v1552, %v1536
        %v2497 = vpack.c.b16 %v1553, %v1537
        %v2498 = vpack.c.b16 %v1554, %v1538
        %v2499 = vpack.c.b16 %v1555, %v1539
        %v2500 = vpack.c.b16 %v1556, %v1540
        %v2501 = vpack.c.b16 %v1573, %v1557
        %v2502 = vpack.c.b16 %v1574, %v1558
        %v2503 = vpack.c.b16 %v1575, %v1559
        %v2504 = vpack.c.b16 %v1576, %v1560
        %v2505 = vpack.c.b16 %v1577, %v1561
        %v2506 = vpack.c.b16 %v1578, %v1562
        %v2507 = vpack.c.b16 %v1579, %v1563
        %v2508 = vpack.c.b16 %v1580, %v1564
        %v2509 = vpack.c.b16 %v1581, %v1565
        %v2510 = vpack.c.b16 %v1582, %v1566
        %v2511 = vpack.c.b16 %v1583, %v1567
        %v2512 = vpack.c.b16 %v1584, %v1568
        %v2513 = vpack.c.b16 %v1585, %v1569
        %v2514 = vpack.c.b16 %v1586, %v1570
        %v2515 = vpack.c.b16 %v1587, %v1571
        %v2516 = vpack.c.b16 %v1588, %v1572
        %v2517 = vpack.c.b16 %v1605, %v1589
        %v2518 = vpack.c.b16 %v1606, %v1590
        %v2519 = vpack.c.b16 %v1607, %v1591
        %v2520 = vpack.c.b16 %v1608, %v1592
        %v2521 = vpack.c.b16 %v1609, %v1593
        %v2522 = vpack.c.b16 %v1610, %v1594
        %v2523 = vpack.c.b16 %v1611, %v1595
        %v2524 = vpack.c.b16 %v1612, %v1596
        %v2525 = vpack.c.b16 %v1613, %v1597
        %v2526 = vpack.c.b16 %v1614, %v1598
        %v2527 = vpack.c.b16 %v1615, %v1599
        %v2528 = vpack.c.b16 %v1616, %v1600
        %v2529 = vpack.c.b16 %v1617, %v1601
        %v2530 = vpack.c.b16 %v1618, %v1602
        %v2531 = vpack.c.b16 %v1619, %v1603
        %v2532 = vpack.c.b16 %v1620, %v1604
        %v2533 = vpack.c.b16 %v1637, %v1621
        %v2534 = vpack.c.b16 %v1638, %v1622
        %v2535 = vpack.c.b16 %v1639, %v1623
        %v2536 = vpack.c.b16 %v1640, %v1624
        %v2537 = vpack.c.b16 %v1641, %v1625
        %v2538 = vpack.c.b16 %v1642, %v1626
        %v2539 = vpack.c.b16 %v1643, %v1627
        %v2540 = vpack.c.b16 %v1644, %v1628
        %v2541 = vpack.c.b16 %v1645, %v1629
        %v2542 = vpack.c.b16 %v1646, %v1630
        %v2543 = vpack.c.b16 %v1647, %v1631
        %v2544 = vpack.c.b16 %v1648, %v1632
        %v2545 = vpack.c.b16 %v1649, %v1633
        %v2546 = vpack.c.b16 %v1650, %v1634
        %v2547 = vpack.c.b16 %v1651, %v1635
        %v2548 = vpack.c.b16 %v1652, %v1636
        %v2549 = vpack.c.b16 %v1669, %v1653
        %v2550 = vpack.c.b16 %v1670, %v1654
        %v2551 = vpack.c.b16 %v1671, %v1655
        %v2552 = vpack.c.b16 %v1672, %v1656
        %v2553 = vpack.c.b16 %v1673, %v1657
        %v2554 = vpack.c.b16 %v1674, %v1658
        %v2555 = vpack.c.b16 %v1675, %v1659
        %v2556 = vpack.c.b16 %v1676, %v1660
        %v2557 = vpack.c.b16 %v1677, %v1661
        %v2558 = vpack.c.b16 %v1678, %v1662
        %v2559 = vpack.c.b16 %v1679, %v1663
        %v2560 = vpack.c.b16 %v1680, %v1664
        %v2561 = vpack.c.b16 %v1681, %v1665
        %v2562 = vpack.c.b16 %v1682, %v1666
        %v2563 = vpack.c.b16 %v1683, %v1667
        %v2564 = vpack.c.b16 %v1684, %v1668
        %v2565 = vpack.c.b16 %v1701, %v1685
        %v2566 = vpack.c.b16 %v1702, %v1686
        %v2567 = vpack.c.b16 %v1703, %v1687
        %v2568 = vpack.c.b16 %v1704, %v1688
        %v2569 = vpack.c.b16 %v1705, %v1689
        %v2570 = vpack.c.b16 %v1706, %v1690
        %v2571 = vpack.c.b16 %v1707, %v1691
        %v2572 = vpack.c.b16 %v1708, %v1692
        %v2573 = vpack.c.b16 %v1709, %v1693
        %v2574 = vpack.c.b16 %v1710, %v1694
        %v2575 = vpack.c.b16 %v1711, %v1695
        %v2576 = vpack.c.b16 %v1712, %v1696
        %v2577 = vpack.c.b16 %v1713, %v1697
        %v2578 = vpack.c.b16 %v1714, %v1698
        %v2579 = vpack.c.b16 %v1715, %v1699
        %v2580 = vpack.c.b16 %v1716, %v1700
        %v2581 = vpack.c.b16 %v1733, %v1717
        %v2582 = vpack.c.b16 %v1734, %v1718
        %v2583 = vpack.c.b16 %v1735, %v1719
        %v2584 = vpack.c.b16 %v1736, %v1720
        %v2585 = vpack.c.b16 %v1737, %v1721
        %v2586 = vpack.c.b16 %v1738, %v1722
        %v2587 = vpack.c.b16 %v1739, %v1723
        %v2588 = vpack.c.b16 %v1740, %v1724
        %v2589 = vpack.c.b16 %v1741, %v1725
        %v2590 = vpack.c.b16 %v1742, %v1726
        %v2591 = vpack.c.b16 %v1743, %v1727
        %v2592 = vpack.c.b16 %v1744, %v1728
        %v2593 = vpack.c.b16 %v1745, %v1729
        %v2594 = vpack.c.b16 %v1746, %v1730
        %v2595 = vpack.c.b16 %v1747, %v1731
        %v2596 = vpack.c.b16 %v1748, %v1732
        %v2597 = vpack.c.b16 %v1765, %v1749
        %v2598 = vpack.c.b16 %v1766, %v1750
        %v2599 = vpack.c.b16 %v1767, %v1751
        %v2600 = vpack.c.b16 %v1768, %v1752
        %v2601 = vpack.c.b16 %v1769, %v1753
        %v2602 = vpack.c.b16 %v1770, %v1754
        %v2603 = vpack.c.b16 %v1771, %v1755
        %v2604 = vpack.c.b16 %v1772, %v1756
        %v2605 = vpack.c.b16 %v1773, %v1757
        %v2606 = vpack.c.b16 %v1774, %v1758
        %v2607 = vpack.c.b16 %v1775, %v1759
        %v2608 = vpack.c.b16 %v1776, %v1760
        %v2609 = vpack.c.b16 %v1777, %v1761
        %v2610 = vpack.c.b16 %v1778, %v1762
        %v2611 = vpack.c.b16 %v1779, %v1763
        %v2612 = vpack.c.b16 %v1780, %v1764
        %v2613 = vpack.c.b16 %v1797, %v1781
        %v2614 = vpack.c.b16 %v1798, %v1782
        %v2615 = vpack.c.b16 %v1799, %v1783
        %v2616 = vpack.c.b16 %v1800, %v1784
        %v2617 = vpack.c.b16 %v1801, %v1785
        %v2618 = vpack.c.b16 %v1802, %v1786
        %v2619 = vpack.c.b16 %v1803, %v1787
        %v2620 = vpack.c.b16 %v1804, %v1788
        %v2621 = vpack.c.b16 %v1805, %v1789
        %v2622 = vpack.c.b16 %v1806, %v1790
        %v2623 = vpack.c.b16 %v1807, %v1791
        %v2624 = vpack.c.b16 %v1808, %v1792
        %v2625 = vpack.c.b16 %v1809, %v1793
        %v2626 = vpack.c.b16 %v1810, %v1794
        %v2627 = vpack.c.b16 %v1811, %v1795
        %v2628 = vpack.c.b16 %v1812, %v1796
        %v2629 = vpack.c.b16 %v1829, %v1813
        %v2630 = vpack.c.b16 %v1830, %v1814
        %v2631 = vpack.c.b16 %v1831, %v1815
        %v2632 = vpack.c.b16 %v1832, %v1816
        %v2633 = vpack.c.b16 %v1833, %v1817
        %v2634 = vpack.c.b16 %v1834, %v1818
        %v2635 = vpack.c.b16 %v1835, %v1819
        %v2636 = vpack.c.b16 %v1836, %v1820
        %v2637 = vpack.c.b16 %v1837, %v1821
        %v2638 = vpack.c.b16 %v1838, %v1822
        %v2639 = vpack.c.b16 %v1839, %v1823
        %v2640 = vpack.c.b16 %v1840, %v1824
        %v2641 = vpack.c.b16 %v1841, %v1825
        %v2642 = vpack.c.b16 %v1842, %v1826
        %v2643 = vpack.c.b16 %v1843, %v1827
        %v2644 = vpack.c.b16 %v1844, %v1828
        %v2645 = vpack.c.b16 %v1861, %v1845
        %v2646 = vpack.c.b16 %v1862, %v1846
        %v2647 = vpack.c.b16 %v1863, %v1847
        %v2648 = vpack.c.b16 %v1864, %v1848
        %v2649 = vpack.c.b16 %v1865, %v1849
        %v2650 = vpack.c.b16 %v1866, %v1850
        %v2651 = vpack.c.b16 %v1867, %v1851
        %v2652 = vpack.c.b16 %v1868, %v1852
        %v2653 = vpack.c.b16 %v1869, %v1853
        %v2654 = vpack.c.b16 %v1870, %v1854
        %v2655 = vpack.c.b16 %v1871, %v1855
        %v2656 = vpack.c.b16 %v1872, %v1856
        %v2657 = vpack.c.b16 %v1873, %v1857
        %v2658 = vpack.c.b16 %v1874, %v1858
        %v2659 = vpack.c.b16 %v1875, %v1859
        %v2660 = vpack.c.b16 %v1876, %v1860
        %v2661 = vpack.c.b16 %v1893, %v1877
        %v2662 = vpack.c.b16 %v1894, %v1878
        %v2663 = vpack.c.b16 %v1895, %v1879
        %v2664 = vpack.c.b16 %v1896, %v1880
        %v2665 = vpack.c.b16 %v1897, %v1881
        %v2666 = vpack.c.b16 %v1898, %v1882
        %v2667 = vpack.c.b16 %v1899, %v1883
        %v2668 = vpack.c.b16 %v1900, %v1884
        %v2669 = vpack.c.b16 %v1901, %v1885
        %v2670 = vpack.c.b16 %v1902, %v1886
        %v2671 = vpack.c.b16 %v1903, %v1887
        %v2672 = vpack.c.b16 %v1904, %v1888
        %v2673 = vpack.c.b16 %v1905, %v1889
        %v2674 = vpack.c.b16 %v1906, %v1890
        %v2675 = vpack.c.b16 %v1907, %v1891
        %v2676 = vpack.c.b16 %v1908, %v1892
        %v2677 = vpack.c.b16 %v1925, %v1909
        %v2678 = vpack.c.b16 %v1926, %v1910
        %v2679 = vpack.c.b16 %v1927, %v1911
        %v2680 = vpack.c.b16 %v1928, %v1912
        %v2681 = vpack.c.b16 %v1929, %v1913
        %v2682 = vpack.c.b16 %v1930, %v1914
        %v2683 = vpack.c.b16 %v1931, %v1915
        %v2684 = vpack.c.b16 %v1932, %v1916
        %v2685 = vpack.c.b16 %v1933, %v1917
        %v2686 = vpack.c.b16 %v1934, %v1918
        %v2687 = vpack.c.b16 %v1935, %v1919
        %v2688 = vpack.c.b16 %v1936, %v1920
        %v2689 = vpack.c.b16 %v1937, %v1921
        %v2690 = vpack.c.b16 %v1938, %v1922
        %v2691 = vpack.c.b16 %v1939, %v1923
        %v2692 = vpack.c.b16 %v1940, %v1924
        %v2693 = vpack.c.b16 %v1957, %v1941
        %v2694 = vpack.c.b16 %v1958, %v1942
        %v2695 = vpack.c.b16 %v1959, %v1943
        %v2696 = vpack.c.b16 %v1960, %v1944
        %v2697 = vpack.c.b16 %v1961, %v1945
        %v2698 = vpack.c.b16 %v1962, %v1946
        %v2699 = vpack.c.b16 %v1963, %v1947
        %v2700 = vpack.c.b16 %v1964, %v1948
        %v2701 = vpack.c.b16 %v1965, %v1949
        %v2702 = vpack.c.b16 %v1966, %v1950
        %v2703 = vpack.c.b16 %v1967, %v1951
        %v2704 = vpack.c.b16 %v1968, %v1952
        %v2705 = vpack.c.b16 %v1969, %v1953
        %v2706 = vpack.c.b16 %v1970, %v1954
        %v2707 = vpack.c.b16 %v1971, %v1955
        %v2708 = vpack.c.b16 %v1972, %v1956
        %v2709 = vpack.c.b16 %v1989, %v1973
        %v2710 = vpack.c.b16 %v1990, %v1974
        %v2711 = vpack.c.b16 %v1991, %v1975
        %v2712 = vpack.c.b16 %v1992, %v1976
        %v2713 = vpack.c.b16 %v1993, %v1977
        %v2714 = vpack.c.b16 %v1994, %v1978
        %v2715 = vpack.c.b16 %v1995, %v1979
        %v2716 = vpack.c.b16 %v1996, %v1980
        %v2717 = vpack.c.b16 %v1997, %v1981
        %v2718 = vpack.c.b16 %v1998, %v1982
        %v2719 = vpack.c.b16 %v1999, %v1983
        %v2720 = vpack.c.b16 %v2000, %v1984
        %v2721 = vpack.c.b16 %v2001, %v1985
        %v2722 = vpack.c.b16 %v2002, %v1986
        %v2723 = vpack.c.b16 %v2003, %v1987
        %v2724 = vpack.c.b16 %v2004, %v1988
        %v2725 = vpack.c.b16 %v2021, %v2005
        %v2726 = vpack.c.b16 %v2022, %v2006
        %v2727 = vpack.c.b16 %v2023, %v2007
        %v2728 = vpack.c.b16 %v2024, %v2008
        %v2729 = vpack.c.b16 %v2025, %v2009
        %v2730 = vpack.c.b16 %v2026, %v2010
        %v2731 = vpack.c.b16 %v2027, %v2011
        %v2732 = vpack.c.b16 %v2028, %v2012
        %v2733 = vpack.c.b16 %v2029, %v2013
        %v2734 = vpack.c.b16 %v2030, %v2014
        %v2735 = vpack.c.b16 %v2031, %v2015
        %v2736 = vpack.c.b16 %v2032, %v2016
        %v2737 = vpack.c.b16 %v2033, %v2017
        %v2738 = vpack.c.b16 %v2034, %v2018
        %v2739 = vpack.c.b16 %v2035, %v2019
        %v2740 = vpack.c.b16 %v2036, %v2020
        %v2741 = vpack.c.b16 %v2053, %v2037
        %v2742 = vpack.c.b16 %v2054, %v2038
        %v2743 = vpack.c.b16 %v2055, %v2039
        %v2744 = vpack.c.b16 %v2056, %v2040
        %v2745 = vpack.c.b16 %v2057, %v2041
        %v2746 = vpack.c.b16 %v2058, %v2042
        %v2747 = vpack.c.b16 %v2059, %v2043
        %v2748 = vpack.c.b16 %v2060, %v2044
        %v2749 = vpack.c.b16 %v2061, %v2045
        %v2750 = vpack.c.b16 %v2062, %v2046
        %v2751 = vpack.c.b16 %v2063, %v2047
        %v2752 = vpack.c.b16 %v2064, %v2048
        %v2753 = vpack.c.b16 %v2065, %v2049
        %v2754 = vpack.c.b16 %v2066, %v2050
        %v2755 = vpack.c.b16 %v2067, %v2051
        %v2756 = vpack.c.b16 %v2068, %v2052
        %v2757 = vpack.c.b16 %v2085, %v2069
        %v2758 = vpack.c.b16 %v2086, %v2070
        %v2759 = vpack.c.b16 %v2087, %v2071
        %v2760 = vpack.c.b16 %v2088, %v2072
        %v2761 = vpack.c.b16 %v2089, %v2073
        %v2762 = vpack.c.b16 %v2090, %v2074
        %v2763 = vpack.c.b16 %v2091, %v2075
        %v2764 = vpack.c.b16 %v2092, %v2076
        %v2765 = vpack.c.b16 %v2093, %v2077
        %v2766 = vpack.c.b16 %v2094, %v2078
        %v2767 = vpack.c.b16 %v2095, %v2079
        %v2768 = vpack.c.b16 %v2096, %v2080
        %v2769 = vpack.c.b16 %v2097, %v2081
        %v2770 = vpack.c.b16 %v2098, %v2082
        %v2771 = vpack.c.b16 %v2099, %v2083
        %v2772 = vpack.c.b16 %v2100, %v2084
        %v2773 = vpack.c.b16 %v2117, %v2101
        %v2774 = vpack.c.b16 %v2118, %v2102
        %v2775 = vpack.c.b16 %v2119, %v2103
        %v2776 = vpack.c.b16 %v2120, %v2104
        %v2777 = vpack.c.b16 %v2121, %v2105
        %v2778 = vpack.c.b16 %v2122, %v2106
        %v2779 = vpack.c.b16 %v2123, %v2107
        %v2780 = vpack.c.b16 %v2124, %v2108
        %v2781 = vpack.c.b16 %v2125, %v2109
        %v2782 = vpack.c.b16 %v2126, %v2110
        %v2783 = vpack.c.b16 %v2127, %v2111
        %v2784 = vpack.c.b16 %v2128, %v2112
        %v2785 = vpack.c.b16 %v2129, %v2113
        %v2786 = vpack.c.b16 %v2130, %v2114
        %v2787 = vpack.c.b16 %v2131, %v2115
        %v2788 = vpack.c.b16 %v2132, %v2116
        %v2789 = vpack.c.b16 %v2149, %v2133
        %v2790 = vpack.c.b16 %v2150, %v2134
        %v2791 = vpack.c.b16 %v2151, %v2135
        %v2792 = vpack.c.b16 %v2152, %v2136
        %v2793 = vpack.c.b16 %v2153, %v2137
        %v2794 = vpack.c.b16 %v2154, %v2138
        %v2795 = vpack.c.b16 %v2155, %v2139
        %v2796 = vpack.c.b16 %v2156, %v2140
        %v2797 = vpack.c.b16 %v2157, %v2141
        %v2798 = vpack.c.b16 %v2158, %v2142
        %v2799 = vpack.c.b16 %v2159, %v2143
        %v2800 = vpack.c.b16 %v2160, %v2144
        %v2801 = vpack.c.b16 %v2161, %v2145
        %v2802 = vpack.c.b16 %v2162, %v2146
        %v2803 = vpack.c.b16 %v2163, %v2147
        %v2804 = vpack.c.b16 %v2164, %v2148
        %v2805 = vpack.c.b16 %v2181, %v2165
        %v2806 = vpack.c.b16 %v2182, %v2166
        %v2807 = vpack.c.b16 %v2183, %v2167
        %v2808 = vpack.c.b16 %v2184, %v2168
        %v2809 = vpack.c.b16 %v2185, %v2169
        %v2810 = vpack.c.b16 %v2186, %v2170
        %v2811 = vpack.c.b16 %v2187, %v2171
        %v2812 = vpack.c.b16 %v2188, %v2172
        %v2813 = vpack.c.b16 %v2189, %v2173
        %v2814 = vpack.c.b16 %v2190, %v2174
        %v2815 = vpack.c.b16 %v2191, %v2175
        %v2816 = vpack.c.b16 %v2192, %v2176
        %v2817 = vpack.c.b16 %v2193, %v2177
        %v2818 = vpack.c.b16 %v2194, %v2178
        %v2819 = vpack.c.b16 %v2195, %v2179
        %v2820 = vpack.c.b16 %v2196, %v2180
        %v2821 = vpack.c.b16 %v2213, %v2197
        %v2822 = vpack.c.b16 %v2214, %v2198
        %v2823 = vpack.c.b16 %v2215, %v2199
        %v2824 = vpack.c.b16 %v2216, %v2200
        %v2825 = vpack.c.b16 %v2217, %v2201
        %v2826 = vpack.c.b16 %v2218, %v2202
        %v2827 = vpack.c.b16 %v2219, %v2203
        %v2828 = vpack.c.b16 %v2220, %v2204
        %v2829 = vpack.c.b16 %v2221, %v2205
        %v2830 = vpack.c.b16 %v2222, %v2206
        %v2831 = vpack.c.b16 %v2223, %v2207
        %v2832 = vpack.c.b16 %v2224, %v2208
        %v2833 = vpack.c.b16 %v2225, %v2209
        %v2834 = vpack.c.b16 %v2226, %v2210
        %v2835 = vpack.c.b16 %v2227, %v2211
        %v2836 = vpack.c.b16 %v2228, %v2212
        %v2837 = vpack.c.b16 %v2245, %v2229
        %v2838 = vpack.c.b16 %v2246, %v2230
        %v2839 = vpack.c.b16 %v2247, %v2231
        %v2840 = vpack.c.b16 %v2248, %v2232
        %v2841 = vpack.c.b16 %v2249, %v2233
        %v2842 = vpack.c.b16 %v2250, %v2234
        %v2843 = vpack.c.b16 %v2251, %v2235
        %v2844 = vpack.c.b16 %v2252, %v2236
        %v2845 = vpack.c.b16 %v2253, %v2237
        %v2846 = vpack.c.b16 %v2254, %v2238
        %v2847 = vpack.c.b16 %v2255, %v2239
        %v2848 = vpack.c.b16 %v2256, %v2240
        %v2849 = vpack.c.b16 %v2257, %v2241
        %v2850 = vpack.c.b16 %v2258, %v2242
        %v2851 = vpack.c.b16 %v2259, %v2243
        %v2852 = vpack.c.b16 %v2260, %v2244
        %v2853 = vpack.c.b16 %v2277, %v2261
        %v2854 = vpack.c.b16 %v2278, %v2262
        %v2855 = vpack.c.b16 %v2279, %v2263
        %v2856 = vpack.c.b16 %v2280, %v2264
        %v2857 = vpack.c.b16 %v2281, %v2265
        %v2858 = vpack.c.b16 %v2282, %v2266
        %v2859 = vpack.c.b16 %v2283, %v2267
        %v2860 = vpack.c.b16 %v2284, %v2268
        %v2861 = vpack.c.b16 %v2285, %v2269
        %v2862 = vpack.c.b16 %v2286, %v2270
        %v2863 = vpack.c.b16 %v2287, %v2271
        %v2864 = vpack.c.b16 %v2288, %v2272
        %v2865 = vpack.c.b16 %v2289, %v2273
        %v2866 = vpack.c.b16 %v2290, %v2274
        %v2867 = vpack.c.b16 %v2291, %v2275
        %v2868 = vpack.c.b16 %v2292, %v2276
        %v2869 = vpack.c.b16 %v2309, %v2293
        %v2870 = vpack.c.b16 %v2310, %v2294
        %v2871 = vpack.c.b16 %v2311, %v2295
        %v2872 = vpack.c.b16 %v2312, %v2296
        %v2873 = vpack.c.b16 %v2313, %v2297
        %v2874 = vpack.c.b16 %v2314, %v2298
        %v2875 = vpack.c.b16 %v2315, %v2299
        %v2876 = vpack.c.b16 %v2316, %v2300
        %v2877 = vpack.c.b16 %v2317, %v2301
        %v2878 = vpack.c.b16 %v2318, %v2302
        %v2879 = vpack.c.b16 %v2319, %v2303
        %v2880 = vpack.c.b16 %v2320, %v2304
        %v2881 = vpack.c.b16 %v2321, %v2305
        %v2882 = vpack.c.b16 %v2322, %v2306
        %v2883 = vpack.c.b16 %v2323, %v2307
        %v2884 = vpack.c.b16 %v2324, %v2308
        %v2885 = vpack.c.b16 %v2341, %v2325
        %v2886 = vpack.c.b16 %v2342, %v2326
        %v2887 = vpack.c.b16 %v2343, %v2327
        %v2888 = vpack.c.b16 %v2344, %v2328
        %v2889 = vpack.c.b16 %v2345, %v2329
        %v2890 = vpack.c.b16 %v2346, %v2330
        %v2891 = vpack.c.b16 %v2347, %v2331
        %v2892 = vpack.c.b16 %v2348, %v2332
        %v2893 = vpack.c.b16 %v2349, %v2333
        %v2894 = vpack.c.b16 %v2350, %v2334
        %v2895 = vpack.c.b16 %v2351, %v2335
        %v2896 = vpack.c.b16 %v2352, %v2336
        %v2897 = vpack.c.b16 %v2353, %v2337
        %v2898 = vpack.c.b16 %v2354, %v2338
        %v2899 = vpack.c.b16 %v2355, %v2339
        %v2900 = vpack.c.b16 %v2356, %v2340
        %v2901 = vpack.c.b16 %v2373, %v2357
        %v2902 = vpack.c.b16 %v2374, %v2358
        %v2903 = vpack.c.b16 %v2375, %v2359
        %v2904 = vpack.c.b16 %v2376, %v2360
        %v2905 = vpack.c.b16 %v2377, %v2361
        %v2906 = vpack.c.b16 %v2378, %v2362
        %v2907 = vpack.c.b16 %v2379, %v2363
        %v2908 = vpack.c.b16 %v2380, %v2364
        %v2909 = vpack.c.b16 %v2381, %v2365
        %v2910 = vpack.c.b16 %v2382, %v2366
        %v2911 = vpack.c.b16 %v2383, %v2367
        %v2912 = vpack.c.b16 %v2384, %v2368
        %v2913 = vpack.c.b16 %v2385, %v2369
        %v2914 = vpack.c.b16 %v2386, %v2370
        %v2915 = vpack.c.b16 %v2387, %v2371
        %v2916 = vpack.c.b16 %v2388, %v2372
        %v2917 = vpack.c.b16 %v2405, %v2389
        %v2918 = vpack.c.b16 %v2406, %v2390
        %v2919 = vpack.c.b16 %v2407, %v2391
        %v2920 = vpack.c.b16 %v2408, %v2392
        %v2921 = vpack.c.b16 %v2409, %v2393
        %v2922 = vpack.c.b16 %v2410, %v2394
        %v2923 = vpack.c.b16 %v2411, %v2395
        %v2924 = vpack.c.b16 %v2412, %v2396
        %v2925 = vpack.c.b16 %v2413, %v2397
        %v2926 = vpack.c.b16 %v2414, %v2398
        %v2927 = vpack.c.b16 %v2415, %v2399
        %v2928 = vpack.c.b16 %v2416, %v2400
        %v2929 = vpack.c.b16 %v2417, %v2401
        %v2930 = vpack.c.b16 %v2418, %v2402
        %v2931 = vpack.c.b16 %v2419, %v2403
        %v2932 = vpack.c.b16 %v2420, %v2404
        %3445 = vmatprep.subr.bf16.mxu0 %v2422
        %3446 = vmatpush1.bf16.msra.mxu0 %v2421
        %3447 = vmatprep.subr.bf16.mxu0 %v2438
        %3448 = vmatpush1.bf16.msra.mxu0 %v2437
        %3449 = vmatprep.subr.bf16.mxu0 %v2454
        %3450 = vmatpush1.bf16.msra.mxu0 %v2453
        %3451 = vmatprep.subr.bf16.mxu0 %v2470
        %3452 = vmatpush1.bf16.msra.mxu0 %v2469
        %3453 = vmatprep.subr.bf16.mxu0 %v2486
        %3454 = vmatpush1.bf16.msra.mxu0 %v2485
        %3455 = vmatprep.subr.bf16.mxu0 %v2502
        %3456 = vmatpush1.bf16.msra.mxu0 %v2501
        %3457 = vmatprep.subr.bf16.mxu0 %v2518
        %3458 = vmatpush1.bf16.msra.mxu0 %v2517
        %3459 = vmatprep.subr.bf16.mxu0 %v2534
        %3460 = vmatpush1.bf16.msra.mxu0 %v2533
        %3461 = vmatprep.subr.bf16.mxu0 %v2550
        %3462 = vmatpush1.bf16.msra.mxu0 %v2549
        %3463 = vmatprep.subr.bf16.mxu0 %v2566
        %3464 = vmatpush1.bf16.msra.mxu0 %v2565
        %3465 = vmatprep.subr.bf16.mxu0 %v2582
        %3466 = vmatpush1.bf16.msra.mxu0 %v2581
        %3467 = vmatprep.subr.bf16.mxu0 %v2598
        %3468 = vmatpush1.bf16.msra.mxu0 %v2597
        %3469 = vmatprep.subr.bf16.mxu0 %v2614
        %3470 = vmatpush1.bf16.msra.mxu0 %v2613
        %3471 = vmatprep.subr.bf16.mxu0 %v2630
        %3472 = vmatpush1.bf16.msra.mxu0 %v2629
        %3473 = vmatprep.subr.bf16.mxu0 %v2646
        %3474 = vmatpush1.bf16.msra.mxu0 %v2645
        %3475 = vmatprep.subr.bf16.mxu0 %v2662
        %3476 = vmatpush1.bf16.msra.mxu0 %v2661
        %3477 = vmatprep.mubr.bf16.mxu0 %v286
        %3478 = vmatmul.mubr.bf16.gmra.mrb[0].mxu0 %v285
        %v3479 = vpop.f32.mrb[0].mxu0
        %v3480 = vadd.f32 %v808, %v3479
        %v3481 = vpop.f32.mrb[0].mxu0
        %v3482 = vadd.f32 %v812, %v3481
        %v3483 = vpop.f32.mrb[0].mxu0
        %v3484 = vpop.f32.mrb[0].mxu0
        %3485 = vdwg.mxu0
        %3486 = vmatprep.subr.bf16.mxu0 %v2678
        %3487 = vmatpush1.bf16.msra.mxu0 %v2677
        %3488 = vmatprep.subr.bf16.mxu0 %v2694
        %3489 = vmatpush1.bf16.msra.mxu0 %v2693
        %3490 = vmatprep.subr.bf16.mxu0 %v2710
        %3491 = vmatpush1.bf16.msra.mxu0 %v2709
        %3492 = vmatprep.subr.bf16.mxu0 %v2726
        %3493 = vmatpush1.bf16.msra.mxu0 %v2725
        %3494 = vmatprep.subr.bf16.mxu0 %v2742
        %3495 = vmatpush1.bf16.msra.mxu0 %v2741
        %3496 = vmatprep.subr.bf16.mxu0 %v2758
        %3497 = vmatpush1.bf16.msra.mxu0 %v2757
        %3498 = vmatprep.subr.bf16.mxu0 %v2774
        %3499 = vmatpush1.bf16.msra.mxu0 %v2773
        %3500 = vmatprep.subr.bf16.mxu0 %v2790
        %3501 = vmatpush1.bf16.msra.mxu0 %v2789
        %3502 = vmatprep.subr.bf16.mxu0 %v2806
        %3503 = vmatpush1.bf16.msra.mxu0 %v2805
        %3504 = vmatprep.subr.bf16.mxu0 %v2822
        %3505 = vmatpush1.bf16.msra.mxu0 %v2821
        %3506 = vmatprep.subr.bf16.mxu0 %v2838
        %3507 = vmatpush1.bf16.msra.mxu0 %v2837
        %3508 = vmatprep.subr.bf16.mxu0 %v2854
        %3509 = vmatpush1.bf16.msra.mxu0 %v2853
        %3510 = vmatprep.subr.bf16.mxu0 %v2870
        %3511 = vmatpush1.bf16.msra.mxu0 %v2869
        %3512 = vmatprep.subr.bf16.mxu0 %v2886
        %3513 = vmatpush1.bf16.msra.mxu0 %v2885
        %3514 = vmatprep.subr.bf16.mxu0 %v2902
        %3515 = vmatpush1.bf16.msra.mxu0 %v2901
        %3516 = vmatprep.subr.bf16.mxu0 %v2918
        %3517 = vmatpush1.bf16.msra.mxu0 %v2917
        %3518 = vmatprep.mubr.bf16.mxu0 %v288
        %3519 = vmatmul.mubr.bf16.gmra.mrb[0].mxu0 %v287
        %v3520 = vpop.f32.mrb[0].mxu0
        %v3521 = vadd.f32 %v3480, %v3520
        %v3522 = vpop.f32.mrb[0].mxu0
        %v3523 = vadd.f32 %v3482, %v3522
        %v3524 = vpop.f32.mrb[0].mxu0
        %v3525 = vpop.f32.mrb[0].mxu0
        %3526 = vdwg.mxu0
        %3527 = vmatprep.subr.bf16.mxu0 %v2424
        %3528 = vmatpush1.bf16.msra.mxu0 %v2423
        %3529 = vmatprep.subr.bf16.mxu0 %v2440
        %3530 = vmatpush1.bf16.msra.mxu0 %v2439
        %3531 = vmatprep.subr.bf16.mxu0 %v2456
        %3532 = vmatpush1.bf16.msra.mxu0 %v2455
        %3533 = vmatprep.subr.bf16.mxu0 %v2472
        %3534 = vmatpush1.bf16.msra.mxu0 %v2471
        %3535 = vmatprep.subr.bf16.mxu0 %v2488
        %3536 = vmatpush1.bf16.msra.mxu0 %v2487
        %3537 = vmatprep.subr.bf16.mxu0 %v2504
        %3538 = vmatpush1.bf16.msra.mxu0 %v2503
        %3539 = vmatprep.subr.bf16.mxu0 %v2520
        %3540 = vmatpush1.bf16.msra.mxu0 %v2519
        %3541 = vmatprep.subr.bf16.mxu0 %v2536
        %3542 = vmatpush1.bf16.msra.mxu0 %v2535
        %3543 = vmatprep.subr.bf16.mxu0 %v2552
        %3544 = vmatpush1.bf16.msra.mxu0 %v2551
        %3545 = vmatprep.subr.bf16.mxu0 %v2568
        %3546 = vmatpush1.bf16.msra.mxu0 %v2567
        %3547 = vmatprep.subr.bf16.mxu0 %v2584
        %3548 = vmatpush1.bf16.msra.mxu0 %v2583
        %3549 = vmatprep.subr.bf16.mxu0 %v2600
        %3550 = vmatpush1.bf16.msra.mxu0 %v2599
        %3551 = vmatprep.subr.bf16.mxu0 %v2616
        %3552 = vmatpush1.bf16.msra.mxu0 %v2615
        %3553 = vmatprep.subr.bf16.mxu0 %v2632
        %3554 = vmatpush1.bf16.msra.mxu0 %v2631
        %3555 = vmatprep.subr.bf16.mxu0 %v2648
        %3556 = vmatpush1.bf16.msra.mxu0 %v2647
        %3557 = vmatprep.subr.bf16.mxu0 %v2664
        %3558 = vmatpush1.bf16.msra.mxu0 %v2663
        %3559 = vmatprep.mubr.bf16.mxu0 %v286
        %3560 = vmatmul.mubr.bf16.gmra.mrb[0].mxu0 %v285
        %v3561 = vpop.f32.mrb[0].mxu0
        %v3562 = vadd.f32 %v816, %v3561
        %v3563 = vpop.f32.mrb[0].mxu0
        %v3564 = vadd.f32 %v820, %v3563
        %v3565 = vpop.f32.mrb[0].mxu0
        %v3566 = vpop.f32.mrb[0].mxu0
        %3567 = vdwg.mxu0
        %3568 = vmatprep.subr.bf16.mxu0 %v2680
        %3569 = vmatpush1.bf16.msra.mxu0 %v2679
        %3570 = vmatprep.subr.bf16.mxu0 %v2696
        %3571 = vmatpush1.bf16.msra.mxu0 %v2695
        %3572 = vmatprep.subr.bf16.mxu0 %v2712
        %3573 = vmatpush1.bf16.msra.mxu0 %v2711
        %3574 = vmatprep.subr.bf16.mxu0 %v2728
        %3575 = vmatpush1.bf16.msra.mxu0 %v2727
        %3576 = vmatprep.subr.bf16.mxu0 %v2744
        %3577 = vmatpush1.bf16.msra.mxu0 %v2743
        %3578 = vmatprep.subr.bf16.mxu0 %v2760
        %3579 = vmatpush1.bf16.msra.mxu0 %v2759
        %3580 = vmatprep.subr.bf16.mxu0 %v2776
        %3581 = vmatpush1.bf16.msra.mxu0 %v2775
        %3582 = vmatprep.subr.bf16.mxu0 %v2792
        %3583 = vmatpush1.bf16.msra.mxu0 %v2791
        %3584 = vmatprep.subr.bf16.mxu0 %v2808
        %3585 = vmatpush1.bf16.msra.mxu0 %v2807
        %3586 = vmatprep.subr.bf16.mxu0 %v2824
        %3587 = vmatpush1.bf16.msra.mxu0 %v2823
        %3588 = vmatprep.subr.bf16.mxu0 %v2840
        %3589 = vmatpush1.bf16.msra.mxu0 %v2839
        %3590 = vmatprep.subr.bf16.mxu0 %v2856
        %3591 = vmatpush1.bf16.msra.mxu0 %v2855
        %3592 = vmatprep.subr.bf16.mxu0 %v2872
        %3593 = vmatpush1.bf16.msra.mxu0 %v2871
        %3594 = vmatprep.subr.bf16.mxu0 %v2888
        %3595 = vmatpush1.bf16.msra.mxu0 %v2887
        %3596 = vmatprep.subr.bf16.mxu0 %v2904
        %3597 = vmatpush1.bf16.msra.mxu0 %v2903
        %3598 = vmatprep.subr.bf16.mxu0 %v2920
        %3599 = vmatpush1.bf16.msra.mxu0 %v2919
        %3600 = vmatprep.mubr.bf16.mxu0 %v288
        %3601 = vmatmul.mubr.bf16.gmra.mrb[0].mxu0 %v287
        %v3602 = vpop.f32.mrb[0].mxu0
        %v3603 = vadd.f32 %v3562, %v3602
        %v3604 = vpop.f32.mrb[0].mxu0
        %v3605 = vadd.f32 %v3564, %v3604
        %v3606 = vpop.f32.mrb[0].mxu0
        %v3607 = vpop.f32.mrb[0].mxu0
        %3608 = vdwg.mxu0
        %3609 = vmatprep.subr.bf16.mxu0 %v2426
        %3610 = vmatpush1.bf16.msra.mxu0 %v2425
        %3611 = vmatprep.subr.bf16.mxu0 %v2442
        %3612 = vmatpush1.bf16.msra.mxu0 %v2441
        %3613 = vmatprep.subr.bf16.mxu0 %v2458
        %3614 = vmatpush1.bf16.msra.mxu0 %v2457
        %3615 = vmatprep.subr.bf16.mxu0 %v2474
        %3616 = vmatpush1.bf16.msra.mxu0 %v2473
        %3617 = vmatprep.subr.bf16.mxu0 %v2490
        %3618 = vmatpush1.bf16.msra.mxu0 %v2489
        %3619 = vmatprep.subr.bf16.mxu0 %v2506
        %3620 = vmatpush1.bf16.msra.mxu0 %v2505
        %3621 = vmatprep.subr.bf16.mxu0 %v2522
        %3622 = vmatpush1.bf16.msra.mxu0 %v2521
        %3623 = vmatprep.subr.bf16.mxu0 %v2538
        %3624 = vmatpush1.bf16.msra.mxu0 %v2537
        %3625 = vmatprep.subr.bf16.mxu0 %v2554
        %3626 = vmatpush1.bf16.msra.mxu0 %v2553
        %3627 = vmatprep.subr.bf16.mxu0 %v2570
        %3628 = vmatpush1.bf16.msra.mxu0 %v2569
        %3629 = vmatprep.subr.bf16.mxu0 %v2586
        %3630 = vmatpush1.bf16.msra.mxu0 %v2585
        %3631 = vmatprep.subr.bf16.mxu0 %v2602
        %3632 = vmatpush1.bf16.msra.mxu0 %v2601
        %3633 = vmatprep.subr.bf16.mxu0 %v2618
        %3634 = vmatpush1.bf16.msra.mxu0 %v2617
        %3635 = vmatprep.subr.bf16.mxu0 %v2634
        %3636 = vmatpush1.bf16.msra.mxu0 %v2633
        %3637 = vmatprep.subr.bf16.mxu0 %v2650
        %3638 = vmatpush1.bf16.msra.mxu0 %v2649
        %3639 = vmatprep.subr.bf16.mxu0 %v2666
        %3640 = vmatpush1.bf16.msra.mxu0 %v2665
        %3641 = vmatprep.mubr.bf16.mxu0 %v286
        %3642 = vmatmul.mubr.bf16.gmra.mrb[0].mxu0 %v285
        %v3643 = vpop.f32.mrb[0].mxu0
        %v3644 = vadd.f32 %v824, %v3643
        %v3645 = vpop.f32.mrb[0].mxu0
        %v3646 = vadd.f32 %v828, %v3645
        %v3647 = vpop.f32.mrb[0].mxu0
        %v3648 = vpop.f32.mrb[0].mxu0
        %3649 = vdwg.mxu0
        %3650 = vmatprep.subr.bf16.mxu0 %v2682
        %3651 = vmatpush1.bf16.msra.mxu0 %v2681
        %3652 = vmatprep.subr.bf16.mxu0 %v2698
        %3653 = vmatpush1.bf16.msra.mxu0 %v2697
        %3654 = vmatprep.subr.bf16.mxu0 %v2714
        %3655 = vmatpush1.bf16.msra.mxu0 %v2713
        %3656 = vmatprep.subr.bf16.mxu0 %v2730
        %3657 = vmatpush1.bf16.msra.mxu0 %v2729
        %3658 = vmatprep.subr.bf16.mxu0 %v2746
        %3659 = vmatpush1.bf16.msra.mxu0 %v2745
        %3660 = vmatprep.subr.bf16.mxu0 %v2762
        %3661 = vmatpush1.bf16.msra.mxu0 %v2761
        %3662 = vmatprep.subr.bf16.mxu0 %v2778
        %3663 = vmatpush1.bf16.msra.mxu0 %v2777
        %3664 = vmatprep.subr.bf16.mxu0 %v2794
        %3665 = vmatpush1.bf16.msra.mxu0 %v2793
        %3666 = vmatprep.subr.bf16.mxu0 %v2810
        %3667 = vmatpush1.bf16.msra.mxu0 %v2809
        %3668 = vmatprep.subr.bf16.mxu0 %v2826
        %3669 = vmatpush1.bf16.msra.mxu0 %v2825
        %3670 = vmatprep.subr.bf16.mxu0 %v2842
        %3671 = vmatpush1.bf16.msra.mxu0 %v2841
        %3672 = vmatprep.subr.bf16.mxu0 %v2858
        %3673 = vmatpush1.bf16.msra.mxu0 %v2857
        %3674 = vmatprep.subr.bf16.mxu0 %v2874
        %3675 = vmatpush1.bf16.msra.mxu0 %v2873
        %3676 = vmatprep.subr.bf16.mxu0 %v2890
        %3677 = vmatpush1.bf16.msra.mxu0 %v2889
        %3678 = vmatprep.subr.bf16.mxu0 %v2906
        %3679 = vmatpush1.bf16.msra.mxu0 %v2905
        %3680 = vmatprep.subr.bf16.mxu0 %v2922
        %3681 = vmatpush1.bf16.msra.mxu0 %v2921
        %3682 = vmatprep.mubr.bf16.mxu0 %v288
        %3683 = vmatmul.mubr.bf16.gmra.mrb[0].mxu0 %v287
        %v3684 = vpop.f32.mrb[0].mxu0
        %v3685 = vadd.f32 %v3644, %v3684
        %v3686 = vpop.f32.mrb[0].mxu0
        %v3687 = vadd.f32 %v3646, %v3686
        %v3688 = vpop.f32.mrb[0].mxu0
        %v3689 = vpop.f32.mrb[0].mxu0
        %3690 = vdwg.mxu0
        %3691 = vmatprep.subr.bf16.mxu0 %v2428
        %3692 = vmatpush1.bf16.msra.mxu0 %v2427
        %3693 = vmatprep.subr.bf16.mxu0 %v2444
        %3694 = vmatpush1.bf16.msra.mxu0 %v2443
        %3695 = vmatprep.subr.bf16.mxu0 %v2460
        %3696 = vmatpush1.bf16.msra.mxu0 %v2459
        %3697 = vmatprep.subr.bf16.mxu0 %v2476
        %3698 = vmatpush1.bf16.msra.mxu0 %v2475
        %3699 = vmatprep.subr.bf16.mxu0 %v2492
        %3700 = vmatpush1.bf16.msra.mxu0 %v2491
        %3701 = vmatprep.subr.bf16.mxu0 %v2508
        %3702 = vmatpush1.bf16.msra.mxu0 %v2507
        %3703 = vmatprep.subr.bf16.mxu0 %v2524
        %3704 = vmatpush1.bf16.msra.mxu0 %v2523
        %3705 = vmatprep.subr.bf16.mxu0 %v2540
        %3706 = vmatpush1.bf16.msra.mxu0 %v2539
        %3707 = vmatprep.subr.bf16.mxu0 %v2556
        %3708 = vmatpush1.bf16.msra.mxu0 %v2555
        %3709 = vmatprep.subr.bf16.mxu0 %v2572
        %3710 = vmatpush1.bf16.msra.mxu0 %v2571
        %3711 = vmatprep.subr.bf16.mxu0 %v2588
        %3712 = vmatpush1.bf16.msra.mxu0 %v2587
        %3713 = vmatprep.subr.bf16.mxu0 %v2604
        %3714 = vmatpush1.bf16.msra.mxu0 %v2603
        %3715 = vmatprep.subr.bf16.mxu0 %v2620
        %3716 = vmatpush1.bf16.msra.mxu0 %v2619
        %3717 = vmatprep.subr.bf16.mxu0 %v2636
        %3718 = vmatpush1.bf16.msra.mxu0 %v2635
        %3719 = vmatprep.subr.bf16.mxu0 %v2652
        %3720 = vmatpush1.bf16.msra.mxu0 %v2651
        %3721 = vmatprep.subr.bf16.mxu0 %v2668
        %3722 = vmatpush1.bf16.msra.mxu0 %v2667
        %3723 = vmatprep.mubr.bf16.mxu0 %v286
        %3724 = vmatmul.mubr.bf16.gmra.mrb[0].mxu0 %v285
        %v3725 = vpop.f32.mrb[0].mxu0
        %v3726 = vadd.f32 %v832, %v3725
        %v3727 = vpop.f32.mrb[0].mxu0
        %v3728 = vadd.f32 %v836, %v3727
        %v3729 = vpop.f32.mrb[0].mxu0
        %v3730 = vpop.f32.mrb[0].mxu0
        %3731 = vdwg.mxu0
        %3732 = vmatprep.subr.bf16.mxu0 %v2684
        %3733 = vmatpush1.bf16.msra.mxu0 %v2683
        %3734 = vmatprep.subr.bf16.mxu0 %v2700
        %3735 = vmatpush1.bf16.msra.mxu0 %v2699
        %3736 = vmatprep.subr.bf16.mxu0 %v2716
        %3737 = vmatpush1.bf16.msra.mxu0 %v2715
        %3738 = vmatprep.subr.bf16.mxu0 %v2732
        %3739 = vmatpush1.bf16.msra.mxu0 %v2731
        %3740 = vmatprep.subr.bf16.mxu0 %v2748
        %3741 = vmatpush1.bf16.msra.mxu0 %v2747
        %3742 = vmatprep.subr.bf16.mxu0 %v2764
        %3743 = vmatpush1.bf16.msra.mxu0 %v2763
        %3744 = vmatprep.subr.bf16.mxu0 %v2780
        %3745 = vmatpush1.bf16.msra.mxu0 %v2779
        %3746 = vmatprep.subr.bf16.mxu0 %v2796
        %3747 = vmatpush1.bf16.msra.mxu0 %v2795
        %3748 = vmatprep.subr.bf16.mxu0 %v2812
        %3749 = vmatpush1.bf16.msra.mxu0 %v2811
        %3750 = vmatprep.subr.bf16.mxu0 %v2828
        %3751 = vmatpush1.bf16.msra.mxu0 %v2827
        %3752 = vmatprep.subr.bf16.mxu0 %v2844
        %3753 = vmatpush1.bf16.msra.mxu0 %v2843
        %3754 = vmatprep.subr.bf16.mxu0 %v2860
        %3755 = vmatpush1.bf16.msra.mxu0 %v2859
        %3756 = vmatprep.subr.bf16.mxu0 %v2876
        %3757 = vmatpush1.bf16.msra.mxu0 %v2875
        %3758 = vmatprep.subr.bf16.mxu0 %v2892
        %3759 = vmatpush1.bf16.msra.mxu0 %v2891
        %3760 = vmatprep.subr.bf16.mxu0 %v2908
        %3761 = vmatpush1.bf16.msra.mxu0 %v2907
        %3762 = vmatprep.subr.bf16.mxu0 %v2924
        %3763 = vmatpush1.bf16.msra.mxu0 %v2923
        %3764 = vmatprep.mubr.bf16.mxu0 %v288
        %3765 = vmatmul.mubr.bf16.gmra.mrb[0].mxu0 %v287
        %v3766 = vpop.f32.mrb[0].mxu0
        %v3767 = vadd.f32 %v3726, %v3766
        %v3768 = vpop.f32.mrb[0].mxu0
        %v3769 = vadd.f32 %v3728, %v3768
        %v3770 = vpop.f32.mrb[0].mxu0
        %v3771 = vpop.f32.mrb[0].mxu0
        %3772 = vdwg.mxu0
        %3773 = vmatprep.subr.bf16.mxu0 %v2430
        %3774 = vmatpush1.bf16.msra.mxu0 %v2429
        %3775 = vmatprep.subr.bf16.mxu0 %v2446
        %3776 = vmatpush1.bf16.msra.mxu0 %v2445
        %3777 = vmatprep.subr.bf16.mxu0 %v2462
        %3778 = vmatpush1.bf16.msra.mxu0 %v2461
        %3779 = vmatprep.subr.bf16.mxu0 %v2478
        %3780 = vmatpush1.bf16.msra.mxu0 %v2477
        %3781 = vmatprep.subr.bf16.mxu0 %v2494
        %3782 = vmatpush1.bf16.msra.mxu0 %v2493
        %3783 = vmatprep.subr.bf16.mxu0 %v2510
        %3784 = vmatpush1.bf16.msra.mxu0 %v2509
        %3785 = vmatprep.subr.bf16.mxu0 %v2526
        %3786 = vmatpush1.bf16.msra.mxu0 %v2525
        %3787 = vmatprep.subr.bf16.mxu0 %v2542
        %3788 = vmatpush1.bf16.msra.mxu0 %v2541
        %3789 = vmatprep.subr.bf16.mxu0 %v2558
        %3790 = vmatpush1.bf16.msra.mxu0 %v2557
        %3791 = vmatprep.subr.bf16.mxu0 %v2574
        %3792 = vmatpush1.bf16.msra.mxu0 %v2573
        %3793 = vmatprep.subr.bf16.mxu0 %v2590
        %3794 = vmatpush1.bf16.msra.mxu0 %v2589
        %3795 = vmatprep.subr.bf16.mxu0 %v2606
        %3796 = vmatpush1.bf16.msra.mxu0 %v2605
        %3797 = vmatprep.subr.bf16.mxu0 %v2622
        %3798 = vmatpush1.bf16.msra.mxu0 %v2621
        %3799 = vmatprep.subr.bf16.mxu0 %v2638
        %3800 = vmatpush1.bf16.msra.mxu0 %v2637
        %3801 = vmatprep.subr.bf16.mxu0 %v2654
        %3802 = vmatpush1.bf16.msra.mxu0 %v2653
        %3803 = vmatprep.subr.bf16.mxu0 %v2670
        %3804 = vmatpush1.bf16.msra.mxu0 %v2669
        %3805 = vmatprep.mubr.bf16.mxu0 %v286
        %3806 = vmatmul.mubr.bf16.gmra.mrb[0].mxu0 %v285
        %v3807 = vpop.f32.mrb[0].mxu0
        %v3808 = vadd.f32 %v840, %v3807
        %v3809 = vpop.f32.mrb[0].mxu0
        %v3810 = vadd.f32 %v844, %v3809
        %v3811 = vpop.f32.mrb[0].mxu0
        %v3812 = vpop.f32.mrb[0].mxu0
        %3813 = vdwg.mxu0
        %3814 = vmatprep.subr.bf16.mxu0 %v2686
        %3815 = vmatpush1.bf16.msra.mxu0 %v2685
        %3816 = vmatprep.subr.bf16.mxu0 %v2702
        %3817 = vmatpush1.bf16.msra.mxu0 %v2701
        %3818 = vmatprep.subr.bf16.mxu0 %v2718
        %3819 = vmatpush1.bf16.msra.mxu0 %v2717
        %3820 = vmatprep.subr.bf16.mxu0 %v2734
        %3821 = vmatpush1.bf16.msra.mxu0 %v2733
        %3822 = vmatprep.subr.bf16.mxu0 %v2750
        %3823 = vmatpush1.bf16.msra.mxu0 %v2749
        %3824 = vmatprep.subr.bf16.mxu0 %v2766
        %3825 = vmatpush1.bf16.msra.mxu0 %v2765
        %3826 = vmatprep.subr.bf16.mxu0 %v2782
        %3827 = vmatpush1.bf16.msra.mxu0 %v2781
        %3828 = vmatprep.subr.bf16.mxu0 %v2798
        %3829 = vmatpush1.bf16.msra.mxu0 %v2797
        %3830 = vmatprep.subr.bf16.mxu0 %v2814
        %3831 = vmatpush1.bf16.msra.mxu0 %v2813
        %3832 = vmatprep.subr.bf16.mxu0 %v2830
        %3833 = vmatpush1.bf16.msra.mxu0 %v2829
        %3834 = vmatprep.subr.bf16.mxu0 %v2846
        %3835 = vmatpush1.bf16.msra.mxu0 %v2845
        %3836 = vmatprep.subr.bf16.mxu0 %v2862
        %3837 = vmatpush1.bf16.msra.mxu0 %v2861
        %3838 = vmatprep.subr.bf16.mxu0 %v2878
        %3839 = vmatpush1.bf16.msra.mxu0 %v2877
        %3840 = vmatprep.subr.bf16.mxu0 %v2894
        %3841 = vmatpush1.bf16.msra.mxu0 %v2893
        %3842 = vmatprep.subr.bf16.mxu0 %v2910
        %3843 = vmatpush1.bf16.msra.mxu0 %v2909
        %3844 = vmatprep.subr.bf16.mxu0 %v2926
        %3845 = vmatpush1.bf16.msra.mxu0 %v2925
        %3846 = vmatprep.mubr.bf16.mxu0 %v288
        %3847 = vmatmul.mubr.bf16.gmra.mrb[0].mxu0 %v287
        %v3848 = vpop.f32.mrb[0].mxu0
        %v3849 = vadd.f32 %v3808, %v3848
        %v3850 = vpop.f32.mrb[0].mxu0
        %v3851 = vadd.f32 %v3810, %v3850
        %v3852 = vpop.f32.mrb[0].mxu0
        %v3853 = vpop.f32.mrb[0].mxu0
        %3854 = vdwg.mxu0
        %3855 = vmatprep.subr.bf16.mxu0 %v2432
        %3856 = vmatpush1.bf16.msra.mxu0 %v2431
        %3857 = vmatprep.subr.bf16.mxu0 %v2448
        %3858 = vmatpush1.bf16.msra.mxu0 %v2447
        %3859 = vmatprep.subr.bf16.mxu0 %v2464
        %3860 = vmatpush1.bf16.msra.mxu0 %v2463
        %3861 = vmatprep.subr.bf16.mxu0 %v2480
        %3862 = vmatpush1.bf16.msra.mxu0 %v2479
        %3863 = vmatprep.subr.bf16.mxu0 %v2496
        %3864 = vmatpush1.bf16.msra.mxu0 %v2495
        %3865 = vmatprep.subr.bf16.mxu0 %v2512
        %3866 = vmatpush1.bf16.msra.mxu0 %v2511
        %3867 = vmatprep.subr.bf16.mxu0 %v2528
        %3868 = vmatpush1.bf16.msra.mxu0 %v2527
        %3869 = vmatprep.subr.bf16.mxu0 %v2544
        %3870 = vmatpush1.bf16.msra.mxu0 %v2543
        %3871 = vmatprep.subr.bf16.mxu0 %v2560
        %3872 = vmatpush1.bf16.msra.mxu0 %v2559
        %3873 = vmatprep.subr.bf16.mxu0 %v2576
        %3874 = vmatpush1.bf16.msra.mxu0 %v2575
        %3875 = vmatprep.subr.bf16.mxu0 %v2592
        %3876 = vmatpush1.bf16.msra.mxu0 %v2591
        %3877 = vmatprep.subr.bf16.mxu0 %v2608
        %3878 = vmatpush1.bf16.msra.mxu0 %v2607
        %3879 = vmatprep.subr.bf16.mxu0 %v2624
        %3880 = vmatpush1.bf16.msra.mxu0 %v2623
        %3881 = vmatprep.subr.bf16.mxu0 %v2640
        %3882 = vmatpush1.bf16.msra.mxu0 %v2639
        %3883 = vmatprep.subr.bf16.mxu0 %v2656
        %3884 = vmatpush1.bf16.msra.mxu0 %v2655
        %3885 = vmatprep.subr.bf16.mxu0 %v2672
        %3886 = vmatpush1.bf16.msra.mxu0 %v2671
        %3887 = vmatprep.mubr.bf16.mxu0 %v286
        %3888 = vmatmul.mubr.bf16.gmra.mrb[0].mxu0 %v285
        %v3889 = vpop.f32.mrb[0].mxu0
        %v3890 = vadd.f32 %v848, %v3889
        %v3891 = vpop.f32.mrb[0].mxu0
        %v3892 = vadd.f32 %v852, %v3891
        %v3893 = vpop.f32.mrb[0].mxu0
        %v3894 = vpop.f32.mrb[0].mxu0
        %3895 = vdwg.mxu0
        %3896 = vmatprep.subr.bf16.mxu0 %v2688
        %3897 = vmatpush1.bf16.msra.mxu0 %v2687
        %3898 = vmatprep.subr.bf16.mxu0 %v2704
        %3899 = vmatpush1.bf16.msra.mxu0 %v2703
        %3900 = vmatprep.subr.bf16.mxu0 %v2720
        %3901 = vmatpush1.bf16.msra.mxu0 %v2719
        %3902 = vmatprep.subr.bf16.mxu0 %v2736
        %3903 = vmatpush1.bf16.msra.mxu0 %v2735
        %3904 = vmatprep.subr.bf16.mxu0 %v2752
        %3905 = vmatpush1.bf16.msra.mxu0 %v2751
        %3906 = vmatprep.subr.bf16.mxu0 %v2768
        %3907 = vmatpush1.bf16.msra.mxu0 %v2767
        %3908 = vmatprep.subr.bf16.mxu0 %v2784
        %3909 = vmatpush1.bf16.msra.mxu0 %v2783
        %3910 = vmatprep.subr.bf16.mxu0 %v2800
        %3911 = vmatpush1.bf16.msra.mxu0 %v2799
        %3912 = vmatprep.subr.bf16.mxu0 %v2816
        %3913 = vmatpush1.bf16.msra.mxu0 %v2815
        %3914 = vmatprep.subr.bf16.mxu0 %v2832
        %3915 = vmatpush1.bf16.msra.mxu0 %v2831
        %3916 = vmatprep.subr.bf16.mxu0 %v2848
        %3917 = vmatpush1.bf16.msra.mxu0 %v2847
        %3918 = vmatprep.subr.bf16.mxu0 %v2864
        %3919 = vmatpush1.bf16.msra.mxu0 %v2863
        %3920 = vmatprep.subr.bf16.mxu0 %v2880
        %3921 = vmatpush1.bf16.msra.mxu0 %v2879
        %3922 = vmatprep.subr.bf16.mxu0 %v2896
        %3923 = vmatpush1.bf16.msra.mxu0 %v2895
        %3924 = vmatprep.subr.bf16.mxu0 %v2912
        %3925 = vmatpush1.bf16.msra.mxu0 %v2911
        %3926 = vmatprep.subr.bf16.mxu0 %v2928
        %3927 = vmatpush1.bf16.msra.mxu0 %v2927
        %3928 = vmatprep.mubr.bf16.mxu0 %v288
        %3929 = vmatmul.mubr.bf16.gmra.mrb[0].mxu0 %v287
        %v3930 = vpop.f32.mrb[0].mxu0
        %v3931 = vadd.f32 %v3890, %v3930
        %v3932 = vpop.f32.mrb[0].mxu0
        %v3933 = vadd.f32 %v3892, %v3932
        %v3934 = vpop.f32.mrb[0].mxu0
        %v3935 = vpop.f32.mrb[0].mxu0
        %3936 = vdwg.mxu0
        %3937 = vmatprep.subr.bf16.mxu0 %v2434
        %3938 = vmatpush1.bf16.msra.mxu0 %v2433
        %3939 = vmatprep.subr.bf16.mxu0 %v2450
        %3940 = vmatpush1.bf16.msra.mxu0 %v2449
        %3941 = vmatprep.subr.bf16.mxu0 %v2466
        %3942 = vmatpush1.bf16.msra.mxu0 %v2465
        %3943 = vmatprep.subr.bf16.mxu0 %v2482
        %3944 = vmatpush1.bf16.msra.mxu0 %v2481
        %3945 = vmatprep.subr.bf16.mxu0 %v2498
        %3946 = vmatpush1.bf16.msra.mxu0 %v2497
        %3947 = vmatprep.subr.bf16.mxu0 %v2514
        %3948 = vmatpush1.bf16.msra.mxu0 %v2513
        %3949 = vmatprep.subr.bf16.mxu0 %v2530
        %3950 = vmatpush1.bf16.msra.mxu0 %v2529
        %3951 = vmatprep.subr.bf16.mxu0 %v2546
        %3952 = vmatpush1.bf16.msra.mxu0 %v2545
        %3953 = vmatprep.subr.bf16.mxu0 %v2562
        %3954 = vmatpush1.bf16.msra.mxu0 %v2561
        %3955 = vmatprep.subr.bf16.mxu0 %v2578
        %3956 = vmatpush1.bf16.msra.mxu0 %v2577
        %3957 = vmatprep.subr.bf16.mxu0 %v2594
        %3958 = vmatpush1.bf16.msra.mxu0 %v2593
        %3959 = vmatprep.subr.bf16.mxu0 %v2610
        %3960 = vmatpush1.bf16.msra.mxu0 %v2609
        %3961 = vmatprep.subr.bf16.mxu0 %v2626
        %3962 = vmatpush1.bf16.msra.mxu0 %v2625
        %3963 = vmatprep.subr.bf16.mxu0 %v2642
        %3964 = vmatpush1.bf16.msra.mxu0 %v2641
        %3965 = vmatprep.subr.bf16.mxu0 %v2658
        %3966 = vmatpush1.bf16.msra.mxu0 %v2657
        %3967 = vmatprep.subr.bf16.mxu0 %v2674
        %3968 = vmatpush1.bf16.msra.mxu0 %v2673
        %3969 = vmatprep.mubr.bf16.mxu0 %v286
        %3970 = vmatmul.mubr.bf16.gmra.mrb[0].mxu0 %v285
        %v3971 = vpop.f32.mrb[0].mxu0
        %v3972 = vadd.f32 %v856, %v3971
        %v3973 = vpop.f32.mrb[0].mxu0
        %v3974 = vadd.f32 %v860, %v3973
        %v3975 = vpop.f32.mrb[0].mxu0
        %v3976 = vpop.f32.mrb[0].mxu0
        %3977 = vdwg.mxu0
        %3978 = vmatprep.subr.bf16.mxu0 %v2690
        %3979 = vmatpush1.bf16.msra.mxu0 %v2689
        %3980 = vmatprep.subr.bf16.mxu0 %v2706
        %3981 = vmatpush1.bf16.msra.mxu0 %v2705
        %3982 = vmatprep.subr.bf16.mxu0 %v2722
        %3983 = vmatpush1.bf16.msra.mxu0 %v2721
        %3984 = vmatprep.subr.bf16.mxu0 %v2738
        %3985 = vmatpush1.bf16.msra.mxu0 %v2737
        %3986 = vmatprep.subr.bf16.mxu0 %v2754
        %3987 = vmatpush1.bf16.msra.mxu0 %v2753
        %3988 = vmatprep.subr.bf16.mxu0 %v2770
        %3989 = vmatpush1.bf16.msra.mxu0 %v2769
        %3990 = vmatprep.subr.bf16.mxu0 %v2786
        %3991 = vmatpush1.bf16.msra.mxu0 %v2785
        %3992 = vmatprep.subr.bf16.mxu0 %v2802
        %3993 = vmatpush1.bf16.msra.mxu0 %v2801
        %3994 = vmatprep.subr.bf16.mxu0 %v2818
        %3995 = vmatpush1.bf16.msra.mxu0 %v2817
        %3996 = vmatprep.subr.bf16.mxu0 %v2834
        %3997 = vmatpush1.bf16.msra.mxu0 %v2833
        %3998 = vmatprep.subr.bf16.mxu0 %v2850
        %3999 = vmatpush1.bf16.msra.mxu0 %v2849
        %4000 = vmatprep.subr.bf16.mxu0 %v2866
        %4001 = vmatpush1.bf16.msra.mxu0 %v2865
        %4002 = vmatprep.subr.bf16.mxu0 %v2882
        %4003 = vmatpush1.bf16.msra.mxu0 %v2881
        %4004 = vmatprep.subr.bf16.mxu0 %v2898
        %4005 = vmatpush1.bf16.msra.mxu0 %v2897
        %4006 = vmatprep.subr.bf16.mxu0 %v2914
        %4007 = vmatpush1.bf16.msra.mxu0 %v2913
        %4008 = vmatprep.subr.bf16.mxu0 %v2930
        %4009 = vmatpush1.bf16.msra.mxu0 %v2929
        %4010 = vmatprep.mubr.bf16.mxu0 %v288
        %4011 = vmatmul.mubr.bf16.gmra.mrb[0].mxu0 %v287
        %v4012 = vpop.f32.mrb[0].mxu0
        %v4013 = vadd.f32 %v3972, %v4012
        %v4014 = vpop.f32.mrb[0].mxu0
        %v4015 = vadd.f32 %v3974, %v4014
        %v4016 = vpop.f32.mrb[0].mxu0
        %v4017 = vpop.f32.mrb[0].mxu0
        %4018 = vdwg.mxu0
        %4019 = vmatprep.subr.bf16.mxu0 %v2436
        %4020 = vmatpush1.bf16.msra.mxu0 %v2435
        %4021 = vmatprep.subr.bf16.mxu0 %v2452
        %4022 = vmatpush1.bf16.msra.mxu0 %v2451
        %4023 = vmatprep.subr.bf16.mxu0 %v2468
        %4024 = vmatpush1.bf16.msra.mxu0 %v2467
        %4025 = vmatprep.subr.bf16.mxu0 %v2484
        %4026 = vmatpush1.bf16.msra.mxu0 %v2483
        %4027 = vmatprep.subr.bf16.mxu0 %v2500
        %4028 = vmatpush1.bf16.msra.mxu0 %v2499
        %4029 = vmatprep.subr.bf16.mxu0 %v2516
        %4030 = vmatpush1.bf16.msra.mxu0 %v2515
        %4031 = vmatprep.subr.bf16.mxu0 %v2532
        %4032 = vmatpush1.bf16.msra.mxu0 %v2531
        %4033 = vmatprep.subr.bf16.mxu0 %v2548
        %4034 = vmatpush1.bf16.msra.mxu0 %v2547
        %4035 = vmatprep.subr.bf16.mxu0 %v2564
        %4036 = vmatpush1.bf16.msra.mxu0 %v2563
        %4037 = vmatprep.subr.bf16.mxu0 %v2580
        %4038 = vmatpush1.bf16.msra.mxu0 %v2579
        %4039 = vmatprep.subr.bf16.mxu0 %v2596
        %4040 = vmatpush1.bf16.msra.mxu0 %v2595
        %4041 = vmatprep.subr.bf16.mxu0 %v2612
        %4042 = vmatpush1.bf16.msra.mxu0 %v2611
        %4043 = vmatprep.subr.bf16.mxu0 %v2628
        %4044 = vmatpush1.bf16.msra.mxu0 %v2627
        %4045 = vmatprep.subr.bf16.mxu0 %v2644
        %4046 = vmatpush1.bf16.msra.mxu0 %v2643
        %4047 = vmatprep.subr.bf16.mxu0 %v2660
        %4048 = vmatpush1.bf16.msra.mxu0 %v2659
        %4049 = vmatprep.subr.bf16.mxu0 %v2676
        %4050 = vmatpush1.bf16.msra.mxu0 %v2675
        %4051 = vmatprep.mubr.bf16.mxu0 %v286
        %4052 = vmatmul.mubr.bf16.gmra.mrb[0].mxu0 %v285
        %v4053 = vpop.f32.mrb[0].mxu0
        %v4054 = vadd.f32 %v864, %v4053
        %v4055 = vpop.f32.mrb[0].mxu0
        %v4056 = vadd.f32 %v868, %v4055
        %v4057 = vpop.f32.mrb[0].mxu0
        %v4058 = vpop.f32.mrb[0].mxu0
        %4059 = vdwg.mxu0
        %4060 = vmatprep.subr.bf16.mxu0 %v2692
        %4061 = vmatpush1.bf16.msra.mxu0 %v2691
        %4062 = vmatprep.subr.bf16.mxu0 %v2708
        %4063 = vmatpush1.bf16.msra.mxu0 %v2707
        %4064 = vmatprep.subr.bf16.mxu0 %v2724
        %4065 = vmatpush1.bf16.msra.mxu0 %v2723
        %4066 = vmatprep.subr.bf16.mxu0 %v2740
        %4067 = vmatpush1.bf16.msra.mxu0 %v2739
        %4068 = vmatprep.subr.bf16.mxu0 %v2756
        %4069 = vmatpush1.bf16.msra.mxu0 %v2755
        %4070 = vmatprep.subr.bf16.mxu0 %v2772
        %4071 = vmatpush1.bf16.msra.mxu0 %v2771
        %4072 = vmatprep.subr.bf16.mxu0 %v2788
        %4073 = vmatpush1.bf16.msra.mxu0 %v2787
        %4074 = vmatprep.subr.bf16.mxu0 %v2804
        %4075 = vmatpush1.bf16.msra.mxu0 %v2803
        %4076 = vmatprep.subr.bf16.mxu0 %v2820
        %4077 = vmatpush1.bf16.msra.mxu0 %v2819
        %4078 = vmatprep.subr.bf16.mxu0 %v2836
        %4079 = vmatpush1.bf16.msra.mxu0 %v2835
        %4080 = vmatprep.subr.bf16.mxu0 %v2852
        %4081 = vmatpush1.bf16.msra.mxu0 %v2851
        %4082 = vmatprep.subr.bf16.mxu0 %v2868
        %4083 = vmatpush1.bf16.msra.mxu0 %v2867
        %4084 = vmatprep.subr.bf16.mxu0 %v2884
        %4085 = vmatpush1.bf16.msra.mxu0 %v2883
        %4086 = vmatprep.subr.bf16.mxu0 %v2900
        %4087 = vmatpush1.bf16.msra.mxu0 %v2899
        %4088 = vmatprep.subr.bf16.mxu0 %v2916
        %4089 = vmatpush1.bf16.msra.mxu0 %v2915
        %4090 = vmatprep.subr.bf16.mxu0 %v2932
        %4091 = vmatpush1.bf16.msra.mxu0 %v2931
        %4092 = vmatprep.mubr.bf16.mxu0 %v288
        %4093 = vmatmul.mubr.bf16.gmra.mrb[0].mxu0 %v287
        %v4094 = vpop.f32.mrb[0].mxu0
        %v4095 = vadd.f32 %v4054, %v4094
        %v4096 = vpop.f32.mrb[0].mxu0
        %v4097 = vadd.f32 %v4056, %v4096
        %v4098 = vpop.f32.mrb[0].mxu0
        %v4099 = vpop.f32.mrb[0].mxu0
        %4100 = vdwg.mxu0
        %v4117 = vcombine.low %v3521, %v3523
        %v4118 = vcombine.low %v3603, %v3605
        %v4120 = vunpack.c.l.s4 1983009808
        %v4121 = vunpack.c.0.s8 %v4120
        %v4122 = vlaneseq
        %v4123 = vshrl.u32 %v4122, 7
        %v4124 = vsub.s32 %v4121, %v4123
        %v4125 = vrot.slane %v4117, %v4124
        %v4127 = vunpack.c.l.s4 1983009808
        %v4128 = vunpack.c.0.s8 %v4127
        %v4129 = vlaneseq
        %v4130 = vshrl.u32 %v4129, 7
        %v4131 = vsub.s32 %v4128, %v4130
        %v4132 = vrot.slane %v4118, %v4131
        %v4133 = vcombine.low %v4125, %v4132
        %v4134 = vcombine.low %v3685, %v3687
        %v4135 = vcombine.low %v3767, %v3769
        %v4137 = vunpack.c.l.s4 1983009808
        %v4138 = vunpack.c.0.s8 %v4137
        %v4139 = vlaneseq
        %v4140 = vshrl.u32 %v4139, 7
        %v4141 = vsub.s32 %v4138, %v4140
        %v4142 = vrot.slane %v4134, %v4141
        %v4144 = vunpack.c.l.s4 1983009808
        %v4145 = vunpack.c.0.s8 %v4144
        %v4146 = vlaneseq
        %v4147 = vshrl.u32 %v4146, 7
        %v4148 = vsub.s32 %v4145, %v4147
        %v4149 = vrot.slane %v4135, %v4148
        %v4150 = vcombine.low %v4142, %v4149
        %v4151 = vcombine.low %v3849, %v3851
        %v4152 = vcombine.low %v3931, %v3933
        %v4154 = vunpack.c.l.s4 1983009808
        %v4155 = vunpack.c.0.s8 %v4154
        %v4156 = vlaneseq
        %v4157 = vshrl.u32 %v4156, 7
        %v4158 = vsub.s32 %v4155, %v4157
        %v4159 = vrot.slane %v4151, %v4158
        %v4161 = vunpack.c.l.s4 1983009808
        %v4162 = vunpack.c.0.s8 %v4161
        %v4163 = vlaneseq
        %v4164 = vshrl.u32 %v4163, 7
        %v4165 = vsub.s32 %v4162, %v4164
        %v4166 = vrot.slane %v4152, %v4165
        %v4167 = vcombine.low %v4159, %v4166
        %v4168 = vcombine.low %v4013, %v4015
        %v4169 = vcombine.low %v4095, %v4097
        %v4171 = vunpack.c.l.s4 1983009808
        %v4172 = vunpack.c.0.s8 %v4171
        %v4173 = vlaneseq
        %v4174 = vshrl.u32 %v4173, 7
        %v4175 = vsub.s32 %v4172, %v4174
        %v4176 = vrot.slane %v4168, %v4175
        %v4178 = vunpack.c.l.s4 1983009808
        %v4179 = vunpack.c.0.s8 %v4178
        %v4180 = vlaneseq
        %v4181 = vshrl.u32 %v4180, 7
        %v4182 = vsub.s32 %v4179, %v4181
        %v4183 = vrot.slane %v4169, %v4182
        %v4184 = vcombine.low %v4176, %v4183
        %4189 = vst [vmem:[%s258] sm:$0xff] %v4133
        %4190 = vst [vmem:[%s258 + $0x8] sm:$0xff] %v4150
        %4191 = vst [vmem:[%s258 + $0x10] sm:$0xff] %v4167
        %4192 = vst [vmem:[%s258 + $0x18] sm:$0xff] %v4184
        %s4193 = sand.u32 %s121, 1
        %s4194 = scalar_lea.sflag [#allocation4], %s4193
        %s4195 = sand.u32 %s121, 1
        %s4196 = smul.addr %s4195, 32
        %s4197 = scalar_lea.vmem [#allocation8], %s4196
        // Predicated region
        $region45: #{tpu_custom_call.1} parent=31 // pred_check
          %p4198 = pneg %p131
        $region46: #{tpu_custom_call.1} parent=31 // pred_check_branch
          %4200 = sbr.rel (%p4198) target = $region48
        $region47: #{tpu_custom_call.1} parent=31 // pred_region
          %s4201 = smul.u32 16, %s25
          %s4203 = ssub.s32 512, 512
          %4204 = vsyncadd %s4194, %s4203
          %s4205 = smul.addr %s26, 32
          %s4206 = sadd.s32 %s4201, %s4205
          %s4207 = smul.addr %s4206, 32
          %s4208 = scalar_lea.hbm %s3, %s4207
          %s4210 = sshll.u32 %s4197, 4
          %s4211 = int_to_ptr.vmem [resolvable:$true] %s4210
          %4213 = dma.vmem_to_hbm [thread:$0]  %s4211, 512, %s4208, %s4194
        $region48: #{tpu_custom_call.1} parent=31 // pred_fallthru
          _
      $region32: #{tpu_custom_call.1} parent=5 // pred_fallthru
        _
      %p4214 = scmp.le.s32.totalorder 2, %s16
      // Predicated region
      $region49: #{tpu_custom_call.1} parent=5 // pred_check
        %p4215 = pneg %p4214
      $region50: #{tpu_custom_call.1} parent=5 // pred_check_branch
        %4217 = sbr.rel (%p4215) target = $region52
      $region51: #{tpu_custom_call.1} parent=5 // pred_region
        %s4218 = ssub.s32 %s16, 2
        // Predicated region
        $region53: #{tpu_custom_call.1} parent=51 // pred_check
          %p4219 = pneg %p137
        $region54: #{tpu_custom_call.1} parent=51 // pred_check_branch
          %4221 = sbr.rel (%p4219) target = $region56
        $region55: #{tpu_custom_call.1} parent=51 // pred_region
          %s4222 = sand.u32 %s122, 1
          %s4223 = scalar_lea.sflag [#allocation4], %s4222
          %s4224 = sand.u32 %s122, 1
          %s4225 = smul.addr %s4224, 32
          %s4226 = scalar_lea.vmem [#allocation8], %s4225
          %4227 = dma.done %s4223, 512
        $region56: #{tpu_custom_call.1} parent=51 // pred_fallthru
          _
      $region52: #{tpu_custom_call.1} parent=5 // pred_fallthru
        _
    $region6: #{tpu_custom_call.1} parent=1 // loop_footer
      %s20 = sadd.s32 1, %s16
    $region7: #{tpu_custom_call.1} parent=1 // loop_footer_branch
      %15 = sbr.rel target = $region3
    $region8: #{tpu_custom_call.1} parent=1 // loop_exit
      _
    %4228 = vsyncpa [#allocation3], 1
    %s4229 = scalar_lea.sflag [#allocation3], 1
    %4230 = vsyncpa %s4229, 1
    %4231 = vsyncpa [#allocation6], 1
    %s4232 = scalar_lea.sflag [#allocation6], 1
    %4233 = vsyncpa %s4232, 1
    %4234 = vsyncpa [#allocation4], 1
    %s4235 = scalar_lea.sflag [#allocation4], 1
    %4236 = vsyncpa %s4235, 1

</llo_original>
